<compile_context>
chip_gen: v5e
topology: v5e:2x2
jax: 0.10.0
libtpu: 0.0.40
codegen_flags: <defaults>
</compile_context>

<pallas_src>
import functools

import jax
import jax.numpy as jnp
from jax.experimental import pallas as pl
from jax.experimental.pallas import tpu as pltpu

EPS = 1e-5  # torch.nn.LayerNorm default


# --------------------------------------------------------------------------
# Elementwise helpers (pure jnp/lax: usable both inside the kernel and in the
# plain-JAX reference)
# --------------------------------------------------------------------------
def _layernorm(x, gamma, beta):
    mean = jnp.mean(x, axis=-1, keepdims=True)
    var = jnp.mean(jnp.square(x - mean), axis=-1, keepdims=True)
    inv = jax.lax.rsqrt(var + EPS)
    return (x - mean) * inv * gamma + beta


def _erf(x):
    # Abramowitz & Stegun 7.1.26 polynomial (|err| < 1.5e-7): matches torch's
    # exact-erf F.gelu to f32 precision using only exp/mul/add (Mosaic-safe).
    a1, a2, a3, a4, a5 = 0.254829592, -0.284496736, 1.421413741, -1.453152027, 1.061405429
    p = 0.3275911
    s = jnp.where(x >= 0, 1.0, -1.0)
    ax = jnp.abs(x)
    t = 1.0 / (1.0 + p * ax)
    poly = ((((a5 * t + a4) * t + a3) * t + a2) * t + a1) * t
    return s * (1.0 - poly * jnp.exp(-ax * ax))


def _gelu_exact(x):
    return 0.5 * x * (1.0 + _erf(x * 0.7071067811865476))


# --------------------------------------------------------------------------
# Fused building blocks on a flat token matrix x2: (tokens, d)
# --------------------------------------------------------------------------
def _attn_block(x2, gamma, beta, wqkv, wo, bo, *, heads, dim_head, dtype):
    """out = Attention(LN(x)) + LN(x).

    wqkv : (d, 3*inner), lanes ordered [q | k | v], each head-major (torch
           Linear(dim, inner*3).weight.T with .chunk(3, -1) semantics).
    wo   : (inner, d)  = to_out.weight.T, rows head-major.
    """
    inner = heads * dim_head
    scale = dim_head ** -0.5

    xn = _layernorm(x2, gamma, beta)                                   # (t, d) f32
    # One 2-D matmul for all of q|k|v over all tokens (good MXU row utilization).
    qkv = jnp.dot(xn.astype(dtype), wqkv,
                  preferred_element_type=jnp.float32)                  # (t, 3*inner) f32

    out = None
    for h in range(heads):                       # static, tiny (heads=4)
        lo = h * dim_head
        q = qkv[:, lo:lo + dim_head]
        k = qkv[:, inner + lo:inner + lo + dim_head]
        v = qkv[:, 2 * inner + lo:2 * inner + lo + dim_head]

        # q @ k^T with explicit transposed-RHS dimension numbers (no XLU transpose).
        sim = jax.lax.dot_general(
            q.astype(dtype), k.astype(dtype),
            dimension_numbers=(((1,), (1,)), ((), ())),
            preferred_element_type=jnp.float32) * scale                # (t, t)
        sim = sim - jnp.max(sim, axis=-1, keepdims=True)
        e = jnp.exp(sim)
        attn = e / jnp.sum(e, axis=-1, keepdims=True)                  # exact, like torch

        # Reassociated epilogue: (attn @ v) @ Wo_h, accumulated over heads
        # (standard-attention FLOPs; no lane-axis head concat).
        pv = jnp.dot(attn.astype(dtype), v.astype(dtype),
                     preferred_element_type=jnp.float32)               # (t, dim_head)
        oh = jnp.dot(pv.astype(dtype), wo[lo:lo + dim_head, :],
                     preferred_element_type=jnp.float32)               # (t, d)
        out = oh if out is None else out + oh

    # SAINT PreNorm(dim, Residual(fn)): residual adds the *normed* input.
    return out + bo + xn


def _ff_block(x2, gamma, beta, w1, b1, w2, b2, mask, *, dtype):
    """out = (GEGLU-FF(LN(x)) * mask) + LN(x); `* mask` is the pruning hook on net[3]."""
    hidden = w2.shape[0]
    xn = _layernorm(x2, gamma, beta)
    u = jnp.dot(xn.astype(dtype), w1, preferred_element_type=jnp.float32) + b1  # (t, 2*hidden)
    a = u[:, :hidden]
    gate = u[:, hidden:]
    hval = a * _gelu_exact(gate)                                       # GEGLU (exact gelu)
    y = jnp.dot(hval.astype(dtype), w2, preferred_element_type=jnp.float32) + b2
    return y * mask + xn


# --------------------------------------------------------------------------
# One kernel body shared by the column path (per-sample attention over N tokens
# of dim D) and the row path (intersample attention over B tokens of dim N*D).
# --------------------------------------------------------------------------
def _saint_half_kernel(x_ref,
                       ag_ref, ab_ref, aw_ref, ao_ref, aob_ref,          # attention
                       fg_ref, fb_ref, fw1_ref, fb1_ref, fw2_ref, fb2_ref, fm_ref,  # FF + mask
                       o_ref, *, heads, dim_head, compute_dtype, leading_batch):
    x2 = x_ref[0] if leading_batch else x_ref[...]
    x2 = _attn_block(x2, ag_ref[...], ab_ref[...], aw_ref[...], ao_ref[...], aob_ref[...],
                     heads=heads, dim_head=dim_head, dtype=compute_dtype)
    x2 = _ff_block(x2, fg_ref[...], fb_ref[...], fw1_ref[...], fb1_ref[...],
                   fw2_ref[...], fb2_ref[...], fm_ref[...], dtype=compute_dtype)
    if leading_batch:
        o_ref[0] = x2
    else:
        o_ref[...] = x2


# --------------------------------------------------------------------------
# Trace-time parameter prep (reshape 1-D params to (1, d); cast matmul weights)
# --------------------------------------------------------------------------
def _prep_attn(p, dtype):
    gamma, beta, wqkv, wo, bo = p
    d = gamma.shape[0]
    return (gamma.reshape(1, d), beta.reshape(1, d),
            wqkv.astype(dtype), wo.astype(dtype), bo.reshape(1, d))


def _prep_ff(p, mask, dtype):
    gamma, beta, w1, b1, w2, b2 = p
    d = gamma.shape[0]
    return (gamma.reshape(1, d), beta.reshape(1, d),
            w1.astype(dtype), b1.reshape(1, -1),
            w2.astype(dtype), b2.reshape(1, d), mask.reshape(1, d))


# --------------------------------------------------------------------------
# Wrapper: column-path call -> free 'b n d -> b (n d)' reshape -> row-path call
# --------------------------------------------------------------------------
def pruned_saint_forward(x, params, *, heads=4, dim_head=16,
                         compute_dtype=jnp.float32):
    B, N, D = x.shape

    # ---- column path: grid over batch ("parallel" -> both v7x TensorCores) ----
    col_args = ((x,)
                + _prep_attn(params["col_attn"], compute_dtype)
                + _prep_ff(params["col_ff"], params["mask_col"], compute_dtype))
    col_weight_specs = [pl.BlockSpec(a.shape, lambda b: (0, 0)) for a in col_args[1:]]
    col_out = pl.pallas_call(
        functools.partial(_saint_half_kernel, heads=heads, dim_head=dim_head,
                          compute_dtype=compute_dtype, leading_batch=True),
        grid=(B,),
        out_shape=jax.ShapeDtypeStruct((B, N, D), jnp.float32),
        in_specs=[pl.BlockSpec((1, N, D), lambda b: (b, 0, 0))] + col_weight_specs,
        out_specs=pl.BlockSpec((1, N, D), lambda b: (b, 0, 0)),
        compiler_params=pltpu.CompilerParams(dimension_semantics=("parallel",)),
    )(*col_args)

    # 'b n d -> 1 b (n d)': contiguous row-major reshape, free in the wrapper.
    xr = col_out.reshape(B, N * D)

    # ---- row path: single step, all weights resident in VMEM (toy sizes) ----
    row_args = ((xr,)
                + _prep_attn(params["row_attn"], compute_dtype)
                + _prep_ff(params["row_ff"], params["mask_row"], compute_dtype))
    vmem = pl.BlockSpec(memory_space=pltpu.MemorySpace.VMEM)
    row_out = pl.pallas_call(
        functools.partial(_saint_half_kernel, heads=heads, dim_head=dim_head,
                          compute_dtype=compute_dtype, leading_batch=False),
        out_shape=jax.ShapeDtypeStruct((B, N * D), jnp.float32),
        in_specs=[vmem] * len(row_args),
        out_specs=vmem,
    )(*row_args)

    # '1 b (n d) -> b n d': free wrapper reshape.
    return row_out.reshape(B, N, D)


# --------------------------------------------------------------------------
# Pure-JAX reference (same math helpers, no Pallas) for plumbing verification
# --------------------------------------------------------------------------
def _ref_forward(x, params, *, heads, dim_head):
    B, N, D = x.shape
    ca = _prep_attn(params["col_attn"], jnp.float32)
    cf = _prep_ff(params["col_ff"], params["mask_col"], jnp.float32)
    ra = _prep_attn(params["row_attn"], jnp.float32)
    rf = _prep_ff(params["row_ff"], params["mask_row"], jnp.float32)
    cols = []
    for b in range(B):
        y = _attn_block(x[b], *ca, heads=heads, dim_head=dim_head, dtype=jnp.float32)
        y = _ff_block(y, *cf, dtype=jnp.float32)
        cols.append(y)
    xr = jnp.stack(cols).reshape(B, N * D)
    xr = _attn_block(xr, *ra, heads=heads, dim_head=dim_head, dtype=jnp.float32)
    xr = _ff_block(xr, *rf, dtype=jnp.float32)
    return xr.reshape(B, N, D)


# --------------------------------------------------------------------------
# Deterministic synthetic parameters (shapes follow SAINT defaults, scaled down)
# --------------------------------------------------------------------------
def _normal(key, shape, scale=0.05):
    return (scale * jax.random.normal(key, shape)).astype(jnp.float32)


def init_params(key, *, dim, nfeats, heads, dim_head, mult):
    inner = heads * dim_head
    dim_row = dim * nfeats
    keys = iter(jax.random.split(key, 32))
    nk = lambda: next(keys)

    def attn_params(d):
        return (1.0 + _normal(nk(), (d,), 0.1),        # LN gamma
                _normal(nk(), (d,), 0.1),              # LN beta
                _normal(nk(), (d, 3 * inner)),         # to_qkv weight.T (no bias in SAINT)
                _normal(nk(), (inner, d)),             # to_out weight.T
                _normal(nk(), (d,)))                   # to_out bias

    def ff_params(d):
        h = d * mult
        return (1.0 + _normal(nk(), (d,), 0.1),        # LN gamma
                _normal(nk(), (d,), 0.1),              # LN beta
                _normal(nk(), (d, 2 * h)),             # Linear(d, 2*mult*d) weight.T
                _normal(nk(), (2 * h,)),
                _normal(nk(), (h, d)),                 # Linear(mult*d, d) weight.T (net[3])
                _normal(nk(), (d,)))

    return {
        "col_attn": attn_params(dim),
        "col_ff": ff_params(dim),
        "row_attn": attn_params(dim_row),
        "row_ff": ff_params(dim_row),
        # ff_pruning_masks: binary masks applied to the last-linear outputs
        "mask_col": jnp.where(jnp.arange(dim) % 4 == 0, 0.0, 1.0).astype(jnp.float32),
        "mask_row": jnp.where(jnp.arange(dim_row) % 3 == 0, 0.0, 1.0).astype(jnp.float32),
    }


if __name__ == "__main__":
    B, N, D = 2, 8, 32            # batch, num features (tokens), embed dim
    HEADS, DIM_HEAD, MULT = 4, 16, 4

    root = jax.random.PRNGKey(0)
    kx, kp = jax.random.split(root)
    x = jax.random.normal(kx, (B, N, D), jnp.float32)
    params = init_params(kp, dim=D, nfeats=N, heads=HEADS,
                         dim_head=DIM_HEAD, mult=MULT)

    # f32 path (matches the PyTorch module's numerics).
    fwd = jax.jit(functools.partial(pruned_saint_forward,
                                    heads=HEADS, dim_head=DIM_HEAD))
    out = fwd(x, params)
    jax.block_until_ready(out)
    assert out.shape == (B, N, D) and bool(jnp.all(jnp.isfinite(out)))

    with jax.default_matmul_precision("highest"):
        ref = _ref_forward(x, params, heads=HEADS, dim_head=DIM_HEAD)
    assert bool(jnp.allclose(out, ref, atol=1e-3, rtol=1e-3))

    # bf16 matmul operands / bf16 weights in HBM (f32 accumulate, f32 LN stats):
    # the v6e/v7x MXU path.
    fwd_bf16 = jax.jit(functools.partial(pruned_saint_forward, heads=HEADS,
                                         dim_head=DIM_HEAD,
                                         compute_dtype=jnp.bfloat16))
    out_bf16 = fwd_bf16(x, params)
    jax.block_until_ready(out_bf16)
    assert out_bf16.shape == (B, N, D) and bool(jnp.all(jnp.isfinite(out_bf16)))
    assert bool(jnp.allclose(out_bf16, out, atol=0.25, rtol=0.05))

    print("KERNEL_OK")
</pallas_src>

<mosaic_0001>
module attributes {stable_mosaic.version = 11 : i64} {
  func.func @_saint_half_kernel(%arg0: i32, %arg1: memref<1x8x32xf32, #tpu.memory_space<vmem>>, %arg2: memref<1x32xf32, #tpu.memory_space<vmem>>, %arg3: memref<1x32xf32, #tpu.memory_space<vmem>>, %arg4: memref<32x192xf32, #tpu.memory_space<vmem>>, %arg5: memref<64x32xf32, #tpu.memory_space<vmem>>, %arg6: memref<1x32xf32, #tpu.memory_space<vmem>>, %arg7: memref<1x32xf32, #tpu.memory_space<vmem>>, %arg8: memref<1x32xf32, #tpu.memory_space<vmem>>, %arg9: memref<32x256xf32, #tpu.memory_space<vmem>>, %arg10: memref<1x256xf32, #tpu.memory_space<vmem>>, %arg11: memref<128x32xf32, #tpu.memory_space<vmem>>, %arg12: memref<1x32xf32, #tpu.memory_space<vmem>>, %arg13: memref<1x32xf32, #tpu.memory_space<vmem>>, %arg14: memref<1x8x32xf32, #tpu.memory_space<vmem>>) attributes {dimension_semantics = [#tpu.dimension_semantics<parallel>], iteration_bounds = array<i64: 2>, scalar_prefetch = 0 : i64, scratch_operands = 0 : i64, tpu.core_type = #tpu.core_type<tc>, window_params = [{transform_indices = @transform_0, window_bounds = array<i64: 1, 8, 32>}, {pipeline_mode = #tpu.pipeline_mode<synchronous>, transform_indices = @transform_1, window_bounds = array<i64: 1, 32>}, {pipeline_mode = #tpu.pipeline_mode<synchronous>, transform_indices = @transform_2, window_bounds = array<i64: 1, 32>}, {pipeline_mode = #tpu.pipeline_mode<synchronous>, transform_indices = @transform_3, window_bounds = array<i64: 32, 192>}, {pipeline_mode = #tpu.pipeline_mode<synchronous>, transform_indices = @transform_4, window_bounds = array<i64: 64, 32>}, {pipeline_mode = #tpu.pipeline_mode<synchronous>, transform_indices = @transform_5, window_bounds = array<i64: 1, 32>}, {pipeline_mode = #tpu.pipeline_mode<synchronous>, transform_indices = @transform_6, window_bounds = array<i64: 1, 32>}, {pipeline_mode = #tpu.pipeline_mode<synchronous>, transform_indices = @transform_7, window_bounds = array<i64: 1, 32>}, {pipeline_mode = #tpu.pipeline_mode<synchronous>, transform_indices = @transform_8, window_bounds = array<i64: 32, 256>}, {pipeline_mode = #tpu.pipeline_mode<synchronous>, transform_indices = @transform_9, window_bounds = array<i64: 1, 256>}, {pipeline_mode = #tpu.pipeline_mode<synchronous>, transform_indices = @transform_10, window_bounds = array<i64: 128, 32>}, {pipeline_mode = #tpu.pipeline_mode<synchronous>, transform_indices = @transform_11, window_bounds = array<i64: 1, 32>}, {pipeline_mode = #tpu.pipeline_mode<synchronous>, transform_indices = @transform_12, window_bounds = array<i64: 1, 32>}, {transform_indices = @transform_13, window_bounds = array<i64: 1, 8, 32>}]} {
    %c0 = arith.constant 0 : index
    %c0_0 = arith.constant 0 : index
    %c0_1 = arith.constant 0 : index
    %0 = vector.load %arg1[%c0, %c0_0, %c0_1] : memref<1x8x32xf32, #tpu.memory_space<vmem>>, vector<1x8x32xf32>
    %1 = vector.shape_cast %0 : vector<1x8x32xf32> to vector<8x32xf32>
    %c0_2 = arith.constant 0 : index
    %c0_3 = arith.constant 0 : index
    %2 = vector.load %arg2[%c0_2, %c0_3] : memref<1x32xf32, #tpu.memory_space<vmem>>, vector<1x32xf32>
    %c0_4 = arith.constant 0 : index
    %c0_5 = arith.constant 0 : index
    %3 = vector.load %arg3[%c0_4, %c0_5] : memref<1x32xf32, #tpu.memory_space<vmem>>, vector<1x32xf32>
    %c0_6 = arith.constant 0 : index
    %c0_7 = arith.constant 0 : index
    %4 = vector.load %arg4[%c0_6, %c0_7] : memref<32x192xf32, #tpu.memory_space<vmem>>, vector<32x192xf32>
    %c0_8 = arith.constant 0 : index
    %c0_9 = arith.constant 0 : index
    %5 = vector.load %arg5[%c0_8, %c0_9] : memref<64x32xf32, #tpu.memory_space<vmem>>, vector<64x32xf32>
    %c0_10 = arith.constant 0 : index
    %c0_11 = arith.constant 0 : index
    %6 = vector.load %arg6[%c0_10, %c0_11] : memref<1x32xf32, #tpu.memory_space<vmem>>, vector<1x32xf32>
    %cst = arith.constant dense<0.000000e+00> : vector<8xf32>
    %7 = vector.multi_reduction <add>, %1, %cst [1] : vector<8x32xf32> to vector<8xf32>
    %8 = vector.shape_cast %7 : vector<8xf32> to vector<8x1xf32>
    %cst_12 = arith.constant 3.200000e+01 : f32
    %9 = vector.broadcast %cst_12 : f32 to vector<8x1xf32>
    %10 = arith.divf %8, %9 : vector<8x1xf32>
    %11 = vector.broadcast %10 : vector<8x1xf32> to vector<8x32xf32>
    %12 = arith.subf %1, %11 : vector<8x32xf32>
    %13 = arith.mulf %12, %12 : vector<8x32xf32>
    %cst_13 = arith.constant dense<0.000000e+00> : vector<8xf32>
    %14 = vector.multi_reduction <add>, %13, %cst_13 [1] : vector<8x32xf32> to vector<8xf32>
    %15 = vector.shape_cast %14 : vector<8xf32> to vector<8x1xf32>
    %cst_14 = arith.constant 3.200000e+01 : f32
    %16 = vector.broadcast %cst_14 : f32 to vector<8x1xf32>
    %17 = arith.divf %15, %16 : vector<8x1xf32>
    %cst_15 = arith.constant 9.99999974E-6 : f32
    %18 = vector.broadcast %cst_15 : f32 to vector<8x1xf32>
    %19 = arith.addf %17, %18 : vector<8x1xf32>
    %20 = math.rsqrt %19 : vector<8x1xf32>
    %21 = vector.broadcast %10 : vector<8x1xf32> to vector<8x32xf32>
    %22 = arith.subf %1, %21 : vector<8x32xf32>
    %23 = vector.broadcast %20 : vector<8x1xf32> to vector<8x32xf32>
    %24 = arith.mulf %22, %23 : vector<8x32xf32>
    %25 = vector.broadcast %2 : vector<1x32xf32> to vector<8x32xf32>
    %26 = arith.mulf %24, %25 : vector<8x32xf32>
    %27 = vector.broadcast %3 : vector<1x32xf32> to vector<8x32xf32>
    %28 = arith.addf %26, %27 : vector<8x32xf32>
    %cst_16 = arith.constant dense<0.000000e+00> : vector<8x192xf32>
    %29 = tpu.matmul %28, %4, %cst_16 {dimension_numbers = #tpu.dot_dimension_numbers<[1], [0], [0], [1], [0, 0, 1, 1], [], []>} : vector<8x32xf32>, vector<32x192xf32>, vector<8x192xf32> -> vector<8x192xf32>
    %30 = vector.extract_strided_slice %29 {offsets = [0, 0], sizes = [8, 16], strides = [1, 1]} : vector<8x192xf32> to vector<8x16xf32>
    %31 = vector.extract_strided_slice %29 {offsets = [0, 64], sizes = [8, 16], strides = [1, 1]} : vector<8x192xf32> to vector<8x16xf32>
    %32 = vector.extract_strided_slice %29 {offsets = [0, 128], sizes = [8, 16], strides = [1, 1]} : vector<8x192xf32> to vector<8x16xf32>
    %cst_17 = arith.constant dense<0.000000e+00> : vector<8x8xf32>
    %33 = tpu.matmul %30, %31, %cst_17 {dimension_numbers = #tpu.dot_dimension_numbers<[1], [1], [0], [0], [0, 0, 1, 0], [], []>} : vector<8x16xf32>, vector<8x16xf32>, vector<8x8xf32> -> vector<8x8xf32>
    %cst_18 = arith.constant 2.500000e-01 : f32
    %34 = vector.broadcast %cst_18 : f32 to vector<8x8xf32>
    %35 = arith.mulf %33, %34 : vector<8x8xf32>
    %cst_19 = arith.constant dense<0xFF800000> : vector<8xf32>
    %36 = vector.multi_reduction <maximumf>, %35, %cst_19 [1] : vector<8x8xf32> to vector<8xf32>
    %37 = vector.shape_cast %36 : vector<8xf32> to vector<8x1xf32>
    %38 = vector.broadcast %37 : vector<8x1xf32> to vector<8x8xf32>
    %39 = arith.subf %35, %38 : vector<8x8xf32>
    %40 = math.exp %39 : vector<8x8xf32>
    %cst_20 = arith.constant dense<0.000000e+00> : vector<8xf32>
    %41 = vector.multi_reduction <add>, %40, %cst_20 [1] : vector<8x8xf32> to vector<8xf32>
    %42 = vector.shape_cast %41 : vector<8xf32> to vector<8x1xf32>
    %43 = vector.broadcast %42 : vector<8x1xf32> to vector<8x8xf32>
    %44 = arith.divf %40, %43 : vector<8x8xf32>
    %cst_21 = arith.constant dense<0.000000e+00> : vector<8x16xf32>
    %45 = tpu.matmul %44, %32, %cst_21 {dimension_numbers = #tpu.dot_dimension_numbers<[1], [0], [0], [1], [0, 0, 1, 1], [], []>} : vector<8x8xf32>, vector<8x16xf32>, vector<8x16xf32> -> vector<8x16xf32>
    %46 = vector.extract_strided_slice %5 {offsets = [0, 0], sizes = [16, 32], strides = [1, 1]} : vector<64x32xf32> to vector<16x32xf32>
    %cst_22 = arith.constant dense<0.000000e+00> : vector<8x32xf32>
    %47 = tpu.matmul %45, %46, %cst_22 {dimension_numbers = #tpu.dot_dimension_numbers<[1], [0], [0], [1], [0, 0, 1, 1], [], []>} : vector<8x16xf32>, vector<16x32xf32>, vector<8x32xf32> -> vector<8x32xf32>
    %48 = vector.extract_strided_slice %29 {offsets = [0, 16], sizes = [8, 16], strides = [1, 1]} : vector<8x192xf32> to vector<8x16xf32>
    %49 = vector.extract_strided_slice %29 {offsets = [0, 80], sizes = [8, 16], strides = [1, 1]} : vector<8x192xf32> to vector<8x16xf32>
    %50 = vector.extract_strided_slice %29 {offsets = [0, 144], sizes = [8, 16], strides = [1, 1]} : vector<8x192xf32> to vector<8x16xf32>
    %cst_23 = arith.constant dense<0.000000e+00> : vector<8x8xf32>
    %51 = tpu.matmul %48, %49, %cst_23 {dimension_numbers = #tpu.dot_dimension_numbers<[1], [1], [0], [0], [0, 0, 1, 0], [], []>} : vector<8x16xf32>, vector<8x16xf32>, vector<8x8xf32> -> vector<8x8xf32>
    %cst_24 = arith.constant 2.500000e-01 : f32
    %52 = vector.broadcast %cst_24 : f32 to vector<8x8xf32>
    %53 = arith.mulf %51, %52 : vector<8x8xf32>
    %cst_25 = arith.constant dense<0xFF800000> : vector<8xf32>
    %54 = vector.multi_reduction <maximumf>, %53, %cst_25 [1] : vector<8x8xf32> to vector<8xf32>
    %55 = vector.shape_cast %54 : vector<8xf32> to vector<8x1xf32>
    %56 = vector.broadcast %55 : vector<8x1xf32> to vector<8x8xf32>
    %57 = arith.subf %53, %56 : vector<8x8xf32>
    %58 = math.exp %57 : vector<8x8xf32>
    %cst_26 = arith.constant dense<0.000000e+00> : vector<8xf32>
    %59 = vector.multi_reduction <add>, %58, %cst_26 [1] : vector<8x8xf32> to vector<8xf32>
    %60 = vector.shape_cast %59 : vector<8xf32> to vector<8x1xf32>
    %61 = vector.broadcast %60 : vector<8x1xf32> to vector<8x8xf32>
    %62 = arith.divf %58, %61 : vector<8x8xf32>
    %cst_27 = arith.constant dense<0.000000e+00> : vector<8x16xf32>
    %63 = tpu.matmul %62, %50, %cst_27 {dimension_numbers = #tpu.dot_dimension_numbers<[1], [0], [0], [1], [0, 0, 1, 1], [], []>} : vector<8x8xf32>, vector<8x16xf32>, vector<8x16xf32> -> vector<8x16xf32>
    %64 = vector.extract_strided_slice %5 {offsets = [16, 0], sizes = [16, 32], strides = [1, 1]} : vector<64x32xf32> to vector<16x32xf32>
    %cst_28 = arith.constant dense<0.000000e+00> : vector<8x32xf32>
    %65 = tpu.matmul %63, %64, %cst_28 {dimension_numbers = #tpu.dot_dimension_numbers<[1], [0], [0], [1], [0, 0, 1, 1], [], []>} : vector<8x16xf32>, vector<16x32xf32>, vector<8x32xf32> -> vector<8x32xf32>
    %66 = arith.addf %47, %65 : vector<8x32xf32>
    %67 = vector.extract_strided_slice %29 {offsets = [0, 32], sizes = [8, 16], strides = [1, 1]} : vector<8x192xf32> to vector<8x16xf32>
    %68 = vector.extract_strided_slice %29 {offsets = [0, 96], sizes = [8, 16], strides = [1, 1]} : vector<8x192xf32> to vector<8x16xf32>
    %69 = vector.extract_strided_slice %29 {offsets = [0, 160], sizes = [8, 16], strides = [1, 1]} : vector<8x192xf32> to vector<8x16xf32>
    %cst_29 = arith.constant dense<0.000000e+00> : vector<8x8xf32>
    %70 = tpu.matmul %67, %68, %cst_29 {dimension_numbers = #tpu.dot_dimension_numbers<[1], [1], [0], [0], [0, 0, 1, 0], [], []>} : vector<8x16xf32>, vector<8x16xf32>, vector<8x8xf32> -> vector<8x8xf32>
    %cst_30 = arith.constant 2.500000e-01 : f32
    %71 = vector.broadcast %cst_30 : f32 to vector<8x8xf32>
    %72 = arith.mulf %70, %71 : vector<8x8xf32>
    %cst_31 = arith.constant dense<0xFF800000> : vector<8xf32>
    %73 = vector.multi_reduction <maximumf>, %72, %cst_31 [1] : vector<8x8xf32> to vector<8xf32>
    %74 = vector.shape_cast %73 : vector<8xf32> to vector<8x1xf32>
    %75 = vector.broadcast %74 : vector<8x1xf32> to vector<8x8xf32>
    %76 = arith.subf %72, %75 : vector<8x8xf32>
    %77 = math.exp %76 : vector<8x8xf32>
    %cst_32 = arith.constant dense<0.000000e+00> : vector<8xf32>
    %78 = vector.multi_reduction <add>, %77, %cst_32 [1] : vector<8x8xf32> to vector<8xf32>
    %79 = vector.shape_cast %78 : vector<8xf32> to vector<8x1xf32>
    %80 = vector.broadcast %79 : vector<8x1xf32> to vector<8x8xf32>
    %81 = arith.divf %77, %80 : vector<8x8xf32>
    %cst_33 = arith.constant dense<0.000000e+00> : vector<8x16xf32>
    %82 = tpu.matmul %81, %69, %cst_33 {dimension_numbers = #tpu.dot_dimension_numbers<[1], [0], [0], [1], [0, 0, 1, 1], [], []>} : vector<8x8xf32>, vector<8x16xf32>, vector<8x16xf32> -> vector<8x16xf32>
    %83 = vector.extract_strided_slice %5 {offsets = [32, 0], sizes = [16, 32], strides = [1, 1]} : vector<64x32xf32> to vector<16x32xf32>
    %cst_34 = arith.constant dense<0.000000e+00> : vector<8x32xf32>
    %84 = tpu.matmul %82, %83, %cst_34 {dimension_numbers = #tpu.dot_dimension_numbers<[1], [0], [0], [1], [0, 0, 1, 1], [], []>} : vector<8x16xf32>, vector<16x32xf32>, vector<8x32xf32> -> vector<8x32xf32>
    %85 = arith.addf %66, %84 : vector<8x32xf32>
    %86 = vector.extract_strided_slice %29 {offsets = [0, 48], sizes = [8, 16], strides = [1, 1]} : vector<8x192xf32> to vector<8x16xf32>
    %87 = vector.extract_strided_slice %29 {offsets = [0, 112], sizes = [8, 16], strides = [1, 1]} : vector<8x192xf32> to vector<8x16xf32>
    %88 = vector.extract_strided_slice %29 {offsets = [0, 176], sizes = [8, 16], strides = [1, 1]} : vector<8x192xf32> to vector<8x16xf32>
    %cst_35 = arith.constant dense<0.000000e+00> : vector<8x8xf32>
    %89 = tpu.matmul %86, %87, %cst_35 {dimension_numbers = #tpu.dot_dimension_numbers<[1], [1], [0], [0], [0, 0, 1, 0], [], []>} : vector<8x16xf32>, vector<8x16xf32>, vector<8x8xf32> -> vector<8x8xf32>
    %cst_36 = arith.constant 2.500000e-01 : f32
    %90 = vector.broadcast %cst_36 : f32 to vector<8x8xf32>
    %91 = arith.mulf %89, %90 : vector<8x8xf32>
    %cst_37 = arith.constant dense<0xFF800000> : vector<8xf32>
    %92 = vector.multi_reduction <maximumf>, %91, %cst_37 [1] : vector<8x8xf32> to vector<8xf32>
    %93 = vector.shape_cast %92 : vector<8xf32> to vector<8x1xf32>
    %94 = vector.broadcast %93 : vector<8x1xf32> to vector<8x8xf32>
    %95 = arith.subf %91, %94 : vector<8x8xf32>
    %96 = math.exp %95 : vector<8x8xf32>
    %cst_38 = arith.constant dense<0.000000e+00> : vector<8xf32>
    %97 = vector.multi_reduction <add>, %96, %cst_38 [1] : vector<8x8xf32> to vector<8xf32>
    %98 = vector.shape_cast %97 : vector<8xf32> to vector<8x1xf32>
    %99 = vector.broadcast %98 : vector<8x1xf32> to vector<8x8xf32>
    %100 = arith.divf %96, %99 : vector<8x8xf32>
    %cst_39 = arith.constant dense<0.000000e+00> : vector<8x16xf32>
    %101 = tpu.matmul %100, %88, %cst_39 {dimension_numbers = #tpu.dot_dimension_numbers<[1], [0], [0], [1], [0, 0, 1, 1], [], []>} : vector<8x8xf32>, vector<8x16xf32>, vector<8x16xf32> -> vector<8x16xf32>
    %102 = vector.extract_strided_slice %5 {offsets = [48, 0], sizes = [16, 32], strides = [1, 1]} : vector<64x32xf32> to vector<16x32xf32>
    %cst_40 = arith.constant dense<0.000000e+00> : vector<8x32xf32>
    %103 = tpu.matmul %101, %102, %cst_40 {dimension_numbers = #tpu.dot_dimension_numbers<[1], [0], [0], [1], [0, 0, 1, 1], [], []>} : vector<8x16xf32>, vector<16x32xf32>, vector<8x32xf32> -> vector<8x32xf32>
    %104 = arith.addf %85, %103 : vector<8x32xf32>
    %105 = vector.broadcast %6 : vector<1x32xf32> to vector<8x32xf32>
    %106 = arith.addf %104, %105 : vector<8x32xf32>
    %107 = arith.addf %106, %28 : vector<8x32xf32>
    %c0_41 = arith.constant 0 : index
    %c0_42 = arith.constant 0 : index
    %108 = vector.load %arg7[%c0_41, %c0_42] : memref<1x32xf32, #tpu.memory_space<vmem>>, vector<1x32xf32>
    %c0_43 = arith.constant 0 : index
    %c0_44 = arith.constant 0 : index
    %109 = vector.load %arg8[%c0_43, %c0_44] : memref<1x32xf32, #tpu.memory_space<vmem>>, vector<1x32xf32>
    %c0_45 = arith.constant 0 : index
    %c0_46 = arith.constant 0 : index
    %110 = vector.load %arg9[%c0_45, %c0_46] : memref<32x256xf32, #tpu.memory_space<vmem>>, vector<32x256xf32>
    %c0_47 = arith.constant 0 : index
    %c0_48 = arith.constant 0 : index
    %111 = vector.load %arg10[%c0_47, %c0_48] : memref<1x256xf32, #tpu.memory_space<vmem>>, vector<1x256xf32>
    %c0_49 = arith.constant 0 : index
    %c0_50 = arith.constant 0 : index
    %112 = vector.load %arg11[%c0_49, %c0_50] : memref<128x32xf32, #tpu.memory_space<vmem>>, vector<128x32xf32>
    %c0_51 = arith.constant 0 : index
    %c0_52 = arith.constant 0 : index
    %113 = vector.load %arg12[%c0_51, %c0_52] : memref<1x32xf32, #tpu.memory_space<vmem>>, vector<1x32xf32>
    %c0_53 = arith.constant 0 : index
    %c0_54 = arith.constant 0 : index
    %114 = vector.load %arg13[%c0_53, %c0_54] : memref<1x32xf32, #tpu.memory_space<vmem>>, vector<1x32xf32>
    %cst_55 = arith.constant dense<0.000000e+00> : vector<8xf32>
    %115 = vector.multi_reduction <add>, %107, %cst_55 [1] : vector<8x32xf32> to vector<8xf32>
    %116 = vector.shape_cast %115 : vector<8xf32> to vector<8x1xf32>
    %cst_56 = arith.constant 3.200000e+01 : f32
    %117 = vector.broadcast %cst_56 : f32 to vector<8x1xf32>
    %118 = arith.divf %116, %117 : vector<8x1xf32>
    %119 = vector.broadcast %118 : vector<8x1xf32> to vector<8x32xf32>
    %120 = arith.subf %107, %119 : vector<8x32xf32>
    %121 = arith.mulf %120, %120 : vector<8x32xf32>
    %cst_57 = arith.constant dense<0.000000e+00> : vector<8xf32>
    %122 = vector.multi_reduction <add>, %121, %cst_57 [1] : vector<8x32xf32> to vector<8xf32>
    %123 = vector.shape_cast %122 : vector<8xf32> to vector<8x1xf32>
    %cst_58 = arith.constant 3.200000e+01 : f32
    %124 = vector.broadcast %cst_58 : f32 to vector<8x1xf32>
    %125 = arith.divf %123, %124 : vector<8x1xf32>
    %cst_59 = arith.constant 9.99999974E-6 : f32
    %126 = vector.broadcast %cst_59 : f32 to vector<8x1xf32>
    %127 = arith.addf %125, %126 : vector<8x1xf32>
    %128 = math.rsqrt %127 : vector<8x1xf32>
    %129 = vector.broadcast %118 : vector<8x1xf32> to vector<8x32xf32>
    %130 = arith.subf %107, %129 : vector<8x32xf32>
    %131 = vector.broadcast %128 : vector<8x1xf32> to vector<8x32xf32>
    %132 = arith.mulf %130, %131 : vector<8x32xf32>
    %133 = vector.broadcast %108 : vector<1x32xf32> to vector<8x32xf32>
    %134 = arith.mulf %132, %133 : vector<8x32xf32>
    %135 = vector.broadcast %109 : vector<1x32xf32> to vector<8x32xf32>
    %136 = arith.addf %134, %135 : vector<8x32xf32>
    %cst_60 = arith.constant dense<0.000000e+00> : vector<8x256xf32>
    %137 = tpu.matmul %136, %110, %cst_60 {dimension_numbers = #tpu.dot_dimension_numbers<[1], [0], [0], [1], [0, 0, 1, 1], [], []>} : vector<8x32xf32>, vector<32x256xf32>, vector<8x256xf32> -> vector<8x256xf32>
    %138 = vector.broadcast %111 : vector<1x256xf32> to vector<8x256xf32>
    %139 = arith.addf %137, %138 : vector<8x256xf32>
    %140 = vector.extract_strided_slice %139 {offsets = [0, 0], sizes = [8, 128], strides = [1, 1]} : vector<8x256xf32> to vector<8x128xf32>
    %141 = vector.extract_strided_slice %139 {offsets = [0, 128], sizes = [8, 128], strides = [1, 1]} : vector<8x256xf32> to vector<8x128xf32>
    %cst_61 = arith.constant 5.000000e-01 : f32
    %142 = vector.broadcast %cst_61 : f32 to vector<8x128xf32>
    %143 = arith.mulf %142, %141 : vector<8x128xf32>
    %cst_62 = arith.constant 0.707106769 : f32
    %144 = vector.broadcast %cst_62 : f32 to vector<8x128xf32>
    %145 = arith.mulf %141, %144 : vector<8x128xf32>
    %cst_63 = arith.constant 0.000000e+00 : f32
    %146 = vector.broadcast %cst_63 : f32 to vector<8x128xf32>
    %147 = arith.cmpf oge, %145, %146 : vector<8x128xf32>
    %cst_64 = arith.constant 1.000000e+00 : f32
    %cst_65 = arith.constant -1.000000e+00 : f32
    %148 = vector.broadcast %cst_64 : f32 to vector<8x128xf32>
    %149 = vector.broadcast %cst_65 : f32 to vector<8x128xf32>
    %150 = arith.select %147, %148, %149 : vector<8x128xi1>, vector<8x128xf32>
    %151 = math.absf %145 : vector<8x128xf32>
    %cst_66 = arith.constant 0.327591091 : f32
    %152 = vector.broadcast %cst_66 : f32 to vector<8x128xf32>
    %153 = arith.mulf %152, %151 : vector<8x128xf32>
    %cst_67 = arith.constant 1.000000e+00 : f32
    %154 = vector.broadcast %cst_67 : f32 to vector<8x128xf32>
    %155 = arith.addf %154, %153 : vector<8x128xf32>
    %cst_68 = arith.constant 1.000000e+00 : f32
    %156 = vector.broadcast %cst_68 : f32 to vector<8x128xf32>
    %157 = arith.divf %156, %155 : vector<8x128xf32>
    %cst_69 = arith.constant 1.06140542 : f32
    %158 = vector.broadcast %cst_69 : f32 to vector<8x128xf32>
    %159 = arith.mulf %158, %157 : vector<8x128xf32>
    %cst_70 = arith.constant -1.45315206 : f32
    %160 = vector.broadcast %cst_70 : f32 to vector<8x128xf32>
    %161 = arith.addf %159, %160 : vector<8x128xf32>
    %162 = arith.mulf %161, %157 : vector<8x128xf32>
    %cst_71 = arith.constant 1.42141378 : f32
    %163 = vector.broadcast %cst_71 : f32 to vector<8x128xf32>
    %164 = arith.addf %162, %163 : vector<8x128xf32>
    %165 = arith.mulf %164, %157 : vector<8x128xf32>
    %cst_72 = arith.constant -0.284496725 : f32
    %166 = vector.broadcast %cst_72 : f32 to vector<8x128xf32>
    %167 = arith.addf %165, %166 : vector<8x128xf32>
    %168 = arith.mulf %167, %157 : vector<8x128xf32>
    %cst_73 = arith.constant 0.254829586 : f32
    %169 = vector.broadcast %cst_73 : f32 to vector<8x128xf32>
    %170 = arith.addf %168, %169 : vector<8x128xf32>
    %171 = arith.mulf %170, %157 : vector<8x128xf32>
    %cst_74 = arith.constant 0.000000e+00 : f32
    %172 = vector.broadcast %cst_74 : f32 to vector<8x128xf32>
    %173 = arith.subf %172, %151 : vector<8x128xf32>
    %174 = arith.mulf %173, %151 : vector<8x128xf32>
    %175 = math.exp %174 : vector<8x128xf32>
    %176 = arith.mulf %171, %175 : vector<8x128xf32>
    %cst_75 = arith.constant 1.000000e+00 : f32
    %177 = vector.broadcast %cst_75 : f32 to vector<8x128xf32>
    %178 = arith.subf %177, %176 : vector<8x128xf32>
    %179 = arith.mulf %150, %178 : vector<8x128xf32>
    %cst_76 = arith.constant 1.000000e+00 : f32
    %180 = vector.broadcast %cst_76 : f32 to vector<8x128xf32>
    %181 = arith.addf %180, %179 : vector<8x128xf32>
    %182 = arith.mulf %143, %181 : vector<8x128xf32>
    %183 = arith.mulf %140, %182 : vector<8x128xf32>
    %cst_77 = arith.constant dense<0.000000e+00> : vector<8x32xf32>
    %184 = tpu.matmul %183, %112, %cst_77 {dimension_numbers = #tpu.dot_dimension_numbers<[1], [0], [0], [1], [0, 0, 1, 1], [], []>} : vector<8x128xf32>, vector<128x32xf32>, vector<8x32xf32> -> vector<8x32xf32>
    %185 = vector.broadcast %113 : vector<1x32xf32> to vector<8x32xf32>
    %186 = arith.addf %184, %185 : vector<8x32xf32>
    %187 = vector.broadcast %114 : vector<1x32xf32> to vector<8x32xf32>
    %188 = arith.mulf %186, %187 : vector<8x32xf32>
    %189 = arith.addf %188, %136 : vector<8x32xf32>
    %c0_78 = arith.constant 0 : index
    %c0_79 = arith.constant 0 : index
    %c0_80 = arith.constant 0 : index
    %190 = vector.load %arg14[%c0_78, %c0_79, %c0_80] : memref<1x8x32xf32, #tpu.memory_space<vmem>>, vector<1x8x32xf32>
    %191 = vector.shape_cast %190 : vector<1x8x32xf32> to vector<8x32xf32>
    %192 = vector.shape_cast %189 : vector<8x32xf32> to vector<1x8x32xf32>
    tpu.vector_store %arg14[%c0_78, %c0_79, %c0_80], %192 {strides = array<i32>} : memref<1x8x32xf32, #tpu.memory_space<vmem>>, vector<1x8x32xf32>,
    return
  }
  func.func @transform_0(%arg0: i32) -> (i32, i32, i32) {
    %c0_i32 = arith.constant 0 : i32
    %c0_i32_0 = arith.constant 0 : i32
    %c0_i32_1 = arith.constant 0 : i32
    return %arg0, %c0_i32, %c0_i32_0 : i32, i32, i32
  }
  func.func @transform_1(%arg0: i32) -> (i32, i32) {
    %c0_i32 = arith.constant 0 : i32
    %c0_i32_0 = arith.constant 0 : i32
    %c0_i32_1 = arith.constant 0 : i32
    return %c0_i32, %c0_i32_0 : i32, i32
  }
  func.func @transform_2(%arg0: i32) -> (i32, i32) {
    %c0_i32 = arith.constant 0 : i32
    %c0_i32_0 = arith.constant 0 : i32
    %c0_i32_1 = arith.constant 0 : i32
    return %c0_i32, %c0_i32_0 : i32, i32
  }
  func.func @transform_3(%arg0: i32) -> (i32, i32) {
    %c0_i32 = arith.constant 0 : i32
    %c0_i32_0 = arith.constant 0 : i32
    %c0_i32_1 = arith.constant 0 : i32
    return %c0_i32, %c0_i32_0 : i32, i32
  }
  func.func @transform_4(%arg0: i32) -> (i32, i32) {
    %c0_i32 = arith.constant 0 : i32
    %c0_i32_0 = arith.constant 0 : i32
    %c0_i32_1 = arith.constant 0 : i32
    return %c0_i32, %c0_i32_0 : i32, i32
  }
  func.func @transform_5(%arg0: i32) -> (i32, i32) {
    %c0_i32 = arith.constant 0 : i32
    %c0_i32_0 = arith.constant 0 : i32
    %c0_i32_1 = arith.constant 0 : i32
    return %c0_i32, %c0_i32_0 : i32, i32
  }
  func.func @transform_6(%arg0: i32) -> (i32, i32) {
    %c0_i32 = arith.constant 0 : i32
    %c0_i32_0 = arith.constant 0 : i32
    %c0_i32_1 = arith.constant 0 : i32
    return %c0_i32, %c0_i32_0 : i32, i32
  }
  func.func @transform_7(%arg0: i32) -> (i32, i32) {
    %c0_i32 = arith.constant 0 : i32
    %c0_i32_0 = arith.constant 0 : i32
    %c0_i32_1 = arith.constant 0 : i32
    return %c0_i32, %c0_i32_0 : i32, i32
  }
  func.func @transform_8(%arg0: i32) -> (i32, i32) {
    %c0_i32 = arith.constant 0 : i32
    %c0_i32_0 = arith.constant 0 : i32
    %c0_i32_1 = arith.constant 0 : i32
    return %c0_i32, %c0_i32_0 : i32, i32
  }
  func.func @transform_9(%arg0: i32) -> (i32, i32) {
    %c0_i32 = arith.constant 0 : i32
    %c0_i32_0 = arith.constant 0 : i32
    %c0_i32_1 = arith.constant 0 : i32
    return %c0_i32, %c0_i32_0 : i32, i32
  }
  func.func @transform_10(%arg0: i32) -> (i32, i32) {
    %c0_i32 = arith.constant 0 : i32
    %c0_i32_0 = arith.constant 0 : i32
    %c0_i32_1 = arith.constant 0 : i32
    return %c0_i32, %c0_i32_0 : i32, i32
  }
  func.func @transform_11(%arg0: i32) -> (i32, i32) {
    %c0_i32 = arith.constant 0 : i32
    %c0_i32_0 = arith.constant 0 : i32
    %c0_i32_1 = arith.constant 0 : i32
    return %c0_i32, %c0_i32_0 : i32, i32
  }
  func.func @transform_12(%arg0: i32) -> (i32, i32) {
    %c0_i32 = arith.constant 0 : i32
    %c0_i32_0 = arith.constant 0 : i32
    %c0_i32_1 = arith.constant 0 : i32
    return %c0_i32, %c0_i32_0 : i32, i32
  }
  func.func @transform_13(%arg0: i32) -> (i32, i32, i32) {
    %c0_i32 = arith.constant 0 : i32
    %c0_i32_0 = arith.constant 0 : i32
    %c0_i32_1 = arith.constant 0 : i32
    return %arg0, %c0_i32, %c0_i32_0 : i32, i32, i32
  }
}

module attributes {stable_mosaic.version = 11 : i64} {
  func.func @_saint_half_kernel(%arg0: memref<2x256xf32, #tpu.memory_space<vmem>>, %arg1: memref<1x256xf32, #tpu.memory_space<vmem>>, %arg2: memref<1x256xf32, #tpu.memory_space<vmem>>, %arg3: memref<256x192xf32, #tpu.memory_space<vmem>>, %arg4: memref<64x256xf32, #tpu.memory_space<vmem>>, %arg5: memref<1x256xf32, #tpu.memory_space<vmem>>, %arg6: memref<1x256xf32, #tpu.memory_space<vmem>>, %arg7: memref<1x256xf32, #tpu.memory_space<vmem>>, %arg8: memref<256x2048xf32, #tpu.memory_space<vmem>>, %arg9: memref<1x2048xf32, #tpu.memory_space<vmem>>, %arg10: memref<1024x256xf32, #tpu.memory_space<vmem>>, %arg11: memref<1x256xf32, #tpu.memory_space<vmem>>, %arg12: memref<1x256xf32, #tpu.memory_space<vmem>>, %arg13: memref<2x256xf32, #tpu.memory_space<vmem>>) attributes {dimension_semantics = [], scalar_prefetch = 0 : i64, scratch_operands = 0 : i64, tpu.core_type = #tpu.core_type<tc>} {
    %c0 = arith.constant 0 : index
    %c0_0 = arith.constant 0 : index
    %0 = vector.load %arg0[%c0, %c0_0] : memref<2x256xf32, #tpu.memory_space<vmem>>, vector<2x256xf32>
    %c0_1 = arith.constant 0 : index
    %c0_2 = arith.constant 0 : index
    %1 = vector.load %arg1[%c0_1, %c0_2] : memref<1x256xf32, #tpu.memory_space<vmem>>, vector<1x256xf32>
    %c0_3 = arith.constant 0 : index
    %c0_4 = arith.constant 0 : index
    %2 = vector.load %arg2[%c0_3, %c0_4] : memref<1x256xf32, #tpu.memory_space<vmem>>, vector<1x256xf32>
    %c0_5 = arith.constant 0 : index
    %c0_6 = arith.constant 0 : index
    %3 = vector.load %arg3[%c0_5, %c0_6] : memref<256x192xf32, #tpu.memory_space<vmem>>, vector<256x192xf32>
    %c0_7 = arith.constant 0 : index
    %c0_8 = arith.constant 0 : index
    %4 = vector.load %arg4[%c0_7, %c0_8] : memref<64x256xf32, #tpu.memory_space<vmem>>, vector<64x256xf32>
    %c0_9 = arith.constant 0 : index
    %c0_10 = arith.constant 0 : index
    %5 = vector.load %arg5[%c0_9, %c0_10] : memref<1x256xf32, #tpu.memory_space<vmem>>, vector<1x256xf32>
    %cst = arith.constant dense<0.000000e+00> : vector<2xf32>
    %6 = vector.multi_reduction <add>, %0, %cst [1] : vector<2x256xf32> to vector<2xf32>
    %7 = vector.shape_cast %6 : vector<2xf32> to vector<2x1xf32>
    %cst_11 = arith.constant 2.560000e+02 : f32
    %8 = vector.broadcast %cst_11 : f32 to vector<2x1xf32>
    %9 = arith.divf %7, %8 : vector<2x1xf32>
    %10 = vector.broadcast %9 : vector<2x1xf32> to vector<2x256xf32>
    %11 = arith.subf %0, %10 : vector<2x256xf32>
    %12 = arith.mulf %11, %11 : vector<2x256xf32>
    %cst_12 = arith.constant dense<0.000000e+00> : vector<2xf32>
    %13 = vector.multi_reduction <add>, %12, %cst_12 [1] : vector<2x256xf32> to vector<2xf32>
    %14 = vector.shape_cast %13 : vector<2xf32> to vector<2x1xf32>
    %cst_13 = arith.constant 2.560000e+02 : f32
    %15 = vector.broadcast %cst_13 : f32 to vector<2x1xf32>
    %16 = arith.divf %14, %15 : vector<2x1xf32>
    %cst_14 = arith.constant 9.99999974E-6 : f32
    %17 = vector.broadcast %cst_14 : f32 to vector<2x1xf32>
    %18 = arith.addf %16, %17 : vector<2x1xf32>
    %19 = math.rsqrt %18 : vector<2x1xf32>
    %20 = vector.broadcast %9 : vector<2x1xf32> to vector<2x256xf32>
    %21 = arith.subf %0, %20 : vector<2x256xf32>
    %22 = vector.broadcast %19 : vector<2x1xf32> to vector<2x256xf32>
    %23 = arith.mulf %21, %22 : vector<2x256xf32>
    %24 = vector.broadcast %1 : vector<1x256xf32> to vector<2x256xf32>
    %25 = arith.mulf %23, %24 : vector<2x256xf32>
    %26 = vector.broadcast %2 : vector<1x256xf32> to vector<2x256xf32>
    %27 = arith.addf %25, %26 : vector<2x256xf32>
    %cst_15 = arith.constant dense<0.000000e+00> : vector<2x192xf32>
    %28 = tpu.matmul %27, %3, %cst_15 {dimension_numbers = #tpu.dot_dimension_numbers<[1], [0], [0], [1], [0, 0, 1, 1], [], []>} : vector<2x256xf32>, vector<256x192xf32>, vector<2x192xf32> -> vector<2x192xf32>
    %29 = vector.extract_strided_slice %28 {offsets = [0, 0], sizes = [2, 16], strides = [1, 1]} : vector<2x192xf32> to vector<2x16xf32>
    %30 = vector.extract_strided_slice %28 {offsets = [0, 64], sizes = [2, 16], strides = [1, 1]} : vector<2x192xf32> to vector<2x16xf32>
    %31 = vector.extract_strided_slice %28 {offsets = [0, 128], sizes = [2, 16], strides = [1, 1]} : vector<2x192xf32> to vector<2x16xf32>
    %cst_16 = arith.constant dense<0.000000e+00> : vector<2x2xf32>
    %32 = tpu.matmul %29, %30, %cst_16 {dimension_numbers = #tpu.dot_dimension_numbers<[1], [1], [0], [0], [0, 0, 1, 0], [], []>} : vector<2x16xf32>, vector<2x16xf32>, vector<2x2xf32> -> vector<2x2xf32>
    %cst_17 = arith.constant 2.500000e-01 : f32
    %33 = vector.broadcast %cst_17 : f32 to vector<2x2xf32>
    %34 = arith.mulf %32, %33 : vector<2x2xf32>
    %cst_18 = arith.constant dense<0xFF800000> : vector<2xf32>
    %35 = vector.multi_reduction <maximumf>, %34, %cst_18 [1] : vector<2x2xf32> to vector<2xf32>
    %36 = vector.shape_cast %35 : vector<2xf32> to vector<2x1xf32>
    %37 = vector.broadcast %36 : vector<2x1xf32> to vector<2x2xf32>
    %38 = arith.subf %34, %37 : vector<2x2xf32>
    %39 = math.exp %38 : vector<2x2xf32>
    %cst_19 = arith.constant dense<0.000000e+00> : vector<2xf32>
    %40 = vector.multi_reduction <add>, %39, %cst_19 [1] : vector<2x2xf32> to vector<2xf32>
    %41 = vector.shape_cast %40 : vector<2xf32> to vector<2x1xf32>
    %42 = vector.broadcast %41 : vector<2x1xf32> to vector<2x2xf32>
    %43 = arith.divf %39, %42 : vector<2x2xf32>
    %cst_20 = arith.constant dense<0.000000e+00> : vector<2x16xf32>
    %44 = tpu.matmul %43, %31, %cst_20 {dimension_numbers = #tpu.dot_dimension_numbers<[1], [0], [0], [1], [0, 0, 1, 1], [], []>} : vector<2x2xf32>, vector<2x16xf32>, vector<2x16xf32> -> vector<2x16xf32>
    %45 = vector.extract_strided_slice %4 {offsets = [0, 0], sizes = [16, 256], strides = [1, 1]} : vector<64x256xf32> to vector<16x256xf32>
    %cst_21 = arith.constant dense<0.000000e+00> : vector<2x256xf32>
    %46 = tpu.matmul %44, %45, %cst_21 {dimension_numbers = #tpu.dot_dimension_numbers<[1], [0], [0], [1], [0, 0, 1, 1], [], []>} : vector<2x16xf32>, vector<16x256xf32>, vector<2x256xf32> -> vector<2x256xf32>
    %47 = vector.extract_strided_slice %28 {offsets = [0, 16], sizes = [2, 16], strides = [1, 1]} : vector<2x192xf32> to vector<2x16xf32>
    %48 = vector.extract_strided_slice %28 {offsets = [0, 80], sizes = [2, 16], strides = [1, 1]} : vector<2x192xf32> to vector<2x16xf32>
    %49 = vector.extract_strided_slice %28 {offsets = [0, 144], sizes = [2, 16], strides = [1, 1]} : vector<2x192xf32> to vector<2x16xf32>
    %cst_22 = arith.constant dense<0.000000e+00> : vector<2x2xf32>
    %50 = tpu.matmul %47, %48, %cst_22 {dimension_numbers = #tpu.dot_dimension_numbers<[1], [1], [0], [0], [0, 0, 1, 0], [], []>} : vector<2x16xf32>, vector<2x16xf32>, vector<2x2xf32> -> vector<2x2xf32>
    %cst_23 = arith.constant 2.500000e-01 : f32
    %51 = vector.broadcast %cst_23 : f32 to vector<2x2xf32>
    %52 = arith.mulf %50, %51 : vector<2x2xf32>
    %cst_24 = arith.constant dense<0xFF800000> : vector<2xf32>
    %53 = vector.multi_reduction <maximumf>, %52, %cst_24 [1] : vector<2x2xf32> to vector<2xf32>
    %54 = vector.shape_cast %53 : vector<2xf32> to vector<2x1xf32>
    %55 = vector.broadcast %54 : vector<2x1xf32> to vector<2x2xf32>
    %56 = arith.subf %52, %55 : vector<2x2xf32>
    %57 = math.exp %56 : vector<2x2xf32>
    %cst_25 = arith.constant dense<0.000000e+00> : vector<2xf32>
    %58 = vector.multi_reduction <add>, %57, %cst_25 [1] : vector<2x2xf32> to vector<2xf32>
    %59 = vector.shape_cast %58 : vector<2xf32> to vector<2x1xf32>
    %60 = vector.broadcast %59 : vector<2x1xf32> to vector<2x2xf32>
    %61 = arith.divf %57, %60 : vector<2x2xf32>
    %cst_26 = arith.constant dense<0.000000e+00> : vector<2x16xf32>
    %62 = tpu.matmul %61, %49, %cst_26 {dimension_numbers = #tpu.dot_dimension_numbers<[1], [0], [0], [1], [0, 0, 1, 1], [], []>} : vector<2x2xf32>, vector<2x16xf32>, vector<2x16xf32> -> vector<2x16xf32>
    %63 = vector.extract_strided_slice %4 {offsets = [16, 0], sizes = [16, 256], strides = [1, 1]} : vector<64x256xf32> to vector<16x256xf32>
    %cst_27 = arith.constant dense<0.000000e+00> : vector<2x256xf32>
    %64 = tpu.matmul %62, %63, %cst_27 {dimension_numbers = #tpu.dot_dimension_numbers<[1], [0], [0], [1], [0, 0, 1, 1], [], []>} : vector<2x16xf32>, vector<16x256xf32>, vector<2x256xf32> -> vector<2x256xf32>
    %65 = arith.addf %46, %64 : vector<2x256xf32>
    %66 = vector.extract_strided_slice %28 {offsets = [0, 32], sizes = [2, 16], strides = [1, 1]} : vector<2x192xf32> to vector<2x16xf32>
    %67 = vector.extract_strided_slice %28 {offsets = [0, 96], sizes = [2, 16], strides = [1, 1]} : vector<2x192xf32> to vector<2x16xf32>
    %68 = vector.extract_strided_slice %28 {offsets = [0, 160], sizes = [2, 16], strides = [1, 1]} : vector<2x192xf32> to vector<2x16xf32>
    %cst_28 = arith.constant dense<0.000000e+00> : vector<2x2xf32>
    %69 = tpu.matmul %66, %67, %cst_28 {dimension_numbers = #tpu.dot_dimension_numbers<[1], [1], [0], [0], [0, 0, 1, 0], [], []>} : vector<2x16xf32>, vector<2x16xf32>, vector<2x2xf32> -> vector<2x2xf32>
    %cst_29 = arith.constant 2.500000e-01 : f32
    %70 = vector.broadcast %cst_29 : f32 to vector<2x2xf32>
    %71 = arith.mulf %69, %70 : vector<2x2xf32>
    %cst_30 = arith.constant dense<0xFF800000> : vector<2xf32>
    %72 = vector.multi_reduction <maximumf>, %71, %cst_30 [1] : vector<2x2xf32> to vector<2xf32>
    %73 = vector.shape_cast %72 : vector<2xf32> to vector<2x1xf32>
    %74 = vector.broadcast %73 : vector<2x1xf32> to vector<2x2xf32>
    %75 = arith.subf %71, %74 : vector<2x2xf32>
    %76 = math.exp %75 : vector<2x2xf32>
    %cst_31 = arith.constant dense<0.000000e+00> : vector<2xf32>
    %77 = vector.multi_reduction <add>, %76, %cst_31 [1] : vector<2x2xf32> to vector<2xf32>
    %78 = vector.shape_cast %77 : vector<2xf32> to vector<2x1xf32>
    %79 = vector.broadcast %78 : vector<2x1xf32> to vector<2x2xf32>
    %80 = arith.divf %76, %79 : vector<2x2xf32>
    %cst_32 = arith.constant dense<0.000000e+00> : vector<2x16xf32>
    %81 = tpu.matmul %80, %68, %cst_32 {dimension_numbers = #tpu.dot_dimension_numbers<[1], [0], [0], [1], [0, 0, 1, 1], [], []>} : vector<2x2xf32>, vector<2x16xf32>, vector<2x16xf32> -> vector<2x16xf32>
    %82 = vector.extract_strided_slice %4 {offsets = [32, 0], sizes = [16, 256], strides = [1, 1]} : vector<64x256xf32> to vector<16x256xf32>
    %cst_33 = arith.constant dense<0.000000e+00> : vector<2x256xf32>
    %83 = tpu.matmul %81, %82, %cst_33 {dimension_numbers = #tpu.dot_dimension_numbers<[1], [0], [0], [1], [0, 0, 1, 1], [], []>} : vector<2x16xf32>, vector<16x256xf32>, vector<2x256xf32> -> vector<2x256xf32>
    %84 = arith.addf %65, %83 : vector<2x256xf32>
    %85 = vector.extract_strided_slice %28 {offsets = [0, 48], sizes = [2, 16], strides = [1, 1]} : vector<2x192xf32> to vector<2x16xf32>
    %86 = vector.extract_strided_slice %28 {offsets = [0, 112], sizes = [2, 16], strides = [1, 1]} : vector<2x192xf32> to vector<2x16xf32>
    %87 = vector.extract_strided_slice %28 {offsets = [0, 176], sizes = [2, 16], strides = [1, 1]} : vector<2x192xf32> to vector<2x16xf32>
    %cst_34 = arith.constant dense<0.000000e+00> : vector<2x2xf32>
    %88 = tpu.matmul %85, %86, %cst_34 {dimension_numbers = #tpu.dot_dimension_numbers<[1], [1], [0], [0], [0, 0, 1, 0], [], []>} : vector<2x16xf32>, vector<2x16xf32>, vector<2x2xf32> -> vector<2x2xf32>
    %cst_35 = arith.constant 2.500000e-01 : f32
    %89 = vector.broadcast %cst_35 : f32 to vector<2x2xf32>
    %90 = arith.mulf %88, %89 : vector<2x2xf32>
    %cst_36 = arith.constant dense<0xFF800000> : vector<2xf32>
    %91 = vector.multi_reduction <maximumf>, %90, %cst_36 [1] : vector<2x2xf32> to vector<2xf32>
    %92 = vector.shape_cast %91 : vector<2xf32> to vector<2x1xf32>
    %93 = vector.broadcast %92 : vector<2x1xf32> to vector<2x2xf32>
    %94 = arith.subf %90, %93 : vector<2x2xf32>
    %95 = math.exp %94 : vector<2x2xf32>
    %cst_37 = arith.constant dense<0.000000e+00> : vector<2xf32>
    %96 = vector.multi_reduction <add>, %95, %cst_37 [1] : vector<2x2xf32> to vector<2xf32>
    %97 = vector.shape_cast %96 : vector<2xf32> to vector<2x1xf32>
    %98 = vector.broadcast %97 : vector<2x1xf32> to vector<2x2xf32>
    %99 = arith.divf %95, %98 : vector<2x2xf32>
    %cst_38 = arith.constant dense<0.000000e+00> : vector<2x16xf32>
    %100 = tpu.matmul %99, %87, %cst_38 {dimension_numbers = #tpu.dot_dimension_numbers<[1], [0], [0], [1], [0, 0, 1, 1], [], []>} : vector<2x2xf32>, vector<2x16xf32>, vector<2x16xf32> -> vector<2x16xf32>
    %101 = vector.extract_strided_slice %4 {offsets = [48, 0], sizes = [16, 256], strides = [1, 1]} : vector<64x256xf32> to vector<16x256xf32>
    %cst_39 = arith.constant dense<0.000000e+00> : vector<2x256xf32>
    %102 = tpu.matmul %100, %101, %cst_39 {dimension_numbers = #tpu.dot_dimension_numbers<[1], [0], [0], [1], [0, 0, 1, 1], [], []>} : vector<2x16xf32>, vector<16x256xf32>, vector<2x256xf32> -> vector<2x256xf32>
    %103 = arith.addf %84, %102 : vector<2x256xf32>
    %104 = vector.broadcast %5 : vector<1x256xf32> to vector<2x256xf32>
    %105 = arith.addf %103, %104 : vector<2x256xf32>
    %106 = arith.addf %105, %27 : vector<2x256xf32>
    %c0_40 = arith.constant 0 : index
    %c0_41 = arith.constant 0 : index
    %107 = vector.load %arg6[%c0_40, %c0_41] : memref<1x256xf32, #tpu.memory_space<vmem>>, vector<1x256xf32>
    %c0_42 = arith.constant 0 : index
    %c0_43 = arith.constant 0 : index
    %108 = vector.load %arg7[%c0_42, %c0_43] : memref<1x256xf32, #tpu.memory_space<vmem>>, vector<1x256xf32>
    %c0_44 = arith.constant 0 : index
    %c0_45 = arith.constant 0 : index
    %109 = vector.load %arg8[%c0_44, %c0_45] : memref<256x2048xf32, #tpu.memory_space<vmem>>, vector<256x2048xf32>
    %c0_46 = arith.constant 0 : index
    %c0_47 = arith.constant 0 : index
    %110 = vector.load %arg9[%c0_46, %c0_47] : memref<1x2048xf32, #tpu.memory_space<vmem>>, vector<1x2048xf32>
    %c0_48 = arith.constant 0 : index
    %c0_49 = arith.constant 0 : index
    %111 = vector.load %arg10[%c0_48, %c0_49] : memref<1024x256xf32, #tpu.memory_space<vmem>>, vector<1024x256xf32>
    %c0_50 = arith.constant 0 : index
    %c0_51 = arith.constant 0 : index
    %112 = vector.load %arg11[%c0_50, %c0_51] : memref<1x256xf32, #tpu.memory_space<vmem>>, vector<1x256xf32>
    %c0_52 = arith.constant 0 : index
    %c0_53 = arith.constant 0 : index
    %113 = vector.load %arg12[%c0_52, %c0_53] : memref<1x256xf32, #tpu.memory_space<vmem>>, vector<1x256xf32>
    %cst_54 = arith.constant dense<0.000000e+00> : vector<2xf32>
    %114 = vector.multi_reduction <add>, %106, %cst_54 [1] : vector<2x256xf32> to vector<2xf32>
    %115 = vector.shape_cast %114 : vector<2xf32> to vector<2x1xf32>
    %cst_55 = arith.constant 2.560000e+02 : f32
    %116 = vector.broadcast %cst_55 : f32 to vector<2x1xf32>
    %117 = arith.divf %115, %116 : vector<2x1xf32>
    %118 = vector.broadcast %117 : vector<2x1xf32> to vector<2x256xf32>
    %119 = arith.subf %106, %118 : vector<2x256xf32>
    %120 = arith.mulf %119, %119 : vector<2x256xf32>
    %cst_56 = arith.constant dense<0.000000e+00> : vector<2xf32>
    %121 = vector.multi_reduction <add>, %120, %cst_56 [1] : vector<2x256xf32> to vector<2xf32>
    %122 = vector.shape_cast %121 : vector<2xf32> to vector<2x1xf32>
    %cst_57 = arith.constant 2.560000e+02 : f32
    %123 = vector.broadcast %cst_57 : f32 to vector<2x1xf32>
    %124 = arith.divf %122, %123 : vector<2x1xf32>
    %cst_58 = arith.constant 9.99999974E-6 : f32
    %125 = vector.broadcast %cst_58 : f32 to vector<2x1xf32>
    %126 = arith.addf %124, %125 : vector<2x1xf32>
    %127 = math.rsqrt %126 : vector<2x1xf32>
    %128 = vector.broadcast %117 : vector<2x1xf32> to vector<2x256xf32>
    %129 = arith.subf %106, %128 : vector<2x256xf32>
    %130 = vector.broadcast %127 : vector<2x1xf32> to vector<2x256xf32>
    %131 = arith.mulf %129, %130 : vector<2x256xf32>
    %132 = vector.broadcast %107 : vector<1x256xf32> to vector<2x256xf32>
    %133 = arith.mulf %131, %132 : vector<2x256xf32>
    %134 = vector.broadcast %108 : vector<1x256xf32> to vector<2x256xf32>
    %135 = arith.addf %133, %134 : vector<2x256xf32>
    %cst_59 = arith.constant dense<0.000000e+00> : vector<2x2048xf32>
    %136 = tpu.matmul %135, %109, %cst_59 {dimension_numbers = #tpu.dot_dimension_numbers<[1], [0], [0], [1], [0, 0, 1, 1], [], []>} : vector<2x256xf32>, vector<256x2048xf32>, vector<2x2048xf32> -> vector<2x2048xf32>
    %137 = vector.broadcast %110 : vector<1x2048xf32> to vector<2x2048xf32>
    %138 = arith.addf %136, %137 : vector<2x2048xf32>
    %139 = vector.extract_strided_slice %138 {offsets = [0, 0], sizes = [2, 1024], strides = [1, 1]} : vector<2x2048xf32> to vector<2x1024xf32>
    %140 = vector.extract_strided_slice %138 {offsets = [0, 1024], sizes = [2, 1024], strides = [1, 1]} : vector<2x2048xf32> to vector<2x1024xf32>
    %cst_60 = arith.constant 5.000000e-01 : f32
    %141 = vector.broadcast %cst_60 : f32 to vector<2x1024xf32>
    %142 = arith.mulf %141, %140 : vector<2x1024xf32>
    %cst_61 = arith.constant 0.707106769 : f32
    %143 = vector.broadcast %cst_61 : f32 to vector<2x1024xf32>
    %144 = arith.mulf %140, %143 : vector<2x1024xf32>
    %cst_62 = arith.constant 0.000000e+00 : f32
    %145 = vector.broadcast %cst_62 : f32 to vector<2x1024xf32>
    %146 = arith.cmpf oge, %144, %145 : vector<2x1024xf32>
    %cst_63 = arith.constant 1.000000e+00 : f32
    %cst_64 = arith.constant -1.000000e+00 : f32
    %147 = vector.broadcast %cst_63 : f32 to vector<2x1024xf32>
    %148 = vector.broadcast %cst_64 : f32 to vector<2x1024xf32>
    %149 = arith.select %146, %147, %148 : vector<2x1024xi1>, vector<2x1024xf32>
    %150 = math.absf %144 : vector<2x1024xf32>
    %cst_65 = arith.constant 0.327591091 : f32
    %151 = vector.broadcast %cst_65 : f32 to vector<2x1024xf32>
    %152 = arith.mulf %151, %150 : vector<2x1024xf32>
    %cst_66 = arith.constant 1.000000e+00 : f32
    %153 = vector.broadcast %cst_66 : f32 to vector<2x1024xf32>
    %154 = arith.addf %153, %152 : vector<2x1024xf32>
    %cst_67 = arith.constant 1.000000e+00 : f32
    %155 = vector.broadcast %cst_67 : f32 to vector<2x1024xf32>
    %156 = arith.divf %155, %154 : vector<2x1024xf32>
    %cst_68 = arith.constant 1.06140542 : f32
    %157 = vector.broadcast %cst_68 : f32 to vector<2x1024xf32>
    %158 = arith.mulf %157, %156 : vector<2x1024xf32>
    %cst_69 = arith.constant -1.45315206 : f32
    %159 = vector.broadcast %cst_69 : f32 to vector<2x1024xf32>
    %160 = arith.addf %158, %159 : vector<2x1024xf32>
    %161 = arith.mulf %160, %156 : vector<2x1024xf32>
    %cst_70 = arith.constant 1.42141378 : f32
    %162 = vector.broadcast %cst_70 : f32 to vector<2x1024xf32>
    %163 = arith.addf %161, %162 : vector<2x1024xf32>
    %164 = arith.mulf %163, %156 : vector<2x1024xf32>
    %cst_71 = arith.constant -0.284496725 : f32
    %165 = vector.broadcast %cst_71 : f32 to vector<2x1024xf32>
    %166 = arith.addf %164, %165 : vector<2x1024xf32>
    %167 = arith.mulf %166, %156 : vector<2x1024xf32>
    %cst_72 = arith.constant 0.254829586 : f32
    %168 = vector.broadcast %cst_72 : f32 to vector<2x1024xf32>
    %169 = arith.addf %167, %168 : vector<2x1024xf32>
    %170 = arith.mulf %169, %156 : vector<2x1024xf32>
    %cst_73 = arith.constant 0.000000e+00 : f32
    %171 = vector.broadcast %cst_73 : f32 to vector<2x1024xf32>
    %172 = arith.subf %171, %150 : vector<2x1024xf32>
    %173 = arith.mulf %172, %150 : vector<2x1024xf32>
    %174 = math.exp %173 : vector<2x1024xf32>
    %175 = arith.mulf %170, %174 : vector<2x1024xf32>
    %cst_74 = arith.constant 1.000000e+00 : f32
    %176 = vector.broadcast %cst_74 : f32 to vector<2x1024xf32>
    %177 = arith.subf %176, %175 : vector<2x1024xf32>
    %178 = arith.mulf %149, %177 : vector<2x1024xf32>
    %cst_75 = arith.constant 1.000000e+00 : f32
    %179 = vector.broadcast %cst_75 : f32 to vector<2x1024xf32>
    %180 = arith.addf %179, %178 : vector<2x1024xf32>
    %181 = arith.mulf %142, %180 : vector<2x1024xf32>
    %182 = arith.mulf %139, %181 : vector<2x1024xf32>
    %cst_76 = arith.constant dense<0.000000e+00> : vector<2x256xf32>
    %183 = tpu.matmul %182, %111, %cst_76 {dimension_numbers = #tpu.dot_dimension_numbers<[1], [0], [0], [1], [0, 0, 1, 1], [], []>} : vector<2x1024xf32>, vector<1024x256xf32>, vector<2x256xf32> -> vector<2x256xf32>
    %184 = vector.broadcast %112 : vector<1x256xf32> to vector<2x256xf32>
    %185 = arith.addf %183, %184 : vector<2x256xf32>
    %186 = vector.broadcast %113 : vector<1x256xf32> to vector<2x256xf32>
    %187 = arith.mulf %185, %186 : vector<2x256xf32>
    %188 = arith.addf %187, %135 : vector<2x256xf32>
    %c0_77 = arith.constant 0 : index
    %c0_78 = arith.constant 0 : index
    %189 = vector.load %arg13[%c0_77, %c0_78] : memref<2x256xf32, #tpu.memory_space<vmem>>, vector<2x256xf32>
    tpu.vector_store %arg13[%c0_77, %c0_78], %188 {strides = array<i32>} : memref<2x256xf32, #tpu.memory_space<vmem>>, vector<2x256xf32>,
    return
  }
}

</mosaic_0001>

<llo_original>
// kernel: pruned_saint_forward.2
$region0: #{pruned_saint_forward.2}
  #allocation0 [shape = 'u32[]', space=smem, size = 0x4, offset = 0x4, fixed_abs, tag = 'smem constant byte address 0x4 - core index']
  #allocation1 [shape = 'u32[72,128]{1,0:T(1,128)}', space=vmem, size = 0x9000, scoped, tag = 'internal scratch']
  %s0 = inlined_call_operand.hbm [shape: f32[2,8,32], index: 0, kind: input, shape index: {}]
  %s1 = inlined_call_operand.hbm [shape: f32[1,32], index: 1, kind: input, shape index: {}]
  %s2 = inlined_call_operand.hbm [shape: f32[1,32], index: 2, kind: input, shape index: {}]
  %s3 = inlined_call_operand.hbm [shape: f32[32,192], index: 3, kind: input, shape index: {}]
  %s4 = inlined_call_operand.vmem [shape: f32[64,32], index: 4, kind: input, shape index: {}]
  %s5 = inlined_call_operand.hbm [shape: f32[1,32], index: 5, kind: input, shape index: {}]
  %s6 = inlined_call_operand.hbm [shape: f32[1,32], index: 6, kind: input, shape index: {}]
  %s7 = inlined_call_operand.hbm [shape: f32[1,32], index: 7, kind: input, shape index: {}]
  %s8 = inlined_call_operand.hbm [shape: f32[32,256], index: 8, kind: input, shape index: {}]
  %s9 = inlined_call_operand.hbm [shape: f32[1,256], index: 9, kind: input, shape index: {}]
  %s10 = inlined_call_operand.vmem [shape: f32[128,32], index: 10, kind: input, shape index: {}]
  %s11 = inlined_call_operand.hbm [shape: f32[1,32], index: 11, kind: input, shape index: {}]
  %s12 = inlined_call_operand.hbm [shape: f32[1,32], index: 12, kind: input, shape index: {}]
  %s13 = inlined_call_operand.vmem [shape: f32[2,8,32], index: 13, kind: output, shape index: {}]
  %s14 = sld [smem:[#allocation0]]
  $region129: #{pruned_saint_forward.2} parent=0
    _
  %s16 = ssub.s32 1, %s14
  %s17 = scalar_select 0, %s16, %s14
  $region1: #{pruned_saint_forward.2} parent=0
    #allocation2 [shape = 'u8[8192]{0}', space=vmem, size = 0x2000, scoped, tag = 'input window, operand 0']
    #allocation3 [shape = 's32[2]{0}', space=sflag, size = 0x8, scoped, tag = 'scoped memory for pruned_saint_forward.2']
    #allocation4 [shape = 'u8[512]{0}', space=vmem, size = 0x400, scoped, tag = 'input window, operand 1, single buffered']
    #allocation5 [shape = 's32[1]{0}', space=sflag, size = 0x4, scoped, tag = 'scoped memory for pruned_saint_forward.2']
    #allocation6 [shape = 'u8[512]{0}', space=vmem, size = 0x400, scoped, tag = 'input window, operand 2, single buffered']
    #allocation7 [shape = 'u8[32768]{0}', space=vmem, size = 0x8000, scoped, tag = 'input window, operand 3, single buffered']
    #allocation8 [shape = 's32[1]{0}', space=sflag, size = 0x4, scoped, tag = 'scoped memory for pruned_saint_forward.2']
    #allocation9 [shape = 'u8[512]{0}', space=vmem, size = 0x400, scoped, tag = 'input window, operand 5, single buffered']
    #allocation10 [shape = 'u8[512]{0}', space=vmem, size = 0x400, scoped, tag = 'input window, operand 6, single buffered']
    #allocation11 [shape = 's32[1]{0}', space=sflag, size = 0x4, scoped, tag = 'scoped memory for pruned_saint_forward.2']
    #allocation12 [shape = 'u8[512]{0}', space=vmem, size = 0x400, scoped, tag = 'input window, operand 7, single buffered']
    #allocation13 [shape = 'u8[32768]{0}', space=vmem, size = 0x8000, scoped, tag = 'input window, operand 8, single buffered']
    #allocation14 [shape = 's32[1]{0}', space=sflag, size = 0x4, scoped, tag = 'scoped memory for pruned_saint_forward.2']
    #allocation15 [shape = 'u8[1024]{0}', space=vmem, size = 0x400, scoped, tag = 'input window, operand 9, single buffered']
    #allocation16 [shape = 'u8[512]{0}', space=vmem, size = 0x400, scoped, tag = 'input window, operand 11, single buffered']
    #allocation17 [shape = 's32[1]{0}', space=sflag, size = 0x4, scoped, tag = 'scoped memory for pruned_saint_forward.2']
    #allocation18 [shape = 'u8[512]{0}', space=vmem, size = 0x400, scoped, tag = 'input window, operand 12, single buffered']
    %18 = vsyncpa [#allocation3], 0
    %s19 = scalar_lea.sflag [#allocation3], 1
    %20 = vsyncpa %s19, 0
    %21 = vsyncpa [#allocation5], 0
    %22 = vsyncpa [#allocation8], 0
    %23 = vsyncpa [#allocation11], 0
    %24 = vsyncpa [#allocation14], 0
    %25 = vsyncpa [#allocation17], 0
    loop: start=0, step=1, limit=4
    $region2: #{pruned_saint_forward.2} parent=1 // loop_pre_header
      _
    $region3: #{pruned_saint_forward.2} parent=1 // loop_header
      %s27 = sphi 0, %s31
      %p28 = scmp.ge.s32.totalorder %s27, 4
      %s37 = sphi 0, %s39
      %s40 = sphi 0, %s37
      %s41 = sphi 0, %s40
      %s57 = sphi 0, %s41
      %s61 = sphi 0, %s61
      %s63 = sphi 0, %s61
      %s64 = sphi 0, %s63
      %s78 = sphi 0, %s64
      %s82 = sphi 0, %s82
      %s84 = sphi 0, %s82
      %s85 = sphi 0, %s84
      %s99 = sphi 0, %s85
      %s103 = sphi 0, %s103
      %s105 = sphi 0, %s103
      %s106 = sphi 0, %s105
      %s120 = sphi 0, %s106
      %s124 = sphi 0, %s124
      %s126 = sphi 0, %s124
      %s127 = sphi 0, %s126
      %s141 = sphi 0, %s127
      %s145 = sphi 0, %s145
      %s147 = sphi 0, %s145
      %s148 = sphi 0, %s147
      %s162 = sphi 0, %s148
      %s166 = sphi 0, %s166
      %s168 = sphi 0, %s166
      %s169 = sphi 0, %s168
      %s183 = sphi 0, %s169
      %s187 = sphi 0, %s187
      %s189 = sphi 0, %s187
      %s190 = sphi 0, %s189
      %s204 = sphi 0, %s190
      %s208 = sphi 0, %s208
      %s210 = sphi 0, %s208
      %s211 = sphi 0, %s210
      %s225 = sphi 0, %s211
      %s229 = sphi 0, %s229
      %s231 = sphi 0, %s229
      %s232 = sphi 0, %s231
      %s246 = sphi 0, %s232
      %s250 = sphi 0, %s250
      %s252 = sphi 0, %s250
      %s253 = sphi 0, %s252
      %s267 = sphi 0, %s253
      %s271 = sphi 0, %s271
      %s273 = sphi 0, %s271
      %s274 = sphi 0, %s273
      %s288 = sphi 0, %s274
      %s292 = sphi 0, %s292
      %s294 = sphi 0, %s292
      %s295 = sphi 0, %s294
      %s309 = sphi 0, %s295
      %s315 = sphi 0, %s317
      %s318 = sphi 0, %s315
      %s319 = sphi 0, %s318
      %s335 = sphi 0, %s319
    $region4: #{pruned_saint_forward.2} parent=1 // loop_header_branch
      %30 = sbr.rel (%p28) target = $region8
    $region5: #{pruned_saint_forward.2} parent=1 // loop_body
      %s32 = ssub.s32 %s27, 1
      %s33 = ssub.s32 %s27, 2
      %s34 = sadd.s32 %s27, 1
      %s35 = ssub.s32 %s27, %s34
      %p36 = scmp.eq.s32.totalorder %s35, 0
      %s38 = sadd.s32 %s37, 1
      %s39 = scalar_select %p36, %s37, %s38
      %p42 = pneg %p36
      %p43 = scmp.eq.s32.totalorder %s27, 1
      %p44 = por %p42, %p43
      %p45 = scmp.ne.s32.totalorder %s37, %s40
      %p46 = scmp.eq.s32.totalorder %s27, 0
      %p47 = por %p45, %p46
      %p48 = scmp.ne.s32.totalorder %s37, %s40
      %p49 = scmp.eq.s32.totalorder %s32, 1
      %p50 = por %p48, %p49
      %p51 = scmp.ne.s32.totalorder %s40, %s41
      %p52 = scmp.eq.s32.totalorder %s32, 0
      %p53 = por %p51, %p52
      %p54 = scmp.ne.s32.totalorder %s40, %s41
      %p55 = scmp.eq.s32.totalorder %s33, 1
      %p56 = por %p54, %p55
      %p58 = scmp.ne.s32.totalorder %s41, %s57
      %p59 = scmp.eq.s32.totalorder %s33, 0
      %p60 = por %p58, %p59
      %s62 = sadd.s32 %s61, 1
      %p65 = scmp.eq.s32.totalorder %s27, 1
      %p66 = scmp.ne.s32.totalorder %s61, %s63
      %p67 = scmp.eq.s32.totalorder %s27, 0
      %p68 = por %p66, %p67
      %p69 = scmp.ne.s32.totalorder %s61, %s63
      %p70 = scmp.eq.s32.totalorder %s32, 1
      %p71 = por %p69, %p70
      %p72 = scmp.ne.s32.totalorder %s63, %s64
      %p73 = scmp.eq.s32.totalorder %s32, 0
      %p74 = por %p72, %p73
      %p75 = scmp.ne.s32.totalorder %s63, %s64
      %p76 = scmp.eq.s32.totalorder %s33, 1
      %p77 = por %p75, %p76
      %p79 = scmp.ne.s32.totalorder %s64, %s78
      %p80 = scmp.eq.s32.totalorder %s33, 0
      %p81 = por %p79, %p80
      %s83 = sadd.s32 %s82, 1
      %p86 = scmp.eq.s32.totalorder %s27, 1
      %p87 = scmp.ne.s32.totalorder %s82, %s84
      %p88 = scmp.eq.s32.totalorder %s27, 0
      %p89 = por %p87, %p88
      %p90 = scmp.ne.s32.totalorder %s82, %s84
      %p91 = scmp.eq.s32.totalorder %s32, 1
      %p92 = por %p90, %p91
      %p93 = scmp.ne.s32.totalorder %s84, %s85
      %p94 = scmp.eq.s32.totalorder %s32, 0
      %p95 = por %p93, %p94
      %p96 = scmp.ne.s32.totalorder %s84, %s85
      %p97 = scmp.eq.s32.totalorder %s33, 1
      %p98 = por %p96, %p97
      %p100 = scmp.ne.s32.totalorder %s85, %s99
      %p101 = scmp.eq.s32.totalorder %s33, 0
      %p102 = por %p100, %p101
      %s104 = sadd.s32 %s103, 1
      %p107 = scmp.eq.s32.totalorder %s27, 1
      %p108 = scmp.ne.s32.totalorder %s103, %s105
      %p109 = scmp.eq.s32.totalorder %s27, 0
      %p110 = por %p108, %p109
      %p111 = scmp.ne.s32.totalorder %s103, %s105
      %p112 = scmp.eq.s32.totalorder %s32, 1
      %p113 = por %p111, %p112
      %p114 = scmp.ne.s32.totalorder %s105, %s106
      %p115 = scmp.eq.s32.totalorder %s32, 0
      %p116 = por %p114, %p115
      %p117 = scmp.ne.s32.totalorder %s105, %s106
      %p118 = scmp.eq.s32.totalorder %s33, 1
      %p119 = por %p117, %p118
      %p121 = scmp.ne.s32.totalorder %s106, %s120
      %p122 = scmp.eq.s32.totalorder %s33, 0
      %p123 = por %p121, %p122
      %s125 = sadd.s32 %s124, 1
      %p128 = scmp.eq.s32.totalorder %s27, 1
      %p129 = scmp.ne.s32.totalorder %s124, %s126
      %p130 = scmp.eq.s32.totalorder %s27, 0
      %p131 = por %p129, %p130
      %p132 = scmp.ne.s32.totalorder %s124, %s126
      %p133 = scmp.eq.s32.totalorder %s32, 1
      %p134 = por %p132, %p133
      %p135 = scmp.ne.s32.totalorder %s126, %s127
      %p136 = scmp.eq.s32.totalorder %s32, 0
      %p137 = por %p135, %p136
      %p138 = scmp.ne.s32.totalorder %s126, %s127
      %p139 = scmp.eq.s32.totalorder %s33, 1
      %p140 = por %p138, %p139
      %p142 = scmp.ne.s32.totalorder %s127, %s141
      %p143 = scmp.eq.s32.totalorder %s33, 0
      %p144 = por %p142, %p143
      %s146 = sadd.s32 %s145, 1
      %p149 = scmp.eq.s32.totalorder %s27, 1
      %p150 = scmp.ne.s32.totalorder %s145, %s147
      %p151 = scmp.eq.s32.totalorder %s27, 0
      %p152 = por %p150, %p151
      %p153 = scmp.ne.s32.totalorder %s145, %s147
      %p154 = scmp.eq.s32.totalorder %s32, 1
      %p155 = por %p153, %p154
      %p156 = scmp.ne.s32.totalorder %s147, %s148
      %p157 = scmp.eq.s32.totalorder %s32, 0
      %p158 = por %p156, %p157
      %p159 = scmp.ne.s32.totalorder %s147, %s148
      %p160 = scmp.eq.s32.totalorder %s33, 1
      %p161 = por %p159, %p160
      %p163 = scmp.ne.s32.totalorder %s148, %s162
      %p164 = scmp.eq.s32.totalorder %s33, 0
      %p165 = por %p163, %p164
      %s167 = sadd.s32 %s166, 1
      %p170 = scmp.eq.s32.totalorder %s27, 1
      %p171 = scmp.ne.s32.totalorder %s166, %s168
      %p172 = scmp.eq.s32.totalorder %s27, 0
      %p173 = por %p171, %p172
      %p174 = scmp.ne.s32.totalorder %s166, %s168
      %p175 = scmp.eq.s32.totalorder %s32, 1
      %p176 = por %p174, %p175
      %p177 = scmp.ne.s32.totalorder %s168, %s169
      %p178 = scmp.eq.s32.totalorder %s32, 0
      %p179 = por %p177, %p178
      %p180 = scmp.ne.s32.totalorder %s168, %s169
      %p181 = scmp.eq.s32.totalorder %s33, 1
      %p182 = por %p180, %p181
      %p184 = scmp.ne.s32.totalorder %s169, %s183
      %p185 = scmp.eq.s32.totalorder %s33, 0
      %p186 = por %p184, %p185
      %s188 = sadd.s32 %s187, 1
      %p191 = scmp.eq.s32.totalorder %s27, 1
      %p192 = scmp.ne.s32.totalorder %s187, %s189
      %p193 = scmp.eq.s32.totalorder %s27, 0
      %p194 = por %p192, %p193
      %p195 = scmp.ne.s32.totalorder %s187, %s189
      %p196 = scmp.eq.s32.totalorder %s32, 1
      %p197 = por %p195, %p196
      %p198 = scmp.ne.s32.totalorder %s189, %s190
      %p199 = scmp.eq.s32.totalorder %s32, 0
      %p200 = por %p198, %p199
      %p201 = scmp.ne.s32.totalorder %s189, %s190
      %p202 = scmp.eq.s32.totalorder %s33, 1
      %p203 = por %p201, %p202
      %p205 = scmp.ne.s32.totalorder %s190, %s204
      %p206 = scmp.eq.s32.totalorder %s33, 0
      %p207 = por %p205, %p206
      %s209 = sadd.s32 %s208, 1
      %p212 = scmp.eq.s32.totalorder %s27, 1
      %p213 = scmp.ne.s32.totalorder %s208, %s210
      %p214 = scmp.eq.s32.totalorder %s27, 0
      %p215 = por %p213, %p214
      %p216 = scmp.ne.s32.totalorder %s208, %s210
      %p217 = scmp.eq.s32.totalorder %s32, 1
      %p218 = por %p216, %p217
      %p219 = scmp.ne.s32.totalorder %s210, %s211
      %p220 = scmp.eq.s32.totalorder %s32, 0
      %p221 = por %p219, %p220
      %p222 = scmp.ne.s32.totalorder %s210, %s211
      %p223 = scmp.eq.s32.totalorder %s33, 1
      %p224 = por %p222, %p223
      %p226 = scmp.ne.s32.totalorder %s211, %s225
      %p227 = scmp.eq.s32.totalorder %s33, 0
      %p228 = por %p226, %p227
      %s230 = sadd.s32 %s229, 1
      %p233 = scmp.eq.s32.totalorder %s27, 1
      %p234 = scmp.ne.s32.totalorder %s229, %s231
      %p235 = scmp.eq.s32.totalorder %s27, 0
      %p236 = por %p234, %p235
      %p237 = scmp.ne.s32.totalorder %s229, %s231
      %p238 = scmp.eq.s32.totalorder %s32, 1
      %p239 = por %p237, %p238
      %p240 = scmp.ne.s32.totalorder %s231, %s232
      %p241 = scmp.eq.s32.totalorder %s32, 0
      %p242 = por %p240, %p241
      %p243 = scmp.ne.s32.totalorder %s231, %s232
      %p244 = scmp.eq.s32.totalorder %s33, 1
      %p245 = por %p243, %p244
      %p247 = scmp.ne.s32.totalorder %s232, %s246
      %p248 = scmp.eq.s32.totalorder %s33, 0
      %p249 = por %p247, %p248
      %s251 = sadd.s32 %s250, 1
      %p254 = scmp.eq.s32.totalorder %s27, 1
      %p255 = scmp.ne.s32.totalorder %s250, %s252
      %p256 = scmp.eq.s32.totalorder %s27, 0
      %p257 = por %p255, %p256
      %p258 = scmp.ne.s32.totalorder %s250, %s252
      %p259 = scmp.eq.s32.totalorder %s32, 1
      %p260 = por %p258, %p259
      %p261 = scmp.ne.s32.totalorder %s252, %s253
      %p262 = scmp.eq.s32.totalorder %s32, 0
      %p263 = por %p261, %p262
      %p264 = scmp.ne.s32.totalorder %s252, %s253
      %p265 = scmp.eq.s32.totalorder %s33, 1
      %p266 = por %p264, %p265
      %p268 = scmp.ne.s32.totalorder %s253, %s267
      %p269 = scmp.eq.s32.totalorder %s33, 0
      %p270 = por %p268, %p269
      %s272 = sadd.s32 %s271, 1
      %p275 = scmp.eq.s32.totalorder %s27, 1
      %p276 = scmp.ne.s32.totalorder %s271, %s273
      %p277 = scmp.eq.s32.totalorder %s27, 0
      %p278 = por %p276, %p277
      %p279 = scmp.ne.s32.totalorder %s271, %s273
      %p280 = scmp.eq.s32.totalorder %s32, 1
      %p281 = por %p279, %p280
      %p282 = scmp.ne.s32.totalorder %s273, %s274
      %p283 = scmp.eq.s32.totalorder %s32, 0
      %p284 = por %p282, %p283
      %p285 = scmp.ne.s32.totalorder %s273, %s274
      %p286 = scmp.eq.s32.totalorder %s33, 1
      %p287 = por %p285, %p286
      %p289 = scmp.ne.s32.totalorder %s274, %s288
      %p290 = scmp.eq.s32.totalorder %s33, 0
      %p291 = por %p289, %p290
      %s293 = sadd.s32 %s292, 1
      %p296 = scmp.eq.s32.totalorder %s27, 1
      %p297 = scmp.ne.s32.totalorder %s292, %s294
      %p298 = scmp.eq.s32.totalorder %s27, 0
      %p299 = por %p297, %p298
      %p300 = scmp.ne.s32.totalorder %s292, %s294
      %p301 = scmp.eq.s32.totalorder %s32, 1
      %p302 = por %p300, %p301
      %p303 = scmp.ne.s32.totalorder %s294, %s295
      %p304 = scmp.eq.s32.totalorder %s32, 0
      %p305 = por %p303, %p304
      %p306 = scmp.ne.s32.totalorder %s294, %s295
      %p307 = scmp.eq.s32.totalorder %s33, 1
      %p308 = por %p306, %p307
      %p310 = scmp.ne.s32.totalorder %s295, %s309
      %p311 = scmp.eq.s32.totalorder %s33, 0
      %p312 = por %p310, %p311
      %s313 = ssub.s32 %s27, %s34
      %p314 = scmp.eq.s32.totalorder %s313, 0
      %s316 = sadd.s32 %s315, 1
      %s317 = scalar_select %p314, %s315, %s316
      %p320 = pneg %p314
      %p321 = scmp.eq.s32.totalorder %s27, 1
      %p322 = por %p320, %p321
      %p323 = scmp.ne.s32.totalorder %s315, %s318
      %p324 = scmp.eq.s32.totalorder %s27, 0
      %p325 = por %p323, %p324
      %p326 = scmp.ne.s32.totalorder %s315, %s318
      %p327 = scmp.eq.s32.totalorder %s32, 1
      %p328 = por %p326, %p327
      %p329 = scmp.ne.s32.totalorder %s318, %s319
      %p330 = scmp.eq.s32.totalorder %s32, 0
      %p331 = por %p329, %p330
      %p332 = scmp.ne.s32.totalorder %s318, %s319
      %p333 = scmp.eq.s32.totalorder %s33, 1
      %p334 = por %p332, %p333
      %p336 = scmp.ne.s32.totalorder %s319, %s335
      %p337 = scmp.eq.s32.totalorder %s33, 0
      %p338 = por %p336, %p337
      %p339 = scmp.le.s32.totalorder 1, %s27
      %p340 = scmp.lt.s32.totalorder %s27, 3
      %p341 = pnand %p339, %p340
      %p342 = pneg %p341
      // Predicated region
      $region9: #{pruned_saint_forward.2} parent=5 // pred_check
        _
      $region10: #{pruned_saint_forward.2} parent=5 // pred_check_branch
        %344 = sbr.rel (%p341) target = $region12
      $region11: #{pruned_saint_forward.2} parent=5 // pred_region
        %s345 = ssub.s32 %s27, 1
        // Predicated region
        $region13: #{pruned_saint_forward.2} parent=11 // pred_check
          %p346 = pneg %p74
        $region14: #{pruned_saint_forward.2} parent=11 // pred_check_branch
          %348 = sbr.rel (%p346) target = $region16
        $region15: #{pruned_saint_forward.2} parent=11 // pred_region
          %350 = vsyncadd [#allocation5], 0
          %s352 = sshll.u32 %s1, 4
          %s353 = int_to_ptr.hbm [resolvable:$true] %s352
          %s354 = sshll.u32 [#allocation4], 4
          %s355 = int_to_ptr.vmem [resolvable:$true] %s354
          %357 = dma.hbm_to_vmem [thread:$0]  %s353, 16, %s355, [#allocation5]
        $region16: #{pruned_saint_forward.2} parent=11 // pred_fallthru
          _
        // Predicated region
        $region17: #{pruned_saint_forward.2} parent=11 // pred_check
          %p358 = pneg %p95
        $region18: #{pruned_saint_forward.2} parent=11 // pred_check_branch
          %360 = sbr.rel (%p358) target = $region20
        $region19: #{pruned_saint_forward.2} parent=11 // pred_region
          %362 = vsyncadd [#allocation5], 0
          %s364 = sshll.u32 %s2, 4
          %s365 = int_to_ptr.hbm [resolvable:$true] %s364
          %s366 = sshll.u32 [#allocation6], 4
          %s367 = int_to_ptr.vmem [resolvable:$true] %s366
          %369 = dma.hbm_to_vmem [thread:$0]  %s365, 16, %s367, [#allocation5]
        $region20: #{pruned_saint_forward.2} parent=11 // pred_fallthru
          _
        // Predicated region
        $region21: #{pruned_saint_forward.2} parent=11 // pred_check
          %p370 = pneg %p116
        $region22: #{pruned_saint_forward.2} parent=11 // pred_check_branch
          %372 = sbr.rel (%p370) target = $region24
        $region23: #{pruned_saint_forward.2} parent=11 // pred_region
          %374 = vsyncadd [#allocation8], 0
          %s375 = sshll.u32 %s3, 4
          %s376 = int_to_ptr.hbm [resolvable:$true] %s375
          %s377 = sshll.u32 [#allocation7], 4
          %s378 = int_to_ptr.vmem [resolvable:$true] %s377
          %383 = dma.hbm_to_vmem [thread:$0]  %s376, 1024, %s378, [#allocation8], 256, 256, 16
        $region24: #{pruned_saint_forward.2} parent=11 // pred_fallthru
          _
        // Predicated region
        $region25: #{pruned_saint_forward.2} parent=11 // pred_check
          %p384 = pneg %p137
        $region26: #{pruned_saint_forward.2} parent=11 // pred_check_branch
          %386 = sbr.rel (%p384) target = $region28
        $region27: #{pruned_saint_forward.2} parent=11 // pred_region
          _
        $region28: #{pruned_saint_forward.2} parent=11 // pred_fallthru
          _
        // Predicated region
        $region29: #{pruned_saint_forward.2} parent=11 // pred_check
          %p387 = pneg %p158
        $region30: #{pruned_saint_forward.2} parent=11 // pred_check_branch
          %389 = sbr.rel (%p387) target = $region32
        $region31: #{pruned_saint_forward.2} parent=11 // pred_region
          %391 = vsyncadd [#allocation8], 0
          %s393 = sshll.u32 %s5, 4
          %s394 = int_to_ptr.hbm [resolvable:$true] %s393
          %s395 = sshll.u32 [#allocation9], 4
          %s396 = int_to_ptr.vmem [resolvable:$true] %s395
          %398 = dma.hbm_to_vmem [thread:$0]  %s394, 16, %s396, [#allocation8]
        $region32: #{pruned_saint_forward.2} parent=11 // pred_fallthru
          _
        // Predicated region
        $region33: #{pruned_saint_forward.2} parent=11 // pred_check
          %p399 = pneg %p179
        $region34: #{pruned_saint_forward.2} parent=11 // pred_check_branch
          %401 = sbr.rel (%p399) target = $region36
        $region35: #{pruned_saint_forward.2} parent=11 // pred_region
          %403 = vsyncadd [#allocation11], 0
          %s405 = sshll.u32 %s6, 4
          %s406 = int_to_ptr.hbm [resolvable:$true] %s405
          %s407 = sshll.u32 [#allocation10], 4
          %s408 = int_to_ptr.vmem [resolvable:$true] %s407
          %410 = dma.hbm_to_vmem [thread:$0]  %s406, 16, %s408, [#allocation11]
        $region36: #{pruned_saint_forward.2} parent=11 // pred_fallthru
          _
        // Predicated region
        $region37: #{pruned_saint_forward.2} parent=11 // pred_check
          %p411 = pneg %p200
        $region38: #{pruned_saint_forward.2} parent=11 // pred_check_branch
          %413 = sbr.rel (%p411) target = $region40
        $region39: #{pruned_saint_forward.2} parent=11 // pred_region
          %415 = vsyncadd [#allocation11], 0
          %s417 = sshll.u32 %s7, 4
          %s418 = int_to_ptr.hbm [resolvable:$true] %s417
          %s419 = sshll.u32 [#allocation12], 4
          %s420 = int_to_ptr.vmem [resolvable:$true] %s419
          %422 = dma.hbm_to_vmem [thread:$0]  %s418, 16, %s420, [#allocation11]
        $region40: #{pruned_saint_forward.2} parent=11 // pred_fallthru
          _
        // Predicated region
        $region41: #{pruned_saint_forward.2} parent=11 // pred_check
          %p423 = pneg %p221
        $region42: #{pruned_saint_forward.2} parent=11 // pred_check_branch
          %425 = sbr.rel (%p423) target = $region44
        $region43: #{pruned_saint_forward.2} parent=11 // pred_region
          %427 = vsyncadd [#allocation14], 0
          %s428 = sshll.u32 %s8, 4
          %s429 = int_to_ptr.hbm [resolvable:$true] %s428
          %s430 = sshll.u32 [#allocation13], 4
          %s431 = int_to_ptr.vmem [resolvable:$true] %s430
          %436 = dma.hbm_to_vmem [thread:$0]  %s429, 1024, %s431, [#allocation14], 256, 256, 16
        $region44: #{pruned_saint_forward.2} parent=11 // pred_fallthru
          _
        // Predicated region
        $region45: #{pruned_saint_forward.2} parent=11 // pred_check
          %p437 = pneg %p242
        $region46: #{pruned_saint_forward.2} parent=11 // pred_check_branch
          %439 = sbr.rel (%p437) target = $region48
        $region47: #{pruned_saint_forward.2} parent=11 // pred_region
          %441 = vsyncadd [#allocation14], 0
          %s443 = sshll.u32 %s9, 4
          %s444 = int_to_ptr.hbm [resolvable:$true] %s443
          %s445 = sshll.u32 [#allocation15], 4
          %s446 = int_to_ptr.vmem [resolvable:$true] %s445
          %448 = dma.hbm_to_vmem [thread:$0]  %s444, 32, %s446, [#allocation14]
        $region48: #{pruned_saint_forward.2} parent=11 // pred_fallthru
          _
        // Predicated region
        $region49: #{pruned_saint_forward.2} parent=11 // pred_check
          %p449 = pneg %p263
        $region50: #{pruned_saint_forward.2} parent=11 // pred_check_branch
          %451 = sbr.rel (%p449) target = $region52
        $region51: #{pruned_saint_forward.2} parent=11 // pred_region
          _
        $region52: #{pruned_saint_forward.2} parent=11 // pred_fallthru
          _
        // Predicated region
        $region53: #{pruned_saint_forward.2} parent=11 // pred_check
          %p452 = pneg %p284
        $region54: #{pruned_saint_forward.2} parent=11 // pred_check_branch
          %454 = sbr.rel (%p452) target = $region56
        $region55: #{pruned_saint_forward.2} parent=11 // pred_region
          %456 = vsyncadd [#allocation17], 0
          %s458 = sshll.u32 %s11, 4
          %s459 = int_to_ptr.hbm [resolvable:$true] %s458
          %s460 = sshll.u32 [#allocation16], 4
          %s461 = int_to_ptr.vmem [resolvable:$true] %s460
          %463 = dma.hbm_to_vmem [thread:$0]  %s459, 16, %s461, [#allocation17]
        $region56: #{pruned_saint_forward.2} parent=11 // pred_fallthru
          _
        // Predicated region
        $region57: #{pruned_saint_forward.2} parent=11 // pred_check
          %p464 = pneg %p305
        $region58: #{pruned_saint_forward.2} parent=11 // pred_check_branch
          %466 = sbr.rel (%p464) target = $region60
        $region59: #{pruned_saint_forward.2} parent=11 // pred_region
          %468 = vsyncadd [#allocation17], 0
          %s470 = sshll.u32 %s12, 4
          %s471 = int_to_ptr.hbm [resolvable:$true] %s470
          %s472 = sshll.u32 [#allocation18], 4
          %s473 = int_to_ptr.vmem [resolvable:$true] %s472
          %475 = dma.hbm_to_vmem [thread:$0]  %s471, 16, %s473, [#allocation17]
        $region60: #{pruned_saint_forward.2} parent=11 // pred_fallthru
          _
      $region12: #{pruned_saint_forward.2} parent=5 // pred_fallthru
        _
      %p476 = scmp.lt.s32.totalorder %s27, 2
      // Predicated region
      $region61: #{pruned_saint_forward.2} parent=5 // pred_check
        %p477 = pneg %p476
      $region62: #{pruned_saint_forward.2} parent=5 // pred_check_branch
        %479 = sbr.rel (%p477) target = $region64
      $region63: #{pruned_saint_forward.2} parent=5 // pred_region
        // Predicated region
        $region65: #{pruned_saint_forward.2} parent=63 // pred_check
          %p480 = pneg %p47
        $region66: #{pruned_saint_forward.2} parent=63 // pred_check_branch
          %482 = sbr.rel (%p480) target = $region68
        $region67: #{pruned_saint_forward.2} parent=63 // pred_region
          %s483 = sand.u32 %s37, 1
          %s484 = scalar_lea.sflag [#allocation3], %s483
          %s485 = sand.u32 %s37, 1
          %s486 = smul.addr %s485, 8
          %s487 = scalar_lea.vmem [#allocation2], %s486
          %489 = vsyncadd %s484, 0
          %s490 = smul.addr %s27, 8
          %s491 = scalar_lea.hbm %s0, %s490
          %s493 = sshll.u32 %s491, 4
          %s494 = int_to_ptr.hbm [resolvable:$true] %s493
          %s495 = sshll.u32 %s487, 4
          %s496 = int_to_ptr.vmem [resolvable:$true] %s495
          %498 = dma.hbm_to_vmem [thread:$0]  %s494, 128, %s496, %s484
        $region68: #{pruned_saint_forward.2} parent=63 // pred_fallthru
          _
      $region64: #{pruned_saint_forward.2} parent=5 // pred_fallthru
        _
      %p499 = scmp.le.s32.totalorder 1, %s27
      %p500 = scmp.lt.s32.totalorder %s27, 3
      %p501 = pnand %p499, %p500
      %p502 = pneg %p501
      // Predicated region
      $region69: #{pruned_saint_forward.2} parent=5 // pred_check
        _
      $region70: #{pruned_saint_forward.2} parent=5 // pred_check_branch
        %504 = sbr.rel (%p501) target = $region72
      $region71: #{pruned_saint_forward.2} parent=5 // pred_region
        %s505 = ssub.s32 %s27, 1
        %s506 = sand.u32 %s40, 1
        %s507 = scalar_lea.sflag [#allocation3], %s506
        %s508 = sand.u32 %s40, 1
        %s509 = smul.addr %s508, 8
        %s510 = scalar_lea.vmem [#allocation2], %s509
        // Predicated region
        $region73: #{pruned_saint_forward.2} parent=71 // pred_check
          %p511 = pneg %p53
        $region74: #{pruned_saint_forward.2} parent=71 // pred_check_branch
          %513 = sbr.rel (%p511) target = $region76
        $region75: #{pruned_saint_forward.2} parent=71 // pred_region
          %515 = dma.done %s507, 128
        $region76: #{pruned_saint_forward.2} parent=71 // pred_fallthru
          _
        // Predicated region
        $region77: #{pruned_saint_forward.2} parent=71 // pred_check
          %p516 = pneg %p74
        $region78: #{pruned_saint_forward.2} parent=71 // pred_check_branch
          %518 = sbr.rel (%p516) target = $region80
        $region79: #{pruned_saint_forward.2} parent=71 // pred_region
          %520 = dma.done [#allocation5], 16
        $region80: #{pruned_saint_forward.2} parent=71 // pred_fallthru
          _
        // Predicated region
        $region81: #{pruned_saint_forward.2} parent=71 // pred_check
          %p521 = pneg %p95
        $region82: #{pruned_saint_forward.2} parent=71 // pred_check_branch
          %523 = sbr.rel (%p521) target = $region84
        $region83: #{pruned_saint_forward.2} parent=71 // pred_region
          %525 = dma.done [#allocation5], 16
        $region84: #{pruned_saint_forward.2} parent=71 // pred_fallthru
          _
        // Predicated region
        $region85: #{pruned_saint_forward.2} parent=71 // pred_check
          %p526 = pneg %p116
        $region86: #{pruned_saint_forward.2} parent=71 // pred_check_branch
          %528 = sbr.rel (%p526) target = $region88
        $region87: #{pruned_saint_forward.2} parent=71 // pred_region
          %530 = dma.done [#allocation8], 1024
        $region88: #{pruned_saint_forward.2} parent=71 // pred_fallthru
          _
        // Predicated region
        $region89: #{pruned_saint_forward.2} parent=71 // pred_check
          %p531 = pneg %p158
        $region90: #{pruned_saint_forward.2} parent=71 // pred_check_branch
          %533 = sbr.rel (%p531) target = $region92
        $region91: #{pruned_saint_forward.2} parent=71 // pred_region
          %535 = dma.done [#allocation8], 16
        $region92: #{pruned_saint_forward.2} parent=71 // pred_fallthru
          _
        // Predicated region
        $region93: #{pruned_saint_forward.2} parent=71 // pred_check
          %p536 = pneg %p179
        $region94: #{pruned_saint_forward.2} parent=71 // pred_check_branch
          %538 = sbr.rel (%p536) target = $region96
        $region95: #{pruned_saint_forward.2} parent=71 // pred_region
          %540 = dma.done [#allocation11], 16
        $region96: #{pruned_saint_forward.2} parent=71 // pred_fallthru
          _
        // Predicated region
        $region97: #{pruned_saint_forward.2} parent=71 // pred_check
          %p541 = pneg %p200
        $region98: #{pruned_saint_forward.2} parent=71 // pred_check_branch
          %543 = sbr.rel (%p541) target = $region100
        $region99: #{pruned_saint_forward.2} parent=71 // pred_region
          %545 = dma.done [#allocation11], 16
        $region100: #{pruned_saint_forward.2} parent=71 // pred_fallthru
          _
        // Predicated region
        $region101: #{pruned_saint_forward.2} parent=71 // pred_check
          %p546 = pneg %p221
        $region102: #{pruned_saint_forward.2} parent=71 // pred_check_branch
          %548 = sbr.rel (%p546) target = $region104
        $region103: #{pruned_saint_forward.2} parent=71 // pred_region
          %550 = dma.done [#allocation14], 1024
        $region104: #{pruned_saint_forward.2} parent=71 // pred_fallthru
          _
        // Predicated region
        $region105: #{pruned_saint_forward.2} parent=71 // pred_check
          %p551 = pneg %p242
        $region106: #{pruned_saint_forward.2} parent=71 // pred_check_branch
          %553 = sbr.rel (%p551) target = $region108
        $region107: #{pruned_saint_forward.2} parent=71 // pred_region
          %555 = dma.done [#allocation14], 32
        $region108: #{pruned_saint_forward.2} parent=71 // pred_fallthru
          _
        // Predicated region
        $region109: #{pruned_saint_forward.2} parent=71 // pred_check
          %p556 = pneg %p284
        $region110: #{pruned_saint_forward.2} parent=71 // pred_check_branch
          %558 = sbr.rel (%p556) target = $region112
        $region111: #{pruned_saint_forward.2} parent=71 // pred_region
          %560 = dma.done [#allocation17], 16
        $region112: #{pruned_saint_forward.2} parent=71 // pred_fallthru
          _
        // Predicated region
        $region113: #{pruned_saint_forward.2} parent=71 // pred_check
          %p561 = pneg %p305
        $region114: #{pruned_saint_forward.2} parent=71 // pred_check_branch
          %563 = sbr.rel (%p561) target = $region116
        $region115: #{pruned_saint_forward.2} parent=71 // pred_region
          %565 = dma.done [#allocation17], 16
        $region116: #{pruned_saint_forward.2} parent=71 // pred_fallthru
          _
        %s566 = sand.u32 %s40, 1
        %s567 = scalar_lea.sflag [#allocation3], %s566
        %s568 = sand.u32 %s40, 1
        %s569 = smul.addr %s568, 8
        %s570 = scalar_lea.vmem [#allocation2], %s569
        %p571 = pneg %p53
        %p572 = pneg %p50
        %p573 = pneg %p74
        %p574 = pneg %p71
        %p575 = pneg %p95
        %p576 = pneg %p92
        %p577 = pneg %p116
        %p578 = pneg %p113
        %p579 = pneg %p137
        %p580 = pneg %p134
        %p581 = pneg %p158
        %p582 = pneg %p155
        %p583 = pneg %p179
        %p584 = pneg %p176
        %p585 = pneg %p200
        %p586 = pneg %p197
        %p587 = pneg %p221
        %p588 = pneg %p218
        %p589 = pneg %p242
        %p590 = pneg %p239
        %p591 = pneg %p263
        %p592 = pneg %p260
        %p593 = pneg %p284
        %p594 = pneg %p281
        %p595 = pneg %p305
        %p596 = pneg %p302
        %p597 = pneg %p331
        %p598 = pneg %p328
        %p599 = scmp.lt.s32.totalorder %s32, 1
        %s600 = scalar_select %p599, %s32, 1
        %s601 = smul.addr %s600, 8
        %s602 = scalar_lea.vmem %s13, %s601
        %p603 = scmp.lt.s32.totalorder %s32, 1
        %s604 = scalar_select %p603, %s32, 1
        %s605 = smul.addr %s604, 8
        %s606 = scalar_lea.vmem %s13, %s605
        %v607 = vld [vmem:[%s510] sm:$0xff]
        %v608 = vld [vmem:[#allocation4] sm:$0x1]
        %v609 = vld [vmem:[#allocation6] sm:$0x1]
        %v610 = vld [vmem:[#allocation7] sm:$0xff]
        %v611 = vld [vmem:[#allocation7 + $0x8] sm:$0xff]
        %v612 = vld [vmem:[#allocation7 + $0x10] sm:$0xff]
        %v613 = vld [vmem:[#allocation7 + $0x18] sm:$0xff]
        %v614 = vld [vmem:[#allocation7 + $0x20] sm:$0xff]
        %v615 = vld [vmem:[#allocation7 + $0x28] sm:$0xff]
        %v616 = vld [vmem:[#allocation7 + $0x30] sm:$0xff]
        %v617 = vld [vmem:[#allocation7 + $0x38] sm:$0xff]
        %v618 = vld [vmem:[%s4] sm:$0xff]
        %v619 = vld [vmem:[%s4 + $0x8] sm:$0xff]
        %v620 = vld [vmem:[%s4 + $0x10] sm:$0xff]
        %v621 = vld [vmem:[%s4 + $0x18] sm:$0xff]
        %v622 = vld [vmem:[%s4 + $0x20] sm:$0xff]
        %v623 = vld [vmem:[%s4 + $0x28] sm:$0xff]
        %v624 = vld [vmem:[%s4 + $0x30] sm:$0xff]
        %v625 = vld [vmem:[%s4 + $0x38] sm:$0xff]
        %v626 = vld [vmem:[#allocation9] sm:$0x1]
        %vm627 = vcmask 261120
        %v628 = vsel %vm627, %v607, 0.0
        %629 = vadd.xlane.f32.xlu0 %v628
        %v630 = vpop.xlane.xlu0 %629
        %v631 = vrcp.pop 32.0
        %v632 = vmul.f32 32.0, %v631
        %v633 = vsub.f32 1.0, %v632
        %v634 = vmul.f32 %v631, %v633
        %v635 = vadd.f32 %v631, %v634
        %vm636 = vweird.f32 %v631
        %v637 = vsel %vm636, %v631, %v635
        %v638 = vmul.f32 %v630, %v637
        %v639 = vsub.f32 %v607, %v638
        %v640 = vmul.f32 %v639, %v639
        %v641 = vsel %vm627, %v640, 0.0
        %642 = vadd.xlane.f32.xlu0 %v641
        %v643 = vpop.xlane.xlu0 %642
        %v644 = vmul.f32 %v643, %v637
        %v645 = vadd.f32 %v644, 1e-05
        %v646 = vrsqrt.pop %v645
        %v647 = vmul.f32 %v646, %v645
        %v648 = vmul.f32 %v647, %v646
        %v649 = vmul.f32 0.5, %v648
        %v650 = vsub.f32 1.5, %v649
        %v651 = vmul.f32 %v646, %v650
        %vm652 = vweird.f32 %v645
        %vm653 = vweird.f32 %v646
        %vm654 = vmor %vm652, %vm653
        %v655 = vsel %vm654, %v646, %v651
        %v656 = vmul.f32 %v639, %v655
        %v658 = vperm.slane %v608, 0
        %v660 = vmul.f32 %v656, %v658
        %v662 = vperm.slane %v609, 0
        %v664 = vadd.f32 %v660, %v662
        %v666 = vsel %vm627, %v664, 0
        %668 = vmatpush.msra.mxu0 0.0
        %669 = vmatpush.msra.mxu0 0.0
        %670 = vmatpush.msra.mxu0 0.0
        %671 = vmatpush.msra.mxu0 0.0
        %672 = vmatpush.msra.mxu0 0.0
        %673 = vmatpush.msra.mxu0 0.0
        %674 = vmatpush.msra.mxu0 0.0
        %675 = vmatpush.msra.mxu0 0.0
        %676 = vmatpush.msra.mxu0 0.0
        %677 = vmatpush.msra.mxu0 0.0
        %678 = vmatpush.msra.mxu0 0.0
        %679 = vmatpush.msra.mxu0 0.0
        %680 = vmatpush.msra.mxu0 %v616
        %681 = vmatpush.msra.mxu0 %v614
        %682 = vmatpush.msra.mxu0 %v612
        %683 = vmatpush.msra.mxu0 %v610
        %684 = vmatmul.f32.gmra.mxu0 %v666
        %v685 = vpop.f32.mrf.mxu0
        %v686 = vadd.f32 0.0, %v685
        %687 = vdwg.mxu0
        %688 = vmatpush.msra.mxu0 0.0
        %689 = vmatpush.msra.mxu0 0.0
        %690 = vmatpush.msra.mxu0 0.0
        %691 = vmatpush.msra.mxu0 0.0
        %692 = vmatpush.msra.mxu0 0.0
        %693 = vmatpush.msra.mxu0 0.0
        %694 = vmatpush.msra.mxu0 0.0
        %695 = vmatpush.msra.mxu0 0.0
        %696 = vmatpush.msra.mxu0 0.0
        %697 = vmatpush.msra.mxu0 0.0
        %698 = vmatpush.msra.mxu0 0.0
        %699 = vmatpush.msra.mxu0 0.0
        %700 = vmatpush.msra.mxu0 %v617
        %701 = vmatpush.msra.mxu0 %v615
        %702 = vmatpush.msra.mxu0 %v613
        %703 = vmatpush.msra.mxu0 %v611
        %704 = vmatmul.f32.gmra.mxu0 %v666
        %v705 = vpop.f32.mrf.mxu0
        %v706 = vadd.f32 0.0, %v705
        %707 = vdwg.mxu0
        %709 = vrot.lane.b32.xlu0 %v686, 64
        %v710 = vpop.permute.xlu0 %709
        %vm711 = vcmask 130048
        %v712 = vsel %vm711, %v686, 0
        %v714 = vsel %vm711, %v710, 0
        %716 = vmatpush.xpose.msra.mxu0 0.0
        %717 = vmatpush.xpose.msra.mxu0 0.0
        %718 = vmatpush.xpose.msra.mxu0 0.0
        %719 = vmatpush.xpose.msra.mxu0 0.0
        %720 = vmatpush.xpose.msra.mxu0 0.0
        %721 = vmatpush.xpose.msra.mxu0 0.0
        %722 = vmatpush.xpose.msra.mxu0 0.0
        %723 = vmatpush.xpose.msra.mxu0 0.0
        %724 = vmatpush.xpose.msra.mxu0 0.0
        %725 = vmatpush.xpose.msra.mxu0 0.0
        %726 = vmatpush.xpose.msra.mxu0 0.0
        %727 = vmatpush.xpose.msra.mxu0 0.0
        %728 = vmatpush.xpose.msra.mxu0 0.0
        %729 = vmatpush.xpose.msra.mxu0 0.0
        %730 = vmatpush.xpose.msra.mxu0 0.0
        %731 = vmatpush.xpose.msra.mxu0 %v714
        %732 = vmatmul.f32.gmra.mxu0 %v712
        %v733 = vpop.f32.mrf.mxu0
        %v734 = vadd.f32 0.0, %v733
        %735 = vdwg.mxu0
        %v736 = vmul.f32 %v734, 0.25
        %vm737 = vcmask 64512
        %v738 = vsel %vm737, %v736, -inf
        %739 = vmax.xlane.f32.xlu0 %v738
        %v740 = vpop.xlane.xlu0 %739
        %v741 = vsub.f32 %v736, %v740
        %v742 = vmul.f32 %v741, 1.442695
        %v743 = vpow.pop %v742
        %v744 = vsel %vm737, %v743, 0.0
        %745 = vadd.xlane.f32.xlu0 %v744
        %v746 = vpop.xlane.xlu0 %745
        %v747 = vrcp.pop %v746
        %v748 = vmul.f32 %v746, %v747
        %v749 = vsub.f32 1.0, %v748
        %v750 = vmul.f32 %v747, %v749
        %v751 = vadd.f32 %v747, %v750
        %vm752 = vweird.f32 %v746
        %vm753 = vweird.f32 %v747
        %vm754 = vmor %vm752, %vm753
        %v755 = vsel %vm754, %v747, %v751
        %v756 = vand.u32 2147483647, %v746
        %vm757 = vcmp.eq.f32.partialorder %v756, 8.507059e+37
        %v758 = vand.u32 %v746, 2147483648
        %v759 = vor.u32 1.1754944e-38, %v758
        %v760 = vsel %vm757, %v759, %v755
        %v761 = vmul.f32 %v743, %v760
        %v763 = vsel %vm737, %v761, 0
        %765 = vmatpush.msra.mxu0 0.0
        %766 = vmatpush.msra.mxu0 0.0
        %767 = vmatpush.msra.mxu0 0.0
        %768 = vmatpush.msra.mxu0 0.0
        %769 = vmatpush.msra.mxu0 0.0
        %770 = vmatpush.msra.mxu0 0.0
        %771 = vmatpush.msra.mxu0 0.0
        %772 = vmatpush.msra.mxu0 0.0
        %773 = vmatpush.msra.mxu0 0.0
        %774 = vmatpush.msra.mxu0 0.0
        %775 = vmatpush.msra.mxu0 0.0
        %776 = vmatpush.msra.mxu0 0.0
        %777 = vmatpush.msra.mxu0 0.0
        %778 = vmatpush.msra.mxu0 0.0
        %779 = vmatpush.msra.mxu0 0.0
        %780 = vmatpush.msra.mxu0 %v706
        %781 = vmatmul.f32.gmra.mxu0 %v763
        %v782 = vpop.f32.mrf.mxu0
        %v783 = vadd.f32 0.0, %v782
        %784 = vdwg.mxu0
        %785 = vrot.lane.b32.xlu0 %v686, 112
        %v786 = vpop.permute.xlu0 %785
        %787 = vrot.lane.b32.xlu0 %v686, 48
        %v788 = vpop.permute.xlu0 %787
        %v789 = vsel %vm711, %v786, 0
        %v791 = vsel %vm711, %v788, 0
        %793 = vmatpush.xpose.msra.mxu0 0.0
        %794 = vmatpush.xpose.msra.mxu0 0.0
        %795 = vmatpush.xpose.msra.mxu0 0.0
        %796 = vmatpush.xpose.msra.mxu0 0.0
        %797 = vmatpush.xpose.msra.mxu0 0.0
        %798 = vmatpush.xpose.msra.mxu0 0.0
        %799 = vmatpush.xpose.msra.mxu0 0.0
        %800 = vmatpush.xpose.msra.mxu0 0.0
        %801 = vmatpush.xpose.msra.mxu0 0.0
        %802 = vmatpush.xpose.msra.mxu0 0.0
        %803 = vmatpush.xpose.msra.mxu0 0.0
        %804 = vmatpush.xpose.msra.mxu0 0.0
        %805 = vmatpush.xpose.msra.mxu0 0.0
        %806 = vmatpush.xpose.msra.mxu0 0.0
        %807 = vmatpush.xpose.msra.mxu0 0.0
        %808 = vmatpush.xpose.msra.mxu0 %v791
        %809 = vmatmul.f32.gmra.mxu0 %v789
        %v810 = vpop.f32.mrf.mxu0
        %v811 = vadd.f32 0.0, %v810
        %812 = vdwg.mxu0
        %v813 = vmul.f32 %v811, 0.25
        %v814 = vsel %vm737, %v813, -inf
        %815 = vmax.xlane.f32.xlu0 %v814
        %v816 = vpop.xlane.xlu0 %815
        %v817 = vsub.f32 %v813, %v816
        %v818 = vmul.f32 %v817, 1.442695
        %v819 = vpow.pop %v818
        %v820 = vsel %vm737, %v819, 0.0
        %821 = vadd.xlane.f32.xlu0 %v820
        %v822 = vpop.xlane.xlu0 %821
        %v823 = vrcp.pop %v822
        %v824 = vmul.f32 %v822, %v823
        %v825 = vsub.f32 1.0, %v824
        %v826 = vmul.f32 %v823, %v825
        %v827 = vadd.f32 %v823, %v826
        %vm828 = vweird.f32 %v822
        %vm829 = vweird.f32 %v823
        %vm830 = vmor %vm828, %vm829
        %v831 = vsel %vm830, %v823, %v827
        %v832 = vand.u32 2147483647, %v822
        %vm833 = vcmp.eq.f32.partialorder %v832, 8.507059e+37
        %v834 = vand.u32 %v822, 2147483648
        %v835 = vor.u32 1.1754944e-38, %v834
        %v836 = vsel %vm833, %v835, %v831
        %v837 = vmul.f32 %v819, %v836
        %839 = vrot.lane.b32.xlu0 %v706, 112
        %v840 = vpop.permute.xlu0 %839
        %v843 = vsel %vm737, %v837, 0
        %845 = vmatpush.msra.mxu0 0.0
        %846 = vmatpush.msra.mxu0 0.0
        %847 = vmatpush.msra.mxu0 0.0
        %848 = vmatpush.msra.mxu0 0.0
        %849 = vmatpush.msra.mxu0 0.0
        %850 = vmatpush.msra.mxu0 0.0
        %851 = vmatpush.msra.mxu0 0.0
        %852 = vmatpush.msra.mxu0 0.0
        %853 = vmatpush.msra.mxu0 0.0
        %854 = vmatpush.msra.mxu0 0.0
        %855 = vmatpush.msra.mxu0 0.0
        %856 = vmatpush.msra.mxu0 0.0
        %857 = vmatpush.msra.mxu0 0.0
        %858 = vmatpush.msra.mxu0 0.0
        %859 = vmatpush.msra.mxu0 0.0
        %860 = vmatpush.msra.mxu0 %v840
        %861 = vmatmul.f32.gmra.mxu0 %v843
        %v862 = vpop.f32.mrf.mxu0
        %v863 = vadd.f32 0.0, %v862
        %864 = vdwg.mxu0
        %v866 = vsel %vm711, %v863, 0
        %868 = vmatpush.msra.mxu0 0.0
        %869 = vmatpush.msra.mxu0 0.0
        %870 = vmatpush.msra.mxu0 0.0
        %871 = vmatpush.msra.mxu0 0.0
        %872 = vmatpush.msra.mxu0 0.0
        %873 = vmatpush.msra.mxu0 0.0
        %874 = vmatpush.msra.mxu0 0.0
        %875 = vmatpush.msra.mxu0 0.0
        %876 = vmatpush.msra.mxu0 0.0
        %877 = vmatpush.msra.mxu0 0.0
        %878 = vmatpush.msra.mxu0 0.0
        %879 = vmatpush.msra.mxu0 0.0
        %880 = vmatpush.msra.mxu0 0.0
        %881 = vmatpush.msra.mxu0 0.0
        %882 = vmatpush.msra.mxu0 %v621
        %883 = vmatpush.msra.mxu0 %v620
        %884 = vmatmul.f32.gmra.mxu0 %v866
        %v885 = vpop.f32.mrf.mxu0
        %v886 = vadd.f32 0.0, %v885
        %887 = vdwg.mxu0
        %v889 = vsel %vm711, %v783, 0
        %891 = vmatpush.msra.mxu0 0.0
        %892 = vmatpush.msra.mxu0 0.0
        %893 = vmatpush.msra.mxu0 0.0
        %894 = vmatpush.msra.mxu0 0.0
        %895 = vmatpush.msra.mxu0 0.0
        %896 = vmatpush.msra.mxu0 0.0
        %897 = vmatpush.msra.mxu0 0.0
        %898 = vmatpush.msra.mxu0 0.0
        %899 = vmatpush.msra.mxu0 0.0
        %900 = vmatpush.msra.mxu0 0.0
        %901 = vmatpush.msra.mxu0 0.0
        %902 = vmatpush.msra.mxu0 0.0
        %903 = vmatpush.msra.mxu0 0.0
        %904 = vmatpush.msra.mxu0 0.0
        %905 = vmatpush.msra.mxu0 %v619
        %906 = vmatpush.msra.mxu0 %v618
        %907 = vmatmul.f32.gmra.mxu0 %v889
        %v908 = vpop.f32.mrf.mxu0
        %v909 = vadd.f32 %v886, %v908
        %910 = vdwg.mxu0
        %911 = vrot.lane.b32.xlu0 %v686, 96
        %v912 = vpop.permute.xlu0 %911
        %913 = vrot.lane.b32.xlu0 %v686, 32
        %v914 = vpop.permute.xlu0 %913
        %v915 = vsel %vm711, %v912, 0
        %v917 = vsel %vm711, %v914, 0
        %919 = vmatpush.xpose.msra.mxu0 0.0
        %920 = vmatpush.xpose.msra.mxu0 0.0
        %921 = vmatpush.xpose.msra.mxu0 0.0
        %922 = vmatpush.xpose.msra.mxu0 0.0
        %923 = vmatpush.xpose.msra.mxu0 0.0
        %924 = vmatpush.xpose.msra.mxu0 0.0
        %925 = vmatpush.xpose.msra.mxu0 0.0
        %926 = vmatpush.xpose.msra.mxu0 0.0
        %927 = vmatpush.xpose.msra.mxu0 0.0
        %928 = vmatpush.xpose.msra.mxu0 0.0
        %929 = vmatpush.xpose.msra.mxu0 0.0
        %930 = vmatpush.xpose.msra.mxu0 0.0
        %931 = vmatpush.xpose.msra.mxu0 0.0
        %932 = vmatpush.xpose.msra.mxu0 0.0
        %933 = vmatpush.xpose.msra.mxu0 0.0
        %934 = vmatpush.xpose.msra.mxu0 %v917
        %935 = vmatmul.f32.gmra.mxu0 %v915
        %v936 = vpop.f32.mrf.mxu0
        %v937 = vadd.f32 0.0, %v936
        %938 = vdwg.mxu0
        %v939 = vmul.f32 %v937, 0.25
        %v940 = vsel %vm737, %v939, -inf
        %941 = vmax.xlane.f32.xlu0 %v940
        %v942 = vpop.xlane.xlu0 %941
        %v943 = vsub.f32 %v939, %v942
        %v944 = vmul.f32 %v943, 1.442695
        %v945 = vpow.pop %v944
        %v946 = vsel %vm737, %v945, 0.0
        %947 = vadd.xlane.f32.xlu0 %v946
        %v948 = vpop.xlane.xlu0 %947
        %v949 = vrcp.pop %v948
        %v950 = vmul.f32 %v948, %v949
        %v951 = vsub.f32 1.0, %v950
        %v952 = vmul.f32 %v949, %v951
        %v953 = vadd.f32 %v949, %v952
        %vm954 = vweird.f32 %v948
        %vm955 = vweird.f32 %v949
        %vm956 = vmor %vm954, %vm955
        %v957 = vsel %vm956, %v949, %v953
        %v958 = vand.u32 2147483647, %v948
        %vm959 = vcmp.eq.f32.partialorder %v958, 8.507059e+37
        %v960 = vand.u32 %v948, 2147483648
        %v961 = vor.u32 1.1754944e-38, %v960
        %v962 = vsel %vm959, %v961, %v957
        %v963 = vmul.f32 %v945, %v962
        %964 = vrot.lane.b32.xlu0 %v706, 96
        %v965 = vpop.permute.xlu0 %964
        %v968 = vsel %vm737, %v963, 0
        %970 = vmatpush.msra.mxu0 0.0
        %971 = vmatpush.msra.mxu0 0.0
        %972 = vmatpush.msra.mxu0 0.0
        %973 = vmatpush.msra.mxu0 0.0
        %974 = vmatpush.msra.mxu0 0.0
        %975 = vmatpush.msra.mxu0 0.0
        %976 = vmatpush.msra.mxu0 0.0
        %977 = vmatpush.msra.mxu0 0.0
        %978 = vmatpush.msra.mxu0 0.0
        %979 = vmatpush.msra.mxu0 0.0
        %980 = vmatpush.msra.mxu0 0.0
        %981 = vmatpush.msra.mxu0 0.0
        %982 = vmatpush.msra.mxu0 0.0
        %983 = vmatpush.msra.mxu0 0.0
        %984 = vmatpush.msra.mxu0 0.0
        %985 = vmatpush.msra.mxu0 %v965
        %986 = vmatmul.f32.gmra.mxu0 %v968
        %v987 = vpop.f32.mrf.mxu0
        %v988 = vadd.f32 0.0, %v987
        %989 = vdwg.mxu0
        %v991 = vsel %vm711, %v988, 0
        %993 = vmatpush.msra.mxu0 0.0
        %994 = vmatpush.msra.mxu0 0.0
        %995 = vmatpush.msra.mxu0 0.0
        %996 = vmatpush.msra.mxu0 0.0
        %997 = vmatpush.msra.mxu0 0.0
        %998 = vmatpush.msra.mxu0 0.0
        %999 = vmatpush.msra.mxu0 0.0
        %1000 = vmatpush.msra.mxu0 0.0
        %1001 = vmatpush.msra.mxu0 0.0
        %1002 = vmatpush.msra.mxu0 0.0
        %1003 = vmatpush.msra.mxu0 0.0
        %1004 = vmatpush.msra.mxu0 0.0
        %1005 = vmatpush.msra.mxu0 0.0
        %1006 = vmatpush.msra.mxu0 0.0
        %1007 = vmatpush.msra.mxu0 %v623
        %1008 = vmatpush.msra.mxu0 %v622
        %1009 = vmatmul.f32.gmra.mxu0 %v991
        %v1010 = vpop.f32.mrf.mxu0
        %v1011 = vadd.f32 0.0, %v1010
        %1012 = vdwg.mxu0
        %v1013 = vadd.f32 %v909, %v1011
        %1014 = vrot.lane.b32.xlu0 %v686, 80
        %v1015 = vpop.permute.xlu0 %1014
        %1016 = vrot.lane.b32.xlu0 %v686, 16
        %v1017 = vpop.permute.xlu0 %1016
        %v1018 = vsel %vm711, %v1015, 0
        %v1020 = vsel %vm711, %v1017, 0
        %1022 = vmatpush.xpose.msra.mxu0 0.0
        %1023 = vmatpush.xpose.msra.mxu0 0.0
        %1024 = vmatpush.xpose.msra.mxu0 0.0
        %1025 = vmatpush.xpose.msra.mxu0 0.0
        %1026 = vmatpush.xpose.msra.mxu0 0.0
        %1027 = vmatpush.xpose.msra.mxu0 0.0
        %1028 = vmatpush.xpose.msra.mxu0 0.0
        %1029 = vmatpush.xpose.msra.mxu0 0.0
        %1030 = vmatpush.xpose.msra.mxu0 0.0
        %1031 = vmatpush.xpose.msra.mxu0 0.0
        %1032 = vmatpush.xpose.msra.mxu0 0.0
        %1033 = vmatpush.xpose.msra.mxu0 0.0
        %1034 = vmatpush.xpose.msra.mxu0 0.0
        %1035 = vmatpush.xpose.msra.mxu0 0.0
        %1036 = vmatpush.xpose.msra.mxu0 0.0
        %1037 = vmatpush.xpose.msra.mxu0 %v1020
        %1038 = vmatmul.f32.gmra.mxu0 %v1018
        %v1039 = vpop.f32.mrf.mxu0
        %v1040 = vadd.f32 0.0, %v1039
        %1041 = vdwg.mxu0
        %v1042 = vmul.f32 %v1040, 0.25
        %v1043 = vsel %vm737, %v1042, -inf
        %1044 = vmax.xlane.f32.xlu0 %v1043
        %v1045 = vpop.xlane.xlu0 %1044
        %v1046 = vsub.f32 %v1042, %v1045
        %v1047 = vmul.f32 %v1046, 1.442695
        %v1048 = vpow.pop %v1047
        %v1049 = vsel %vm737, %v1048, 0.0
        %1050 = vadd.xlane.f32.xlu0 %v1049
        %v1051 = vpop.xlane.xlu0 %1050
        %v1052 = vrcp.pop %v1051
        %v1053 = vmul.f32 %v1051, %v1052
        %v1054 = vsub.f32 1.0, %v1053
        %v1055 = vmul.f32 %v1052, %v1054
        %v1056 = vadd.f32 %v1052, %v1055
        %vm1057 = vweird.f32 %v1051
        %vm1058 = vweird.f32 %v1052
        %vm1059 = vmor %vm1057, %vm1058
        %v1060 = vsel %vm1059, %v1052, %v1056
        %v1061 = vand.u32 2147483647, %v1051
        %vm1062 = vcmp.eq.f32.partialorder %v1061, 8.507059e+37
        %v1063 = vand.u32 %v1051, 2147483648
        %v1064 = vor.u32 1.1754944e-38, %v1063
        %v1065 = vsel %vm1062, %v1064, %v1060
        %v1066 = vmul.f32 %v1048, %v1065
        %1067 = vrot.lane.b32.xlu0 %v706, 80
        %v1068 = vpop.permute.xlu0 %1067
        %v1071 = vsel %vm737, %v1066, 0
        %1073 = vmatpush.msra.mxu0 0.0
        %1074 = vmatpush.msra.mxu0 0.0
        %1075 = vmatpush.msra.mxu0 0.0
        %1076 = vmatpush.msra.mxu0 0.0
        %1077 = vmatpush.msra.mxu0 0.0
        %1078 = vmatpush.msra.mxu0 0.0
        %1079 = vmatpush.msra.mxu0 0.0
        %1080 = vmatpush.msra.mxu0 0.0
        %1081 = vmatpush.msra.mxu0 0.0
        %1082 = vmatpush.msra.mxu0 0.0
        %1083 = vmatpush.msra.mxu0 0.0
        %1084 = vmatpush.msra.mxu0 0.0
        %1085 = vmatpush.msra.mxu0 0.0
        %1086 = vmatpush.msra.mxu0 0.0
        %1087 = vmatpush.msra.mxu0 0.0
        %1088 = vmatpush.msra.mxu0 %v1068
        %1089 = vmatmul.f32.gmra.mxu0 %v1071
        %v1090 = vpop.f32.mrf.mxu0
        %v1091 = vadd.f32 0.0, %v1090
        %1092 = vdwg.mxu0
        %v1094 = vsel %vm711, %v1091, 0
        %1096 = vmatpush.msra.mxu0 0.0
        %1097 = vmatpush.msra.mxu0 0.0
        %1098 = vmatpush.msra.mxu0 0.0
        %1099 = vmatpush.msra.mxu0 0.0
        %1100 = vmatpush.msra.mxu0 0.0
        %1101 = vmatpush.msra.mxu0 0.0
        %1102 = vmatpush.msra.mxu0 0.0
        %1103 = vmatpush.msra.mxu0 0.0
        %1104 = vmatpush.msra.mxu0 0.0
        %1105 = vmatpush.msra.mxu0 0.0
        %1106 = vmatpush.msra.mxu0 0.0
        %1107 = vmatpush.msra.mxu0 0.0
        %1108 = vmatpush.msra.mxu0 0.0
        %1109 = vmatpush.msra.mxu0 0.0
        %1110 = vmatpush.msra.mxu0 %v625
        %1111 = vmatpush.msra.mxu0 %v624
        %1112 = vmatmul.f32.gmra.mxu0 %v1094
        %v1113 = vpop.f32.mrf.mxu0
        %v1114 = vadd.f32 0.0, %v1113
        %1115 = vdwg.mxu0
        %v1116 = vadd.f32 %v1013, %v1114
        %v1118 = vperm.slane %v626, 0
        %v1120 = vadd.f32 %v1116, %v1118
        %v1121 = vadd.f32 %v1120, %v664
        %v1122 = vld [vmem:[#allocation10] sm:$0x1]
        %v1123 = vld [vmem:[#allocation12] sm:$0x1]
        %v1124 = vld [vmem:[#allocation13] sm:$0xff]
        %v1125 = vld [vmem:[#allocation13 + $0x8] sm:$0xff]
        %v1126 = vld [vmem:[#allocation13 + $0x10] sm:$0xff]
        %v1127 = vld [vmem:[#allocation13 + $0x18] sm:$0xff]
        %v1128 = vld [vmem:[#allocation13 + $0x20] sm:$0xff]
        %v1129 = vld [vmem:[#allocation13 + $0x28] sm:$0xff]
        %v1130 = vld [vmem:[#allocation13 + $0x30] sm:$0xff]
        %v1131 = vld [vmem:[#allocation13 + $0x38] sm:$0xff]
        %v1132 = vld [vmem:[#allocation15] sm:$0x3]
        %v1133 = vld [vmem:[%s10] sm:$0xff]
        %v1134 = vld [vmem:[%s10 + $0x8] sm:$0xff]
        %v1135 = vld [vmem:[%s10 + $0x10] sm:$0xff]
        %v1136 = vld [vmem:[%s10 + $0x18] sm:$0xff]
        %v1137 = vld [vmem:[%s10 + $0x20] sm:$0xff]
        %v1138 = vld [vmem:[%s10 + $0x28] sm:$0xff]
        %v1139 = vld [vmem:[%s10 + $0x30] sm:$0xff]
        %v1140 = vld [vmem:[%s10 + $0x38] sm:$0xff]
        %v1141 = vld [vmem:[%s10 + $0x40] sm:$0xff]
        %v1142 = vld [vmem:[%s10 + $0x48] sm:$0xff]
        %v1143 = vld [vmem:[%s10 + $0x50] sm:$0xff]
        %v1144 = vld [vmem:[%s10 + $0x58] sm:$0xff]
        %v1145 = vld [vmem:[%s10 + $0x60] sm:$0xff]
        %v1146 = vld [vmem:[%s10 + $0x68] sm:$0xff]
        %v1147 = vld [vmem:[%s10 + $0x70] sm:$0xff]
        %v1148 = vld [vmem:[%s10 + $0x78] sm:$0xff]
        %v1149 = vld [vmem:[#allocation16] sm:$0x1]
        %v1150 = vld [vmem:[#allocation18] sm:$0x1]
        %v1151 = vsel %vm627, %v1121, 0.0
        %1152 = vadd.xlane.f32.xlu0 %v1151
        %v1153 = vpop.xlane.xlu0 %1152
        %v1154 = vmul.f32 %v1153, %v637
        %v1155 = vsub.f32 %v1121, %v1154
        %v1156 = vmul.f32 %v1155, %v1155
        %v1157 = vsel %vm627, %v1156, 0.0
        %1158 = vadd.xlane.f32.xlu0 %v1157
        %v1159 = vpop.xlane.xlu0 %1158
        %v1160 = vmul.f32 %v1159, %v637
        %v1161 = vadd.f32 %v1160, 1e-05
        %v1162 = vrsqrt.pop %v1161
        %v1163 = vmul.f32 %v1162, %v1161
        %v1164 = vmul.f32 %v1163, %v1162
        %v1165 = vmul.f32 0.5, %v1164
        %v1166 = vsub.f32 1.5, %v1165
        %v1167 = vmul.f32 %v1162, %v1166
        %vm1168 = vweird.f32 %v1161
        %vm1169 = vweird.f32 %v1162
        %vm1170 = vmor %vm1168, %vm1169
        %v1171 = vsel %vm1170, %v1162, %v1167
        %v1172 = vmul.f32 %v1155, %v1171
        %v1174 = vperm.slane %v1122, 0
        %v1176 = vmul.f32 %v1172, %v1174
        %v1178 = vperm.slane %v1123, 0
        %v1180 = vadd.f32 %v1176, %v1178
        %v1182 = vperm.slane %v1132, 0
        %v1183 = vperm.slane %v1132, 1
        %v1187 = vsel %vm627, %v1180, 0
        %1189 = vmatpush.msra.mxu0 0.0
        %1190 = vmatpush.msra.mxu0 0.0
        %1191 = vmatpush.msra.mxu0 0.0
        %1192 = vmatpush.msra.mxu0 0.0
        %1193 = vmatpush.msra.mxu0 0.0
        %1194 = vmatpush.msra.mxu0 0.0
        %1195 = vmatpush.msra.mxu0 0.0
        %1196 = vmatpush.msra.mxu0 0.0
        %1197 = vmatpush.msra.mxu0 0.0
        %1198 = vmatpush.msra.mxu0 0.0
        %1199 = vmatpush.msra.mxu0 0.0
        %1200 = vmatpush.msra.mxu0 0.0
        %1201 = vmatpush.msra.mxu0 %v1130
        %1202 = vmatpush.msra.mxu0 %v1128
        %1203 = vmatpush.msra.mxu0 %v1126
        %1204 = vmatpush.msra.mxu0 %v1124
        %1205 = vmatmul.f32.gmra.mxu0 %v1187
        %v1206 = vpop.f32.mrf.mxu0
        %v1207 = vadd.f32 %v1182, %v1206
        %1208 = vdwg.mxu0
        %1209 = vmatpush.msra.mxu0 0.0
        %1210 = vmatpush.msra.mxu0 0.0
        %1211 = vmatpush.msra.mxu0 0.0
        %1212 = vmatpush.msra.mxu0 0.0
        %1213 = vmatpush.msra.mxu0 0.0
        %1214 = vmatpush.msra.mxu0 0.0
        %1215 = vmatpush.msra.mxu0 0.0
        %1216 = vmatpush.msra.mxu0 0.0
        %1217 = vmatpush.msra.mxu0 0.0
        %1218 = vmatpush.msra.mxu0 0.0
        %1219 = vmatpush.msra.mxu0 0.0
        %1220 = vmatpush.msra.mxu0 0.0
        %1221 = vmatpush.msra.mxu0 %v1131
        %1222 = vmatpush.msra.mxu0 %v1129
        %1223 = vmatpush.msra.mxu0 %v1127
        %1224 = vmatpush.msra.mxu0 %v1125
        %1225 = vmatmul.f32.gmra.mxu0 %v1187
        %v1226 = vpop.f32.mrf.mxu0
        %v1227 = vadd.f32 %v1183, %v1226
        %1228 = vdwg.mxu0
        %v1229 = vmul.f32 %v1227, 0.5
        %v1230 = vmul.f32 %v1227, 0.70710677
        %vm1231 = vcmp.ge.f32.partialorder %v1230, 0.0
        %v1232 = vsel %vm1231, 1.0, -1.0
        %v1233 = vand.u32 2147483647, %v1230
        %v1234 = vmul.f32 %v1233, 0.3275911
        %v1235 = vadd.f32 %v1234, 1.0
        %v1236 = vrcp.pop %v1235
        %v1237 = vmul.f32 %v1235, %v1236
        %v1238 = vsub.f32 1.0, %v1237
        %v1239 = vmul.f32 %v1236, %v1238
        %v1240 = vadd.f32 %v1236, %v1239
        %vm1241 = vweird.f32 %v1235
        %vm1242 = vweird.f32 %v1236
        %vm1243 = vmor %vm1241, %vm1242
        %v1244 = vsel %vm1243, %v1236, %v1240
        %v1245 = vand.u32 2147483647, %v1235
        %vm1246 = vcmp.eq.f32.partialorder %v1245, 8.507059e+37
        %v1247 = vand.u32 %v1235, 2147483648
        %v1248 = vor.u32 1.1754944e-38, %v1247
        %v1249 = vsel %vm1246, %v1248, %v1244
        %v1250 = vmul.f32 1.0, %v1249
        %v1251 = vmul.f32 %v1250, 1.0614054
        %v1252 = vadd.f32 %v1251, -1.4531521
        %v1253 = vmul.f32 %v1252, %v1250
        %v1254 = vadd.f32 %v1253, 1.4214138
        %v1255 = vmul.f32 %v1254, %v1250
        %v1256 = vadd.f32 %v1255, -0.28449672
        %v1257 = vmul.f32 %v1256, %v1250
        %v1258 = vadd.f32 %v1257, 0.2548296
        %v1259 = vmul.f32 %v1258, %v1250
        %v1260 = vsub.f32 0.0, %v1233
        %v1261 = vmul.f32 %v1260, %v1233
        %v1262 = vmul.f32 %v1261, 1.442695
        %v1263 = vpow.pop %v1262
        %v1264 = vmul.f32 %v1259, %v1263
        %v1265 = vsub.f32 1.0, %v1264
        %v1266 = vmul.f32 %v1232, %v1265
        %v1267 = vadd.f32 %v1266, 1.0
        %v1268 = vmul.f32 %v1229, %v1267
        %v1269 = vmul.f32 %v1207, %v1268
        %v1271 = vperm.slane %v1149, 0
        %1273 = vmatpush.msra.mxu0 %v1148
        %1274 = vmatpush.msra.mxu0 %v1147
        %1275 = vmatpush.msra.mxu0 %v1146
        %1276 = vmatpush.msra.mxu0 %v1145
        %1277 = vmatpush.msra.mxu0 %v1144
        %1278 = vmatpush.msra.mxu0 %v1143
        %1279 = vmatpush.msra.mxu0 %v1142
        %1280 = vmatpush.msra.mxu0 %v1141
        %1281 = vmatpush.msra.mxu0 %v1140
        %1282 = vmatpush.msra.mxu0 %v1139
        %1283 = vmatpush.msra.mxu0 %v1138
        %1284 = vmatpush.msra.mxu0 %v1137
        %1285 = vmatpush.msra.mxu0 %v1136
        %1286 = vmatpush.msra.mxu0 %v1135
        %1287 = vmatpush.msra.mxu0 %v1134
        %1288 = vmatpush.msra.mxu0 %v1133
        %1289 = vmatmul.f32.gmra.mxu0 %v1269
        %v1290 = vpop.f32.mrf.mxu0
        %v1291 = vadd.f32 %v1271, %v1290
        %1292 = vdwg.mxu0
        %v1294 = vperm.slane %v1150, 0
        %v1296 = vmul.f32 %v1291, %v1294
        %v1297 = vadd.f32 %v1296, %v1180
        %1298 = vst.msk [vmem:[%s606] sm:$0xff] %vm627, %v1297
        %p1299 = scmp.lt.s32.totalorder %s32, 1
        %s1300 = scalar_select %p1299, %s32, 1
        %s1301 = smul.addr %s1300, 8
        %s1302 = scalar_lea.vmem %s13, %s1301
        // Predicated region
        $region117: #{pruned_saint_forward.2} parent=71 // pred_check
          %p1303 = pneg %p328
        $region118: #{pruned_saint_forward.2} parent=71 // pred_check_branch
          %1305 = sbr.rel (%p1303) target = $region120
        $region119: #{pruned_saint_forward.2} parent=71 // pred_region
          _
        $region120: #{pruned_saint_forward.2} parent=71 // pred_fallthru
          _
      $region72: #{pruned_saint_forward.2} parent=5 // pred_fallthru
        _
      %p1306 = scmp.le.s32.totalorder 2, %s27
      // Predicated region
      $region121: #{pruned_saint_forward.2} parent=5 // pred_check
        %p1307 = pneg %p1306
      $region122: #{pruned_saint_forward.2} parent=5 // pred_check_branch
        %1309 = sbr.rel (%p1307) target = $region124
      $region123: #{pruned_saint_forward.2} parent=5 // pred_region
        %s1310 = ssub.s32 %s27, 2
        // Predicated region
        $region125: #{pruned_saint_forward.2} parent=123 // pred_check
          %p1311 = pneg %p334
        $region126: #{pruned_saint_forward.2} parent=123 // pred_check_branch
          %1313 = sbr.rel (%p1311) target = $region128
        $region127: #{pruned_saint_forward.2} parent=123 // pred_region
          %p1314 = scmp.lt.s32.totalorder %s33, 1
          %s1315 = scalar_select %p1314, %s33, 1
          %s1316 = smul.addr %s1315, 8
          %s1317 = scalar_lea.vmem %s13, %s1316
        $region128: #{pruned_saint_forward.2} parent=123 // pred_fallthru
          _
      $region124: #{pruned_saint_forward.2} parent=5 // pred_fallthru
        _
    $region6: #{pruned_saint_forward.2} parent=1 // loop_footer
      %s31 = sadd.s32 1, %s27
    $region7: #{pruned_saint_forward.2} parent=1 // loop_footer_branch
      %26 = sbr.rel target = $region3
    $region8: #{pruned_saint_forward.2} parent=1 // loop_exit
      _
    %1318 = vsyncpa [#allocation3], 1
    %s1319 = scalar_lea.sflag [#allocation3], 1
    %1320 = vsyncpa %s1319, 1
    %1321 = vsyncpa [#allocation5], 1
    %1322 = vsyncpa [#allocation8], 1
    %1323 = vsyncpa [#allocation11], 1
    %1324 = vsyncpa [#allocation14], 1
    %1325 = vsyncpa [#allocation17], 1

// kernel: pruned_saint_forward.3
$region0: #{pruned_saint_forward.3}
  #allocation0 [shape = 'u32[]', space=smem, size = 0x4, offset = 0x4, fixed_abs, tag = 'smem constant byte address 0x4 - core index']
  #allocation1 [shape = 'u32[72,128]{1,0:T(1,128)}', space=vmem, size = 0x9000, scoped, tag = 'internal scratch']
  %s0 = inlined_call_operand.vmem [shape: f32[2,256], index: 0, kind: input, shape index: {}]
  %s1 = inlined_call_operand.hbm [shape: f32[1,256], index: 1, kind: input, shape index: {}]
  %s2 = inlined_call_operand.hbm [shape: f32[1,256], index: 2, kind: input, shape index: {}]
  %s3 = inlined_call_operand.vmem [shape: f32[256,192], index: 3, kind: input, shape index: {}]
  %s4 = inlined_call_operand.hbm [shape: f32[64,256], index: 4, kind: input, shape index: {}]
  %s5 = inlined_call_operand.hbm [shape: f32[1,256], index: 5, kind: input, shape index: {}]
  %s6 = inlined_call_operand.hbm [shape: f32[1,256], index: 6, kind: input, shape index: {}]
  %s7 = inlined_call_operand.hbm [shape: f32[1,256], index: 7, kind: input, shape index: {}]
  %s8 = inlined_call_operand.hbm [shape: f32[256,2048], index: 8, kind: input, shape index: {}]
  %s9 = inlined_call_operand.hbm [shape: f32[1,2048], index: 9, kind: input, shape index: {}]
  %s10 = inlined_call_operand.hbm [shape: f32[1024,256], index: 10, kind: input, shape index: {}]
  %s11 = inlined_call_operand.hbm [shape: f32[1,256], index: 11, kind: input, shape index: {}]
  %s12 = inlined_call_operand.hbm [shape: f32[1,256], index: 12, kind: input, shape index: {}]
  %s13 = inlined_call_operand.vmem [shape: f32[2,256], index: 13, kind: output, shape index: {}]
  %s14 = sld [smem:[#allocation0]]
  $region106: #{pruned_saint_forward.3} parent=0
    _
  %s16 = ssub.s32 1, %s14
  %s17 = scalar_select 0, %s16, %s14
  $region1: #{pruned_saint_forward.3} parent=0
    #allocation2 [shape = 'u8[1024]{0}', space=vmem, size = 0x400, scoped, tag = 'input window, operand 1, single buffered']
    #allocation3 [shape = 's32[1]{0}', space=sflag, size = 0x4, scoped, tag = 'scoped memory for pruned_saint_forward.3']
    #allocation4 [shape = 'u8[1024]{0}', space=vmem, size = 0x400, scoped, tag = 'input window, operand 2, single buffered']
    #allocation5 [shape = 's32[1]{0}', space=sflag, size = 0x4, scoped, tag = 'scoped memory for pruned_saint_forward.3']
    #allocation6 [shape = 'u8[65536]{0}', space=vmem, size = 0x10000, scoped, tag = 'input window, operand 4, single buffered']
    #allocation7 [shape = 'u8[1024]{0}', space=vmem, size = 0x400, scoped, tag = 'input window, operand 5, single buffered']
    #allocation8 [shape = 's32[1]{0}', space=sflag, size = 0x4, scoped, tag = 'scoped memory for pruned_saint_forward.3']
    #allocation9 [shape = 'u8[1024]{0}', space=vmem, size = 0x400, scoped, tag = 'input window, operand 6, single buffered']
    #allocation10 [shape = 'u8[1024]{0}', space=vmem, size = 0x400, scoped, tag = 'input window, operand 7, single buffered']
    #allocation11 [shape = 's32[1]{0}', space=sflag, size = 0x4, scoped, tag = 'scoped memory for pruned_saint_forward.3']
    #allocation12 [shape = 'u8[2097152]{0}', space=vmem, size = 0x200000, scoped, tag = 'input window, operand 8, single buffered']
    #allocation13 [shape = 'u8[8192]{0}', space=vmem, size = 0x2000, scoped, tag = 'input window, operand 9, single buffered']
    #allocation14 [shape = 's32[1]{0}', space=sflag, size = 0x4, scoped, tag = 'scoped memory for pruned_saint_forward.3']
    #allocation15 [shape = 'u8[1048576]{0}', space=vmem, size = 0x100000, scoped, tag = 'input window, operand 10, single buffered']
    #allocation16 [shape = 'u8[1024]{0}', space=vmem, size = 0x400, scoped, tag = 'input window, operand 11, single buffered']
    #allocation17 [shape = 's32[1]{0}', space=sflag, size = 0x4, scoped, tag = 'scoped memory for pruned_saint_forward.3']
    #allocation18 [shape = 'u8[1024]{0}', space=vmem, size = 0x400, scoped, tag = 'input window, operand 12, single buffered']
    %18 = vsyncpa [#allocation3], 0
    %19 = vsyncpa [#allocation5], 0
    %20 = vsyncpa [#allocation8], 0
    %21 = vsyncpa [#allocation11], 0
    %22 = vsyncpa [#allocation14], 0
    %23 = vsyncpa [#allocation17], 0
    // Predicated region
    $region2: #{pruned_saint_forward.3} parent=1 // pred_check
      _
    $region3: #{pruned_saint_forward.3} parent=1 // pred_check_branch
      %25 = sbr.rel (0) target = $region5
    $region4: #{pruned_saint_forward.3} parent=1 // pred_region
      _
    $region5: #{pruned_saint_forward.3} parent=1 // pred_fallthru
      _
    // Predicated region
    $region6: #{pruned_saint_forward.3} parent=1 // pred_check
      _
    $region7: #{pruned_saint_forward.3} parent=1 // pred_check_branch
      %27 = sbr.rel (0) target = $region9
    $region8: #{pruned_saint_forward.3} parent=1 // pred_region
      %29 = vsyncadd [#allocation3], 0
      %s31 = sshll.u32 %s1, 4
      %s32 = int_to_ptr.hbm [resolvable:$true] %s31
      %s33 = sshll.u32 [#allocation2], 4
      %s34 = int_to_ptr.vmem [resolvable:$true] %s33
      %36 = dma.hbm_to_vmem [thread:$0]  %s32, 32, %s34, [#allocation3]
    $region9: #{pruned_saint_forward.3} parent=1 // pred_fallthru
      _
    // Predicated region
    $region10: #{pruned_saint_forward.3} parent=1 // pred_check
      _
    $region11: #{pruned_saint_forward.3} parent=1 // pred_check_branch
      %38 = sbr.rel (0) target = $region13
    $region12: #{pruned_saint_forward.3} parent=1 // pred_region
      %40 = vsyncadd [#allocation5], 0
      %s42 = sshll.u32 %s2, 4
      %s43 = int_to_ptr.hbm [resolvable:$true] %s42
      %s44 = sshll.u32 [#allocation4], 4
      %s45 = int_to_ptr.vmem [resolvable:$true] %s44
      %47 = dma.hbm_to_vmem [thread:$0]  %s43, 32, %s45, [#allocation5]
    $region13: #{pruned_saint_forward.3} parent=1 // pred_fallthru
      _
    // Predicated region
    $region14: #{pruned_saint_forward.3} parent=1 // pred_check
      _
    $region15: #{pruned_saint_forward.3} parent=1 // pred_check_branch
      %49 = sbr.rel (0) target = $region17
    $region16: #{pruned_saint_forward.3} parent=1 // pred_region
      _
    $region17: #{pruned_saint_forward.3} parent=1 // pred_fallthru
      _
    // Predicated region
    $region18: #{pruned_saint_forward.3} parent=1 // pred_check
      _
    $region19: #{pruned_saint_forward.3} parent=1 // pred_check_branch
      %51 = sbr.rel (0) target = $region21
    $region20: #{pruned_saint_forward.3} parent=1 // pred_region
      %53 = vsyncadd [#allocation5], 0
      %s54 = sshll.u32 %s4, 4
      %s55 = int_to_ptr.hbm [resolvable:$true] %s54
      %s56 = sshll.u32 [#allocation6], 4
      %s57 = int_to_ptr.vmem [resolvable:$true] %s56
      %62 = dma.hbm_to_vmem [thread:$0]  %s55, 2048, %s57, [#allocation5], 256, 256, 16
    $region21: #{pruned_saint_forward.3} parent=1 // pred_fallthru
      _
    // Predicated region
    $region22: #{pruned_saint_forward.3} parent=1 // pred_check
      _
    $region23: #{pruned_saint_forward.3} parent=1 // pred_check_branch
      %64 = sbr.rel (0) target = $region25
    $region24: #{pruned_saint_forward.3} parent=1 // pred_region
      %66 = vsyncadd [#allocation8], 0
      %s68 = sshll.u32 %s5, 4
      %s69 = int_to_ptr.hbm [resolvable:$true] %s68
      %s70 = sshll.u32 [#allocation7], 4
      %s71 = int_to_ptr.vmem [resolvable:$true] %s70
      %73 = dma.hbm_to_vmem [thread:$0]  %s69, 32, %s71, [#allocation8]
    $region25: #{pruned_saint_forward.3} parent=1 // pred_fallthru
      _
    // Predicated region
    $region26: #{pruned_saint_forward.3} parent=1 // pred_check
      _
    $region27: #{pruned_saint_forward.3} parent=1 // pred_check_branch
      %75 = sbr.rel (0) target = $region29
    $region28: #{pruned_saint_forward.3} parent=1 // pred_region
      %77 = vsyncadd [#allocation8], 0
      %s79 = sshll.u32 %s6, 4
      %s80 = int_to_ptr.hbm [resolvable:$true] %s79
      %s81 = sshll.u32 [#allocation9], 4
      %s82 = int_to_ptr.vmem [resolvable:$true] %s81
      %84 = dma.hbm_to_vmem [thread:$0]  %s80, 32, %s82, [#allocation8]
    $region29: #{pruned_saint_forward.3} parent=1 // pred_fallthru
      _
    // Predicated region
    $region30: #{pruned_saint_forward.3} parent=1 // pred_check
      _
    $region31: #{pruned_saint_forward.3} parent=1 // pred_check_branch
      %86 = sbr.rel (0) target = $region33
    $region32: #{pruned_saint_forward.3} parent=1 // pred_region
      %88 = vsyncadd [#allocation11], 0
      %s90 = sshll.u32 %s7, 4
      %s91 = int_to_ptr.hbm [resolvable:$true] %s90
      %s92 = sshll.u32 [#allocation10], 4
      %s93 = int_to_ptr.vmem [resolvable:$true] %s92
      %95 = dma.hbm_to_vmem [thread:$0]  %s91, 32, %s93, [#allocation11]
    $region33: #{pruned_saint_forward.3} parent=1 // pred_fallthru
      _
    // Predicated region
    $region34: #{pruned_saint_forward.3} parent=1 // pred_check
      _
    $region35: #{pruned_saint_forward.3} parent=1 // pred_check_branch
      %97 = sbr.rel (0) target = $region37
    $region36: #{pruned_saint_forward.3} parent=1 // pred_region
      %99 = vsyncadd [#allocation11], 0
      %s100 = sshll.u32 %s8, 4
      %s101 = int_to_ptr.hbm [resolvable:$true] %s100
      %s102 = sshll.u32 [#allocation12], 4
      %s103 = int_to_ptr.vmem [resolvable:$true] %s102
      %108 = dma.hbm_to_vmem [thread:$0]  %s101, 65536, %s103, [#allocation11], 2048, 2048, 128
    $region37: #{pruned_saint_forward.3} parent=1 // pred_fallthru
      _
    // Predicated region
    $region38: #{pruned_saint_forward.3} parent=1 // pred_check
      _
    $region39: #{pruned_saint_forward.3} parent=1 // pred_check_branch
      %110 = sbr.rel (0) target = $region41
    $region40: #{pruned_saint_forward.3} parent=1 // pred_region
      %112 = vsyncadd [#allocation14], 0
      %s114 = sshll.u32 %s9, 4
      %s115 = int_to_ptr.hbm [resolvable:$true] %s114
      %s116 = sshll.u32 [#allocation13], 4
      %s117 = int_to_ptr.vmem [resolvable:$true] %s116
      %119 = dma.hbm_to_vmem [thread:$0]  %s115, 256, %s117, [#allocation14]
    $region41: #{pruned_saint_forward.3} parent=1 // pred_fallthru
      _
    // Predicated region
    $region42: #{pruned_saint_forward.3} parent=1 // pred_check
      _
    $region43: #{pruned_saint_forward.3} parent=1 // pred_check_branch
      %121 = sbr.rel (0) target = $region45
    $region44: #{pruned_saint_forward.3} parent=1 // pred_region
      %123 = vsyncadd [#allocation14], 0
      %s124 = sshll.u32 %s10, 4
      %s125 = int_to_ptr.hbm [resolvable:$true] %s124
      %s126 = sshll.u32 [#allocation15], 4
      %s127 = int_to_ptr.vmem [resolvable:$true] %s126
      %132 = dma.hbm_to_vmem [thread:$0]  %s125, 32768, %s127, [#allocation14], 256, 256, 16
    $region45: #{pruned_saint_forward.3} parent=1 // pred_fallthru
      _
    // Predicated region
    $region46: #{pruned_saint_forward.3} parent=1 // pred_check
      _
    $region47: #{pruned_saint_forward.3} parent=1 // pred_check_branch
      %134 = sbr.rel (0) target = $region49
    $region48: #{pruned_saint_forward.3} parent=1 // pred_region
      %136 = vsyncadd [#allocation17], 0
      %s138 = sshll.u32 %s11, 4
      %s139 = int_to_ptr.hbm [resolvable:$true] %s138
      %s140 = sshll.u32 [#allocation16], 4
      %s141 = int_to_ptr.vmem [resolvable:$true] %s140
      %143 = dma.hbm_to_vmem [thread:$0]  %s139, 32, %s141, [#allocation17]
    $region49: #{pruned_saint_forward.3} parent=1 // pred_fallthru
      _
    // Predicated region
    $region50: #{pruned_saint_forward.3} parent=1 // pred_check
      _
    $region51: #{pruned_saint_forward.3} parent=1 // pred_check_branch
      %145 = sbr.rel (0) target = $region53
    $region52: #{pruned_saint_forward.3} parent=1 // pred_region
      %147 = vsyncadd [#allocation17], 0
      %s149 = sshll.u32 %s12, 4
      %s150 = int_to_ptr.hbm [resolvable:$true] %s149
      %s151 = sshll.u32 [#allocation18], 4
      %s152 = int_to_ptr.vmem [resolvable:$true] %s151
      %154 = dma.hbm_to_vmem [thread:$0]  %s150, 32, %s152, [#allocation17]
    $region53: #{pruned_saint_forward.3} parent=1 // pred_fallthru
      _
    // Predicated region
    $region54: #{pruned_saint_forward.3} parent=1 // pred_check
      _
    $region55: #{pruned_saint_forward.3} parent=1 // pred_check_branch
      %156 = sbr.rel (0) target = $region57
    $region56: #{pruned_saint_forward.3} parent=1 // pred_region
      %158 = dma.done [#allocation3], 32
    $region57: #{pruned_saint_forward.3} parent=1 // pred_fallthru
      _
    // Predicated region
    $region58: #{pruned_saint_forward.3} parent=1 // pred_check
      _
    $region59: #{pruned_saint_forward.3} parent=1 // pred_check_branch
      %160 = sbr.rel (0) target = $region61
    $region60: #{pruned_saint_forward.3} parent=1 // pred_region
      %162 = dma.done [#allocation5], 32
    $region61: #{pruned_saint_forward.3} parent=1 // pred_fallthru
      _
    // Predicated region
    $region62: #{pruned_saint_forward.3} parent=1 // pred_check
      _
    $region63: #{pruned_saint_forward.3} parent=1 // pred_check_branch
      %164 = sbr.rel (0) target = $region65
    $region64: #{pruned_saint_forward.3} parent=1 // pred_region
      %166 = dma.done [#allocation5], 2048
    $region65: #{pruned_saint_forward.3} parent=1 // pred_fallthru
      _
    // Predicated region
    $region66: #{pruned_saint_forward.3} parent=1 // pred_check
      _
    $region67: #{pruned_saint_forward.3} parent=1 // pred_check_branch
      %168 = sbr.rel (0) target = $region69
    $region68: #{pruned_saint_forward.3} parent=1 // pred_region
      %170 = dma.done [#allocation8], 32
    $region69: #{pruned_saint_forward.3} parent=1 // pred_fallthru
      _
    // Predicated region
    $region70: #{pruned_saint_forward.3} parent=1 // pred_check
      _
    $region71: #{pruned_saint_forward.3} parent=1 // pred_check_branch
      %172 = sbr.rel (0) target = $region73
    $region72: #{pruned_saint_forward.3} parent=1 // pred_region
      %174 = dma.done [#allocation8], 32
    $region73: #{pruned_saint_forward.3} parent=1 // pred_fallthru
      _
    // Predicated region
    $region74: #{pruned_saint_forward.3} parent=1 // pred_check
      _
    $region75: #{pruned_saint_forward.3} parent=1 // pred_check_branch
      %176 = sbr.rel (0) target = $region77
    $region76: #{pruned_saint_forward.3} parent=1 // pred_region
      %178 = dma.done [#allocation11], 32
    $region77: #{pruned_saint_forward.3} parent=1 // pred_fallthru
      _
    // Predicated region
    $region78: #{pruned_saint_forward.3} parent=1 // pred_check
      _
    $region79: #{pruned_saint_forward.3} parent=1 // pred_check_branch
      %180 = sbr.rel (0) target = $region81
    $region80: #{pruned_saint_forward.3} parent=1 // pred_region
      %182 = dma.done [#allocation11], 65536
    $region81: #{pruned_saint_forward.3} parent=1 // pred_fallthru
      _
    // Predicated region
    $region82: #{pruned_saint_forward.3} parent=1 // pred_check
      _
    $region83: #{pruned_saint_forward.3} parent=1 // pred_check_branch
      %184 = sbr.rel (0) target = $region85
    $region84: #{pruned_saint_forward.3} parent=1 // pred_region
      %186 = dma.done [#allocation14], 256
    $region85: #{pruned_saint_forward.3} parent=1 // pred_fallthru
      _
    // Predicated region
    $region86: #{pruned_saint_forward.3} parent=1 // pred_check
      _
    $region87: #{pruned_saint_forward.3} parent=1 // pred_check_branch
      %188 = sbr.rel (0) target = $region89
    $region88: #{pruned_saint_forward.3} parent=1 // pred_region
      %190 = dma.done [#allocation14], 32768
    $region89: #{pruned_saint_forward.3} parent=1 // pred_fallthru
      _
    // Predicated region
    $region90: #{pruned_saint_forward.3} parent=1 // pred_check
      _
    $region91: #{pruned_saint_forward.3} parent=1 // pred_check_branch
      %192 = sbr.rel (0) target = $region93
    $region92: #{pruned_saint_forward.3} parent=1 // pred_region
      %194 = dma.done [#allocation17], 32
    $region93: #{pruned_saint_forward.3} parent=1 // pred_fallthru
      _
    // Predicated region
    $region94: #{pruned_saint_forward.3} parent=1 // pred_check
      _
    $region95: #{pruned_saint_forward.3} parent=1 // pred_check_branch
      %196 = sbr.rel (0) target = $region97
    $region96: #{pruned_saint_forward.3} parent=1 // pred_region
      %198 = dma.done [#allocation17], 32
    $region97: #{pruned_saint_forward.3} parent=1 // pred_fallthru
      _
    %v199 = vld [vmem:[%s0] sm:$0xf]
    %v200 = vld [vmem:[#allocation2] sm:$0x3]
    %v201 = vld [vmem:[#allocation4] sm:$0x3]
    %v202 = vld [vmem:[%s3] sm:$0xff]
    %v203 = vld [vmem:[%s3 + $0x8] sm:$0xff]
    %v204 = vld [vmem:[%s3 + $0x10] sm:$0xff]
    %v205 = vld [vmem:[%s3 + $0x18] sm:$0xff]
    %v206 = vld [vmem:[%s3 + $0x20] sm:$0xff]
    %v207 = vld [vmem:[%s3 + $0x28] sm:$0xff]
    %v208 = vld [vmem:[%s3 + $0x30] sm:$0xff]
    %v209 = vld [vmem:[%s3 + $0x38] sm:$0xff]
    %v210 = vld [vmem:[%s3 + $0x40] sm:$0xff]
    %v211 = vld [vmem:[%s3 + $0x48] sm:$0xff]
    %v212 = vld [vmem:[%s3 + $0x50] sm:$0xff]
    %v213 = vld [vmem:[%s3 + $0x58] sm:$0xff]
    %v214 = vld [vmem:[%s3 + $0x60] sm:$0xff]
    %v215 = vld [vmem:[%s3 + $0x68] sm:$0xff]
    %v216 = vld [vmem:[%s3 + $0x70] sm:$0xff]
    %v217 = vld [vmem:[%s3 + $0x78] sm:$0xff]
    %v218 = vld [vmem:[%s3 + $0x80] sm:$0xff]
    %v219 = vld [vmem:[%s3 + $0x88] sm:$0xff]
    %v220 = vld [vmem:[%s3 + $0x90] sm:$0xff]
    %v221 = vld [vmem:[%s3 + $0x98] sm:$0xff]
    %v222 = vld [vmem:[%s3 + $0xa0] sm:$0xff]
    %v223 = vld [vmem:[%s3 + $0xa8] sm:$0xff]
    %v224 = vld [vmem:[%s3 + $0xb0] sm:$0xff]
    %v225 = vld [vmem:[%s3 + $0xb8] sm:$0xff]
    %v226 = vld [vmem:[%s3 + $0xc0] sm:$0xff]
    %v227 = vld [vmem:[%s3 + $0xc8] sm:$0xff]
    %v228 = vld [vmem:[%s3 + $0xd0] sm:$0xff]
    %v229 = vld [vmem:[%s3 + $0xd8] sm:$0xff]
    %v230 = vld [vmem:[%s3 + $0xe0] sm:$0xff]
    %v231 = vld [vmem:[%s3 + $0xe8] sm:$0xff]
    %v232 = vld [vmem:[%s3 + $0xf0] sm:$0xff]
    %v233 = vld [vmem:[%s3 + $0xf8] sm:$0xff]
    %v234 = vld [vmem:[%s3 + $0x100] sm:$0xff]
    %v235 = vld [vmem:[%s3 + $0x108] sm:$0xff]
    %v236 = vld [vmem:[%s3 + $0x110] sm:$0xff]
    %v237 = vld [vmem:[%s3 + $0x118] sm:$0xff]
    %v238 = vld [vmem:[%s3 + $0x120] sm:$0xff]
    %v239 = vld [vmem:[%s3 + $0x128] sm:$0xff]
    %v240 = vld [vmem:[%s3 + $0x130] sm:$0xff]
    %v241 = vld [vmem:[%s3 + $0x138] sm:$0xff]
    %v242 = vld [vmem:[%s3 + $0x140] sm:$0xff]
    %v243 = vld [vmem:[%s3 + $0x148] sm:$0xff]
    %v244 = vld [vmem:[%s3 + $0x150] sm:$0xff]
    %v245 = vld [vmem:[%s3 + $0x158] sm:$0xff]
    %v246 = vld [vmem:[%s3 + $0x160] sm:$0xff]
    %v247 = vld [vmem:[%s3 + $0x168] sm:$0xff]
    %v248 = vld [vmem:[%s3 + $0x170] sm:$0xff]
    %v249 = vld [vmem:[%s3 + $0x178] sm:$0xff]
    %v250 = vld [vmem:[%s3 + $0x180] sm:$0xff]
    %v251 = vld [vmem:[%s3 + $0x188] sm:$0xff]
    %v252 = vld [vmem:[%s3 + $0x190] sm:$0xff]
    %v253 = vld [vmem:[%s3 + $0x198] sm:$0xff]
    %v254 = vld [vmem:[%s3 + $0x1a0] sm:$0xff]
    %v255 = vld [vmem:[%s3 + $0x1a8] sm:$0xff]
    %v256 = vld [vmem:[%s3 + $0x1b0] sm:$0xff]
    %v257 = vld [vmem:[%s3 + $0x1b8] sm:$0xff]
    %v258 = vld [vmem:[%s3 + $0x1c0] sm:$0xff]
    %v259 = vld [vmem:[%s3 + $0x1c8] sm:$0xff]
    %v260 = vld [vmem:[%s3 + $0x1d0] sm:$0xff]
    %v261 = vld [vmem:[%s3 + $0x1d8] sm:$0xff]
    %v262 = vld [vmem:[%s3 + $0x1e0] sm:$0xff]
    %v263 = vld [vmem:[%s3 + $0x1e8] sm:$0xff]
    %v264 = vld [vmem:[%s3 + $0x1f0] sm:$0xff]
    %v265 = vld [vmem:[%s3 + $0x1f8] sm:$0xff]
    %v266 = vld [vmem:[#allocation6] sm:$0xff]
    %v267 = vld [vmem:[#allocation6 + $0x8] sm:$0xff]
    %v268 = vld [vmem:[#allocation6 + $0x10] sm:$0xff]
    %v269 = vld [vmem:[#allocation6 + $0x18] sm:$0xff]
    %v270 = vld [vmem:[#allocation6 + $0x20] sm:$0xff]
    %v271 = vld [vmem:[#allocation6 + $0x28] sm:$0xff]
    %v272 = vld [vmem:[#allocation6 + $0x30] sm:$0xff]
    %v273 = vld [vmem:[#allocation6 + $0x38] sm:$0xff]
    %v274 = vld [vmem:[#allocation6 + $0x40] sm:$0xff]
    %v275 = vld [vmem:[#allocation6 + $0x48] sm:$0xff]
    %v276 = vld [vmem:[#allocation6 + $0x50] sm:$0xff]
    %v277 = vld [vmem:[#allocation6 + $0x58] sm:$0xff]
    %v278 = vld [vmem:[#allocation6 + $0x60] sm:$0xff]
    %v279 = vld [vmem:[#allocation6 + $0x68] sm:$0xff]
    %v280 = vld [vmem:[#allocation6 + $0x70] sm:$0xff]
    %v281 = vld [vmem:[#allocation6 + $0x78] sm:$0xff]
    %v282 = vld [vmem:[#allocation7] sm:$0x3]
    %284 = vst [vmem:[#allocation1] ss:$4 sm:$0xff] %v199
    %v285 = vld.sshfl [vmem:[#allocation1] sm:$0xff pattern:$0x73625140]
    %v286 = vld.sshfl [vmem:[#allocation1 + $0x8] sm:$0xff pattern:$0x73625140]
    %vm289 = vcmask 1041408
    %v290 = vsel %vm289, %v285, 0.0
    %v291 = vsel %vm289, %v286, 0.0
    %v292 = vadd.f32 %v290, %v291
    %293 = vadd.xlane.f32.xlu0 %v292
    %v294 = vpop.xlane.xlu0 %293
    %v295 = vrcp.pop 256.0
    %v296 = vmul.f32 256.0, %v295
    %v297 = vsub.f32 1.0, %v296
    %v298 = vmul.f32 %v295, %v297
    %v299 = vadd.f32 %v295, %v298
    %vm300 = vweird.f32 %v295
    %v301 = vsel %vm300, %v295, %v299
    %v302 = vmul.f32 %v294, %v301
    %v305 = vunpack.c.l.s4 269488144
    %v306 = vunpack.c.0.s8 %v305
    %v307 = vperm.slane %v302, %v306
    %v309 = vsub.f32 %v199, %v307
    %v310 = vmul.f32 %v309, %v309
    %312 = vst [vmem:[#allocation1] ss:$4 sm:$0xff] %v310
    %v313 = vld.sshfl [vmem:[#allocation1] sm:$0xff pattern:$0x73625140]
    %v314 = vld.sshfl [vmem:[#allocation1 + $0x8] sm:$0xff pattern:$0x73625140]
    %v317 = vsel %vm289, %v313, 0.0
    %v318 = vsel %vm289, %v314, 0.0
    %v319 = vadd.f32 %v317, %v318
    %320 = vadd.xlane.f32.xlu0 %v319
    %v321 = vpop.xlane.xlu0 %320
    %v322 = vmul.f32 %v321, %v301
    %v323 = vadd.f32 %v322, 1e-05
    %v324 = vrsqrt.pop %v323
    %v325 = vmul.f32 %v324, %v323
    %v326 = vmul.f32 %v325, %v324
    %v327 = vmul.f32 0.5, %v326
    %v328 = vsub.f32 1.5, %v327
    %v329 = vmul.f32 %v324, %v328
    %vm330 = vweird.f32 %v323
    %vm331 = vweird.f32 %v324
    %vm332 = vmor %vm330, %vm331
    %v333 = vsel %vm332, %v324, %v329
    %v336 = vunpack.c.l.s4 269488144
    %v337 = vunpack.c.0.s8 %v336
    %v338 = vperm.slane %v333, %v337
    %v340 = vmul.f32 %v309, %v338
    %v342 = vperm.slane %v200, 0
    %v343 = vperm.slane %v200, 1
    %v344 = vrot.slane %v343, 6
    %v345 = vsel %vm289, %v342, %v344
    %v347 = vmul.f32 %v340, %v345
    %v349 = vperm.slane %v201, 0
    %v350 = vperm.slane %v201, 1
    %v351 = vrot.slane %v350, 6
    %v352 = vsel %vm289, %v349, %v351
    %v354 = vadd.f32 %v347, %v352
    %356 = vst [vmem:[#allocation1] ss:$4 sm:$0xff] %v354
    %v357 = vld.sshfl [vmem:[#allocation1] sm:$0xff pattern:$0x73625140]
    %v358 = vld.sshfl [vmem:[#allocation1 + $0x8] sm:$0xff pattern:$0x73625140]
    %361 = vmatpush.msra.mxu0 %v232
    %362 = vmatpush.msra.mxu0 %v230
    %363 = vmatpush.msra.mxu0 %v228
    %364 = vmatpush.msra.mxu0 %v226
    %365 = vmatpush.msra.mxu0 %v224
    %366 = vmatpush.msra.mxu0 %v222
    %367 = vmatpush.msra.mxu0 %v220
    %368 = vmatpush.msra.mxu0 %v218
    %369 = vmatpush.msra.mxu0 %v216
    %370 = vmatpush.msra.mxu0 %v214
    %371 = vmatpush.msra.mxu0 %v212
    %372 = vmatpush.msra.mxu0 %v210
    %373 = vmatpush.msra.mxu0 %v208
    %374 = vmatpush.msra.mxu0 %v206
    %375 = vmatpush.msra.mxu0 %v204
    %376 = vmatpush.msra.mxu0 %v202
    %377 = vmatmul.f32.gmra.mxu0 %v357
    %v378 = vpop.f32.mrf.mxu0
    %v379 = vadd.f32 0.0, %v378
    %380 = vdwg.mxu0
    %381 = vmatpush.msra.mxu0 %v264
    %382 = vmatpush.msra.mxu0 %v262
    %383 = vmatpush.msra.mxu0 %v260
    %384 = vmatpush.msra.mxu0 %v258
    %385 = vmatpush.msra.mxu0 %v256
    %386 = vmatpush.msra.mxu0 %v254
    %387 = vmatpush.msra.mxu0 %v252
    %388 = vmatpush.msra.mxu0 %v250
    %389 = vmatpush.msra.mxu0 %v248
    %390 = vmatpush.msra.mxu0 %v246
    %391 = vmatpush.msra.mxu0 %v244
    %392 = vmatpush.msra.mxu0 %v242
    %393 = vmatpush.msra.mxu0 %v240
    %394 = vmatpush.msra.mxu0 %v238
    %395 = vmatpush.msra.mxu0 %v236
    %396 = vmatpush.msra.mxu0 %v234
    %397 = vmatmul.f32.gmra.mxu0 %v358
    %v398 = vpop.f32.mrf.mxu0
    %v399 = vadd.f32 %v379, %v398
    %400 = vdwg.mxu0
    %401 = vmatpush.msra.mxu0 %v233
    %402 = vmatpush.msra.mxu0 %v231
    %403 = vmatpush.msra.mxu0 %v229
    %404 = vmatpush.msra.mxu0 %v227
    %405 = vmatpush.msra.mxu0 %v225
    %406 = vmatpush.msra.mxu0 %v223
    %407 = vmatpush.msra.mxu0 %v221
    %408 = vmatpush.msra.mxu0 %v219
    %409 = vmatpush.msra.mxu0 %v217
    %410 = vmatpush.msra.mxu0 %v215
    %411 = vmatpush.msra.mxu0 %v213
    %412 = vmatpush.msra.mxu0 %v211
    %413 = vmatpush.msra.mxu0 %v209
    %414 = vmatpush.msra.mxu0 %v207
    %415 = vmatpush.msra.mxu0 %v205
    %416 = vmatpush.msra.mxu0 %v203
    %417 = vmatmul.f32.gmra.mxu0 %v357
    %v418 = vpop.f32.mrf.mxu0
    %v419 = vadd.f32 0.0, %v418
    %420 = vdwg.mxu0
    %421 = vmatpush.msra.mxu0 %v265
    %422 = vmatpush.msra.mxu0 %v263
    %423 = vmatpush.msra.mxu0 %v261
    %424 = vmatpush.msra.mxu0 %v259
    %425 = vmatpush.msra.mxu0 %v257
    %426 = vmatpush.msra.mxu0 %v255
    %427 = vmatpush.msra.mxu0 %v253
    %428 = vmatpush.msra.mxu0 %v251
    %429 = vmatpush.msra.mxu0 %v249
    %430 = vmatpush.msra.mxu0 %v247
    %431 = vmatpush.msra.mxu0 %v245
    %432 = vmatpush.msra.mxu0 %v243
    %433 = vmatpush.msra.mxu0 %v241
    %434 = vmatpush.msra.mxu0 %v239
    %435 = vmatpush.msra.mxu0 %v237
    %436 = vmatpush.msra.mxu0 %v235
    %437 = vmatmul.f32.gmra.mxu0 %v358
    %v438 = vpop.f32.mrf.mxu0
    %v439 = vadd.f32 %v419, %v438
    %440 = vdwg.mxu0
    %442 = vrot.lane.b32.xlu0 %v399, 64
    %v443 = vpop.permute.xlu0 %442
    %vm444 = vcmask 130048
    %v445 = vsel %vm444, %v399, 0
    %v447 = vsel %vm444, %v443, 0
    %449 = vmatpush.xpose.msra.mxu0 0.0
    %450 = vmatpush.xpose.msra.mxu0 0.0
    %451 = vmatpush.xpose.msra.mxu0 0.0
    %452 = vmatpush.xpose.msra.mxu0 0.0
    %453 = vmatpush.xpose.msra.mxu0 0.0
    %454 = vmatpush.xpose.msra.mxu0 0.0
    %455 = vmatpush.xpose.msra.mxu0 0.0
    %456 = vmatpush.xpose.msra.mxu0 0.0
    %457 = vmatpush.xpose.msra.mxu0 0.0
    %458 = vmatpush.xpose.msra.mxu0 0.0
    %459 = vmatpush.xpose.msra.mxu0 0.0
    %460 = vmatpush.xpose.msra.mxu0 0.0
    %461 = vmatpush.xpose.msra.mxu0 0.0
    %462 = vmatpush.xpose.msra.mxu0 0.0
    %463 = vmatpush.xpose.msra.mxu0 0.0
    %464 = vmatpush.xpose.msra.mxu0 %v447
    %465 = vmatmul.f32.gmra.mxu0 %v445
    %v466 = vpop.f32.mrf.mxu0
    %v467 = vadd.f32 0.0, %v466
    %468 = vdwg.mxu0
    %v469 = vmul.f32 %v467, 0.25
    %vm470 = vcmask 9216
    %v471 = vsel %vm470, %v469, -inf
    %472 = vmax.xlane.f32.xlu0 %v471
    %v473 = vpop.xlane.xlu0 %472
    %v474 = vsub.f32 %v469, %v473
    %v475 = vmul.f32 %v474, 1.442695
    %v476 = vpow.pop %v475
    %v477 = vsel %vm470, %v476, 0.0
    %478 = vadd.xlane.f32.xlu0 %v477
    %v479 = vpop.xlane.xlu0 %478
    %v480 = vrcp.pop %v479
    %v481 = vmul.f32 %v479, %v480
    %v482 = vsub.f32 1.0, %v481
    %v483 = vmul.f32 %v480, %v482
    %v484 = vadd.f32 %v480, %v483
    %vm485 = vweird.f32 %v479
    %vm486 = vweird.f32 %v480
    %vm487 = vmor %vm485, %vm486
    %v488 = vsel %vm487, %v480, %v484
    %v489 = vand.u32 2147483647, %v479
    %vm490 = vcmp.eq.f32.partialorder %v489, 8.507059e+37
    %v491 = vand.u32 %v479, 2147483648
    %v492 = vor.u32 1.1754944e-38, %v491
    %v493 = vsel %vm490, %v492, %v488
    %v494 = vmul.f32 %v476, %v493
    %vm495 = vcmask 15360
    %v497 = vsel %vm495, %v494, 0
    %v500 = vsel %vm289, %v439, 0
    %502 = vmatpush.msra.mxu0 0.0
    %503 = vmatpush.msra.mxu0 0.0
    %504 = vmatpush.msra.mxu0 0.0
    %505 = vmatpush.msra.mxu0 0.0
    %506 = vmatpush.msra.mxu0 0.0
    %507 = vmatpush.msra.mxu0 0.0
    %508 = vmatpush.msra.mxu0 0.0
    %509 = vmatpush.msra.mxu0 0.0
    %510 = vmatpush.msra.mxu0 0.0
    %511 = vmatpush.msra.mxu0 0.0
    %512 = vmatpush.msra.mxu0 0.0
    %513 = vmatpush.msra.mxu0 0.0
    %514 = vmatpush.msra.mxu0 0.0
    %515 = vmatpush.msra.mxu0 0.0
    %516 = vmatpush.msra.mxu0 0.0
    %517 = vmatpush.msra.mxu0 %v500
    %518 = vmatmul.f32.gmra.mxu0 %v497
    %v519 = vpop.f32.mrf.mxu0
    %v520 = vadd.f32 0.0, %v519
    %521 = vdwg.mxu0
    %522 = vrot.lane.b32.xlu0 %v399, 112
    %v523 = vpop.permute.xlu0 %522
    %524 = vrot.lane.b32.xlu0 %v399, 48
    %v525 = vpop.permute.xlu0 %524
    %v526 = vsel %vm444, %v523, 0
    %v528 = vsel %vm444, %v525, 0
    %530 = vmatpush.xpose.msra.mxu0 0.0
    %531 = vmatpush.xpose.msra.mxu0 0.0
    %532 = vmatpush.xpose.msra.mxu0 0.0
    %533 = vmatpush.xpose.msra.mxu0 0.0
    %534 = vmatpush.xpose.msra.mxu0 0.0
    %535 = vmatpush.xpose.msra.mxu0 0.0
    %536 = vmatpush.xpose.msra.mxu0 0.0
    %537 = vmatpush.xpose.msra.mxu0 0.0
    %538 = vmatpush.xpose.msra.mxu0 0.0
    %539 = vmatpush.xpose.msra.mxu0 0.0
    %540 = vmatpush.xpose.msra.mxu0 0.0
    %541 = vmatpush.xpose.msra.mxu0 0.0
    %542 = vmatpush.xpose.msra.mxu0 0.0
    %543 = vmatpush.xpose.msra.mxu0 0.0
    %544 = vmatpush.xpose.msra.mxu0 0.0
    %545 = vmatpush.xpose.msra.mxu0 %v528
    %546 = vmatmul.f32.gmra.mxu0 %v526
    %v547 = vpop.f32.mrf.mxu0
    %v548 = vadd.f32 0.0, %v547
    %549 = vdwg.mxu0
    %v550 = vmul.f32 %v548, 0.25
    %v551 = vsel %vm470, %v550, -inf
    %552 = vmax.xlane.f32.xlu0 %v551
    %v553 = vpop.xlane.xlu0 %552
    %v554 = vsub.f32 %v550, %v553
    %v555 = vmul.f32 %v554, 1.442695
    %v556 = vpow.pop %v555
    %v557 = vsel %vm470, %v556, 0.0
    %558 = vadd.xlane.f32.xlu0 %v557
    %v559 = vpop.xlane.xlu0 %558
    %v560 = vrcp.pop %v559
    %v561 = vmul.f32 %v559, %v560
    %v562 = vsub.f32 1.0, %v561
    %v563 = vmul.f32 %v560, %v562
    %v564 = vadd.f32 %v560, %v563
    %vm565 = vweird.f32 %v559
    %vm566 = vweird.f32 %v560
    %vm567 = vmor %vm565, %vm566
    %v568 = vsel %vm567, %v560, %v564
    %v569 = vand.u32 2147483647, %v559
    %vm570 = vcmp.eq.f32.partialorder %v569, 8.507059e+37
    %v571 = vand.u32 %v559, 2147483648
    %v572 = vor.u32 1.1754944e-38, %v571
    %v573 = vsel %vm570, %v572, %v568
    %v574 = vmul.f32 %v556, %v573
    %575 = vrot.lane.b32.xlu0 %v439, 112
    %v576 = vpop.permute.xlu0 %575
    %v578 = vsel %vm495, %v574, 0
    %v580 = vsel %vm289, %v576, 0
    %582 = vmatpush.msra.mxu0 0.0
    %583 = vmatpush.msra.mxu0 0.0
    %584 = vmatpush.msra.mxu0 0.0
    %585 = vmatpush.msra.mxu0 0.0
    %586 = vmatpush.msra.mxu0 0.0
    %587 = vmatpush.msra.mxu0 0.0
    %588 = vmatpush.msra.mxu0 0.0
    %589 = vmatpush.msra.mxu0 0.0
    %590 = vmatpush.msra.mxu0 0.0
    %591 = vmatpush.msra.mxu0 0.0
    %592 = vmatpush.msra.mxu0 0.0
    %593 = vmatpush.msra.mxu0 0.0
    %594 = vmatpush.msra.mxu0 0.0
    %595 = vmatpush.msra.mxu0 0.0
    %596 = vmatpush.msra.mxu0 0.0
    %597 = vmatpush.msra.mxu0 %v580
    %598 = vmatmul.f32.gmra.mxu0 %v578
    %v599 = vpop.f32.mrf.mxu0
    %v600 = vadd.f32 0.0, %v599
    %601 = vdwg.mxu0
    %v603 = vsel %vm444, %v600, 0
    %605 = vmatpush.msra.mxu0 0.0
    %606 = vmatpush.msra.mxu0 0.0
    %607 = vmatpush.msra.mxu0 0.0
    %608 = vmatpush.msra.mxu0 0.0
    %609 = vmatpush.msra.mxu0 0.0
    %610 = vmatpush.msra.mxu0 0.0
    %611 = vmatpush.msra.mxu0 0.0
    %612 = vmatpush.msra.mxu0 0.0
    %613 = vmatpush.msra.mxu0 0.0
    %614 = vmatpush.msra.mxu0 0.0
    %615 = vmatpush.msra.mxu0 0.0
    %616 = vmatpush.msra.mxu0 0.0
    %617 = vmatpush.msra.mxu0 0.0
    %618 = vmatpush.msra.mxu0 0.0
    %619 = vmatpush.msra.mxu0 %v272
    %620 = vmatpush.msra.mxu0 %v270
    %621 = vmatmul.f32.gmra.mxu0 %v603
    %v622 = vpop.f32.mrf.mxu0
    %v623 = vadd.f32 0.0, %v622
    %624 = vdwg.mxu0
    %625 = vmatpush.msra.mxu0 0.0
    %626 = vmatpush.msra.mxu0 0.0
    %627 = vmatpush.msra.mxu0 0.0
    %628 = vmatpush.msra.mxu0 0.0
    %629 = vmatpush.msra.mxu0 0.0
    %630 = vmatpush.msra.mxu0 0.0
    %631 = vmatpush.msra.mxu0 0.0
    %632 = vmatpush.msra.mxu0 0.0
    %633 = vmatpush.msra.mxu0 0.0
    %634 = vmatpush.msra.mxu0 0.0
    %635 = vmatpush.msra.mxu0 0.0
    %636 = vmatpush.msra.mxu0 0.0
    %637 = vmatpush.msra.mxu0 0.0
    %638 = vmatpush.msra.mxu0 0.0
    %639 = vmatpush.msra.mxu0 %v273
    %640 = vmatpush.msra.mxu0 %v271
    %641 = vmatmul.f32.gmra.mxu0 %v603
    %v642 = vpop.f32.mrf.mxu0
    %v643 = vadd.f32 0.0, %v642
    %644 = vdwg.mxu0
    %v646 = vsel %vm444, %v520, 0
    %648 = vmatpush.msra.mxu0 0.0
    %649 = vmatpush.msra.mxu0 0.0
    %650 = vmatpush.msra.mxu0 0.0
    %651 = vmatpush.msra.mxu0 0.0
    %652 = vmatpush.msra.mxu0 0.0
    %653 = vmatpush.msra.mxu0 0.0
    %654 = vmatpush.msra.mxu0 0.0
    %655 = vmatpush.msra.mxu0 0.0
    %656 = vmatpush.msra.mxu0 0.0
    %657 = vmatpush.msra.mxu0 0.0
    %658 = vmatpush.msra.mxu0 0.0
    %659 = vmatpush.msra.mxu0 0.0
    %660 = vmatpush.msra.mxu0 0.0
    %661 = vmatpush.msra.mxu0 0.0
    %662 = vmatpush.msra.mxu0 %v268
    %663 = vmatpush.msra.mxu0 %v266
    %664 = vmatmul.f32.gmra.mxu0 %v646
    %v665 = vpop.f32.mrf.mxu0
    %v666 = vadd.f32 %v623, %v665
    %667 = vdwg.mxu0
    %668 = vmatpush.msra.mxu0 0.0
    %669 = vmatpush.msra.mxu0 0.0
    %670 = vmatpush.msra.mxu0 0.0
    %671 = vmatpush.msra.mxu0 0.0
    %672 = vmatpush.msra.mxu0 0.0
    %673 = vmatpush.msra.mxu0 0.0
    %674 = vmatpush.msra.mxu0 0.0
    %675 = vmatpush.msra.mxu0 0.0
    %676 = vmatpush.msra.mxu0 0.0
    %677 = vmatpush.msra.mxu0 0.0
    %678 = vmatpush.msra.mxu0 0.0
    %679 = vmatpush.msra.mxu0 0.0
    %680 = vmatpush.msra.mxu0 0.0
    %681 = vmatpush.msra.mxu0 0.0
    %682 = vmatpush.msra.mxu0 %v269
    %683 = vmatpush.msra.mxu0 %v267
    %684 = vmatmul.f32.gmra.mxu0 %v646
    %v685 = vpop.f32.mrf.mxu0
    %v686 = vadd.f32 %v643, %v685
    %687 = vdwg.mxu0
    %688 = vrot.lane.b32.xlu0 %v399, 96
    %v689 = vpop.permute.xlu0 %688
    %690 = vrot.lane.b32.xlu0 %v399, 32
    %v691 = vpop.permute.xlu0 %690
    %v692 = vsel %vm444, %v689, 0
    %v694 = vsel %vm444, %v691, 0
    %696 = vmatpush.xpose.msra.mxu0 0.0
    %697 = vmatpush.xpose.msra.mxu0 0.0
    %698 = vmatpush.xpose.msra.mxu0 0.0
    %699 = vmatpush.xpose.msra.mxu0 0.0
    %700 = vmatpush.xpose.msra.mxu0 0.0
    %701 = vmatpush.xpose.msra.mxu0 0.0
    %702 = vmatpush.xpose.msra.mxu0 0.0
    %703 = vmatpush.xpose.msra.mxu0 0.0
    %704 = vmatpush.xpose.msra.mxu0 0.0
    %705 = vmatpush.xpose.msra.mxu0 0.0
    %706 = vmatpush.xpose.msra.mxu0 0.0
    %707 = vmatpush.xpose.msra.mxu0 0.0
    %708 = vmatpush.xpose.msra.mxu0 0.0
    %709 = vmatpush.xpose.msra.mxu0 0.0
    %710 = vmatpush.xpose.msra.mxu0 0.0
    %711 = vmatpush.xpose.msra.mxu0 %v694
    %712 = vmatmul.f32.gmra.mxu0 %v692
    %v713 = vpop.f32.mrf.mxu0
    %v714 = vadd.f32 0.0, %v713
    %715 = vdwg.mxu0
    %v716 = vmul.f32 %v714, 0.25
    %v717 = vsel %vm470, %v716, -inf
    %718 = vmax.xlane.f32.xlu0 %v717
    %v719 = vpop.xlane.xlu0 %718
    %v720 = vsub.f32 %v716, %v719
    %v721 = vmul.f32 %v720, 1.442695
    %v722 = vpow.pop %v721
    %v723 = vsel %vm470, %v722, 0.0
    %724 = vadd.xlane.f32.xlu0 %v723
    %v725 = vpop.xlane.xlu0 %724
    %v726 = vrcp.pop %v725
    %v727 = vmul.f32 %v725, %v726
    %v728 = vsub.f32 1.0, %v727
    %v729 = vmul.f32 %v726, %v728
    %v730 = vadd.f32 %v726, %v729
    %vm731 = vweird.f32 %v725
    %vm732 = vweird.f32 %v726
    %vm733 = vmor %vm731, %vm732
    %v734 = vsel %vm733, %v726, %v730
    %v735 = vand.u32 2147483647, %v725
    %vm736 = vcmp.eq.f32.partialorder %v735, 8.507059e+37
    %v737 = vand.u32 %v725, 2147483648
    %v738 = vor.u32 1.1754944e-38, %v737
    %v739 = vsel %vm736, %v738, %v734
    %v740 = vmul.f32 %v722, %v739
    %741 = vrot.lane.b32.xlu0 %v439, 96
    %v742 = vpop.permute.xlu0 %741
    %v744 = vsel %vm495, %v740, 0
    %v746 = vsel %vm289, %v742, 0
    %748 = vmatpush.msra.mxu0 0.0
    %749 = vmatpush.msra.mxu0 0.0
    %750 = vmatpush.msra.mxu0 0.0
    %751 = vmatpush.msra.mxu0 0.0
    %752 = vmatpush.msra.mxu0 0.0
    %753 = vmatpush.msra.mxu0 0.0
    %754 = vmatpush.msra.mxu0 0.0
    %755 = vmatpush.msra.mxu0 0.0
    %756 = vmatpush.msra.mxu0 0.0
    %757 = vmatpush.msra.mxu0 0.0
    %758 = vmatpush.msra.mxu0 0.0
    %759 = vmatpush.msra.mxu0 0.0
    %760 = vmatpush.msra.mxu0 0.0
    %761 = vmatpush.msra.mxu0 0.0
    %762 = vmatpush.msra.mxu0 0.0
    %763 = vmatpush.msra.mxu0 %v746
    %764 = vmatmul.f32.gmra.mxu0 %v744
    %v765 = vpop.f32.mrf.mxu0
    %v766 = vadd.f32 0.0, %v765
    %767 = vdwg.mxu0
    %v769 = vsel %vm444, %v766, 0
    %771 = vmatpush.msra.mxu0 0.0
    %772 = vmatpush.msra.mxu0 0.0
    %773 = vmatpush.msra.mxu0 0.0
    %774 = vmatpush.msra.mxu0 0.0
    %775 = vmatpush.msra.mxu0 0.0
    %776 = vmatpush.msra.mxu0 0.0
    %777 = vmatpush.msra.mxu0 0.0
    %778 = vmatpush.msra.mxu0 0.0
    %779 = vmatpush.msra.mxu0 0.0
    %780 = vmatpush.msra.mxu0 0.0
    %781 = vmatpush.msra.mxu0 0.0
    %782 = vmatpush.msra.mxu0 0.0
    %783 = vmatpush.msra.mxu0 0.0
    %784 = vmatpush.msra.mxu0 0.0
    %785 = vmatpush.msra.mxu0 %v276
    %786 = vmatpush.msra.mxu0 %v274
    %787 = vmatmul.f32.gmra.mxu0 %v769
    %v788 = vpop.f32.mrf.mxu0
    %v789 = vadd.f32 0.0, %v788
    %790 = vdwg.mxu0
    %791 = vmatpush.msra.mxu0 0.0
    %792 = vmatpush.msra.mxu0 0.0
    %793 = vmatpush.msra.mxu0 0.0
    %794 = vmatpush.msra.mxu0 0.0
    %795 = vmatpush.msra.mxu0 0.0
    %796 = vmatpush.msra.mxu0 0.0
    %797 = vmatpush.msra.mxu0 0.0
    %798 = vmatpush.msra.mxu0 0.0
    %799 = vmatpush.msra.mxu0 0.0
    %800 = vmatpush.msra.mxu0 0.0
    %801 = vmatpush.msra.mxu0 0.0
    %802 = vmatpush.msra.mxu0 0.0
    %803 = vmatpush.msra.mxu0 0.0
    %804 = vmatpush.msra.mxu0 0.0
    %805 = vmatpush.msra.mxu0 %v277
    %806 = vmatpush.msra.mxu0 %v275
    %807 = vmatmul.f32.gmra.mxu0 %v769
    %v808 = vpop.f32.mrf.mxu0
    %v809 = vadd.f32 0.0, %v808
    %810 = vdwg.mxu0
    %v811 = vadd.f32 %v666, %v789
    %v812 = vadd.f32 %v686, %v809
    %813 = vrot.lane.b32.xlu0 %v399, 80
    %v814 = vpop.permute.xlu0 %813
    %815 = vrot.lane.b32.xlu0 %v399, 16
    %v816 = vpop.permute.xlu0 %815
    %v817 = vsel %vm444, %v814, 0
    %v819 = vsel %vm444, %v816, 0
    %821 = vmatpush.xpose.msra.mxu0 0.0
    %822 = vmatpush.xpose.msra.mxu0 0.0
    %823 = vmatpush.xpose.msra.mxu0 0.0
    %824 = vmatpush.xpose.msra.mxu0 0.0
    %825 = vmatpush.xpose.msra.mxu0 0.0
    %826 = vmatpush.xpose.msra.mxu0 0.0
    %827 = vmatpush.xpose.msra.mxu0 0.0
    %828 = vmatpush.xpose.msra.mxu0 0.0
    %829 = vmatpush.xpose.msra.mxu0 0.0
    %830 = vmatpush.xpose.msra.mxu0 0.0
    %831 = vmatpush.xpose.msra.mxu0 0.0
    %832 = vmatpush.xpose.msra.mxu0 0.0
    %833 = vmatpush.xpose.msra.mxu0 0.0
    %834 = vmatpush.xpose.msra.mxu0 0.0
    %835 = vmatpush.xpose.msra.mxu0 0.0
    %836 = vmatpush.xpose.msra.mxu0 %v819
    %837 = vmatmul.f32.gmra.mxu0 %v817
    %v838 = vpop.f32.mrf.mxu0
    %v839 = vadd.f32 0.0, %v838
    %840 = vdwg.mxu0
    %v841 = vmul.f32 %v839, 0.25
    %v842 = vsel %vm470, %v841, -inf
    %843 = vmax.xlane.f32.xlu0 %v842
    %v844 = vpop.xlane.xlu0 %843
    %v845 = vsub.f32 %v841, %v844
    %v846 = vmul.f32 %v845, 1.442695
    %v847 = vpow.pop %v846
    %v848 = vsel %vm470, %v847, 0.0
    %849 = vadd.xlane.f32.xlu0 %v848
    %v850 = vpop.xlane.xlu0 %849
    %v851 = vrcp.pop %v850
    %v852 = vmul.f32 %v850, %v851
    %v853 = vsub.f32 1.0, %v852
    %v854 = vmul.f32 %v851, %v853
    %v855 = vadd.f32 %v851, %v854
    %vm856 = vweird.f32 %v850
    %vm857 = vweird.f32 %v851
    %vm858 = vmor %vm856, %vm857
    %v859 = vsel %vm858, %v851, %v855
    %v860 = vand.u32 2147483647, %v850
    %vm861 = vcmp.eq.f32.partialorder %v860, 8.507059e+37
    %v862 = vand.u32 %v850, 2147483648
    %v863 = vor.u32 1.1754944e-38, %v862
    %v864 = vsel %vm861, %v863, %v859
    %v865 = vmul.f32 %v847, %v864
    %866 = vrot.lane.b32.xlu0 %v439, 80
    %v867 = vpop.permute.xlu0 %866
    %v869 = vsel %vm495, %v865, 0
    %v871 = vsel %vm289, %v867, 0
    %873 = vmatpush.msra.mxu0 0.0
    %874 = vmatpush.msra.mxu0 0.0
    %875 = vmatpush.msra.mxu0 0.0
    %876 = vmatpush.msra.mxu0 0.0
    %877 = vmatpush.msra.mxu0 0.0
    %878 = vmatpush.msra.mxu0 0.0
    %879 = vmatpush.msra.mxu0 0.0
    %880 = vmatpush.msra.mxu0 0.0
    %881 = vmatpush.msra.mxu0 0.0
    %882 = vmatpush.msra.mxu0 0.0
    %883 = vmatpush.msra.mxu0 0.0
    %884 = vmatpush.msra.mxu0 0.0
    %885 = vmatpush.msra.mxu0 0.0
    %886 = vmatpush.msra.mxu0 0.0
    %887 = vmatpush.msra.mxu0 0.0
    %888 = vmatpush.msra.mxu0 %v871
    %889 = vmatmul.f32.gmra.mxu0 %v869
    %v890 = vpop.f32.mrf.mxu0
    %v891 = vadd.f32 0.0, %v890
    %892 = vdwg.mxu0
    %v894 = vsel %vm444, %v891, 0
    %896 = vmatpush.msra.mxu0 0.0
    %897 = vmatpush.msra.mxu0 0.0
    %898 = vmatpush.msra.mxu0 0.0
    %899 = vmatpush.msra.mxu0 0.0
    %900 = vmatpush.msra.mxu0 0.0
    %901 = vmatpush.msra.mxu0 0.0
    %902 = vmatpush.msra.mxu0 0.0
    %903 = vmatpush.msra.mxu0 0.0
    %904 = vmatpush.msra.mxu0 0.0
    %905 = vmatpush.msra.mxu0 0.0
    %906 = vmatpush.msra.mxu0 0.0
    %907 = vmatpush.msra.mxu0 0.0
    %908 = vmatpush.msra.mxu0 0.0
    %909 = vmatpush.msra.mxu0 0.0
    %910 = vmatpush.msra.mxu0 %v280
    %911 = vmatpush.msra.mxu0 %v278
    %912 = vmatmul.f32.gmra.mxu0 %v894
    %v913 = vpop.f32.mrf.mxu0
    %v914 = vadd.f32 0.0, %v913
    %915 = vdwg.mxu0
    %916 = vmatpush.msra.mxu0 0.0
    %917 = vmatpush.msra.mxu0 0.0
    %918 = vmatpush.msra.mxu0 0.0
    %919 = vmatpush.msra.mxu0 0.0
    %920 = vmatpush.msra.mxu0 0.0
    %921 = vmatpush.msra.mxu0 0.0
    %922 = vmatpush.msra.mxu0 0.0
    %923 = vmatpush.msra.mxu0 0.0
    %924 = vmatpush.msra.mxu0 0.0
    %925 = vmatpush.msra.mxu0 0.0
    %926 = vmatpush.msra.mxu0 0.0
    %927 = vmatpush.msra.mxu0 0.0
    %928 = vmatpush.msra.mxu0 0.0
    %929 = vmatpush.msra.mxu0 0.0
    %930 = vmatpush.msra.mxu0 %v281
    %931 = vmatpush.msra.mxu0 %v279
    %932 = vmatmul.f32.gmra.mxu0 %v894
    %v933 = vpop.f32.mrf.mxu0
    %v934 = vadd.f32 0.0, %v933
    %935 = vdwg.mxu0
    %v936 = vadd.f32 %v811, %v914
    %v937 = vadd.f32 %v812, %v934
    %v939 = vperm.slane %v282, 0
    %v940 = vperm.slane %v282, 1
    %v943 = vadd.f32 %v936, %v939
    %v944 = vadd.f32 %v937, %v940
    %945 = vst [vmem:[#allocation1] ss:$4 sm:$0xff] %v354
    %v946 = vld.sshfl [vmem:[#allocation1] sm:$0xff pattern:$0x73625140]
    %v947 = vld.sshfl [vmem:[#allocation1 + $0x8] sm:$0xff pattern:$0x73625140]
    %v950 = vadd.f32 %v943, %v946
    %v951 = vadd.f32 %v944, %v947
    %v952 = vld [vmem:[#allocation9] sm:$0x3]
    %v953 = vld [vmem:[#allocation10] sm:$0x3]
    %v954 = vld [vmem:[#allocation12] sm:$0xff]
    %v955 = vld [vmem:[#allocation12 + $0x8] sm:$0xff]
    %v956 = vld [vmem:[#allocation12 + $0x10] sm:$0xff]
    %v957 = vld [vmem:[#allocation12 + $0x18] sm:$0xff]
    %v958 = vld [vmem:[#allocation12 + $0x20] sm:$0xff]
    %v959 = vld [vmem:[#allocation12 + $0x28] sm:$0xff]
    %v960 = vld [vmem:[#allocation12 + $0x30] sm:$0xff]
    %v961 = vld [vmem:[#allocation12 + $0x38] sm:$0xff]
    %v962 = vld [vmem:[#allocation12 + $0x40] sm:$0xff]
    %v963 = vld [vmem:[#allocation12 + $0x48] sm:$0xff]
    %v964 = vld [vmem:[#allocation12 + $0x50] sm:$0xff]
    %v965 = vld [vmem:[#allocation12 + $0x58] sm:$0xff]
    %v966 = vld [vmem:[#allocation12 + $0x60] sm:$0xff]
    %v967 = vld [vmem:[#allocation12 + $0x68] sm:$0xff]
    %v968 = vld [vmem:[#allocation12 + $0x70] sm:$0xff]
    %v969 = vld [vmem:[#allocation12 + $0x78] sm:$0xff]
    %v970 = vld [vmem:[#allocation12 + $0x80] sm:$0xff]
    %v971 = vld [vmem:[#allocation12 + $0x88] sm:$0xff]
    %v972 = vld [vmem:[#allocation12 + $0x90] sm:$0xff]
    %v973 = vld [vmem:[#allocation12 + $0x98] sm:$0xff]
    %v974 = vld [vmem:[#allocation12 + $0xa0] sm:$0xff]
    %v975 = vld [vmem:[#allocation12 + $0xa8] sm:$0xff]
    %v976 = vld [vmem:[#allocation12 + $0xb0] sm:$0xff]
    %v977 = vld [vmem:[#allocation12 + $0xb8] sm:$0xff]
    %v978 = vld [vmem:[#allocation12 + $0xc0] sm:$0xff]
    %v979 = vld [vmem:[#allocation12 + $0xc8] sm:$0xff]
    %v980 = vld [vmem:[#allocation12 + $0xd0] sm:$0xff]
    %v981 = vld [vmem:[#allocation12 + $0xd8] sm:$0xff]
    %v982 = vld [vmem:[#allocation12 + $0xe0] sm:$0xff]
    %v983 = vld [vmem:[#allocation12 + $0xe8] sm:$0xff]
    %v984 = vld [vmem:[#allocation12 + $0xf0] sm:$0xff]
    %v985 = vld [vmem:[#allocation12 + $0xf8] sm:$0xff]
    %v986 = vld [vmem:[#allocation12 + $0x100] sm:$0xff]
    %v987 = vld [vmem:[#allocation12 + $0x108] sm:$0xff]
    %v988 = vld [vmem:[#allocation12 + $0x110] sm:$0xff]
    %v989 = vld [vmem:[#allocation12 + $0x118] sm:$0xff]
    %v990 = vld [vmem:[#allocation12 + $0x120] sm:$0xff]
    %v991 = vld [vmem:[#allocation12 + $0x128] sm:$0xff]
    %v992 = vld [vmem:[#allocation12 + $0x130] sm:$0xff]
    %v993 = vld [vmem:[#allocation12 + $0x138] sm:$0xff]
    %v994 = vld [vmem:[#allocation12 + $0x140] sm:$0xff]
    %v995 = vld [vmem:[#allocation12 + $0x148] sm:$0xff]
    %v996 = vld [vmem:[#allocation12 + $0x150] sm:$0xff]
    %v997 = vld [vmem:[#allocation12 + $0x158] sm:$0xff]
    %v998 = vld [vmem:[#allocation12 + $0x160] sm:$0xff]
    %v999 = vld [vmem:[#allocation12 + $0x168] sm:$0xff]
    %v1000 = vld [vmem:[#allocation12 + $0x170] sm:$0xff]
    %v1001 = vld [vmem:[#allocation12 + $0x178] sm:$0xff]
    %v1002 = vld [vmem:[#allocation12 + $0x180] sm:$0xff]
    %v1003 = vld [vmem:[#allocation12 + $0x188] sm:$0xff]
    %v1004 = vld [vmem:[#allocation12 + $0x190] sm:$0xff]
    %v1005 = vld [vmem:[#allocation12 + $0x198] sm:$0xff]
    %v1006 = vld [vmem:[#allocation12 + $0x1a0] sm:$0xff]
    %v1007 = vld [vmem:[#allocation12 + $0x1a8] sm:$0xff]
    %v1008 = vld [vmem:[#allocation12 + $0x1b0] sm:$0xff]
    %v1009 = vld [vmem:[#allocation12 + $0x1b8] sm:$0xff]
    %v1010 = vld [vmem:[#allocation12 + $0x1c0] sm:$0xff]
    %v1011 = vld [vmem:[#allocation12 + $0x1c8] sm:$0xff]
    %v1012 = vld [vmem:[#allocation12 + $0x1d0] sm:$0xff]
    %v1013 = vld [vmem:[#allocation12 + $0x1d8] sm:$0xff]
    %v1014 = vld [vmem:[#allocation12 + $0x1e0] sm:$0xff]
    %v1015 = vld [vmem:[#allocation12 + $0x1e8] sm:$0xff]
    %v1016 = vld [vmem:[#allocation12 + $0x1f0] sm:$0xff]
    %v1017 = vld [vmem:[#allocation12 + $0x1f8] sm:$0xff]
    %v1018 = vld [vmem:[#allocation12 + $0x200] sm:$0xff]
    %v1019 = vld [vmem:[#allocation12 + $0x208] sm:$0xff]
    %v1020 = vld [vmem:[#allocation12 + $0x210] sm:$0xff]
    %v1021 = vld [vmem:[#allocation12 + $0x218] sm:$0xff]
    %v1022 = vld [vmem:[#allocation12 + $0x220] sm:$0xff]
    %v1023 = vld [vmem:[#allocation12 + $0x228] sm:$0xff]
    %v1024 = vld [vmem:[#allocation12 + $0x230] sm:$0xff]
    %v1025 = vld [vmem:[#allocation12 + $0x238] sm:$0xff]
    %v1026 = vld [vmem:[#allocation12 + $0x240] sm:$0xff]
    %v1027 = vld [vmem:[#allocation12 + $0x248] sm:$0xff]
    %v1028 = vld [vmem:[#allocation12 + $0x250] sm:$0xff]
    %v1029 = vld [vmem:[#allocation12 + $0x258] sm:$0xff]
    %v1030 = vld [vmem:[#allocation12 + $0x260] sm:$0xff]
    %v1031 = vld [vmem:[#allocation12 + $0x268] sm:$0xff]
    %v1032 = vld [vmem:[#allocation12 + $0x270] sm:$0xff]
    %v1033 = vld [vmem:[#allocation12 + $0x278] sm:$0xff]
    %v1034 = vld [vmem:[#allocation12 + $0x280] sm:$0xff]
    %v1035 = vld [vmem:[#allocation12 + $0x288] sm:$0xff]
    %v1036 = vld [vmem:[#allocation12 + $0x290] sm:$0xff]
    %v1037 = vld [vmem:[#allocation12 + $0x298] sm:$0xff]
    %v1038 = vld [vmem:[#allocation12 + $0x2a0] sm:$0xff]
    %v1039 = vld [vmem:[#allocation12 + $0x2a8] sm:$0xff]
    %v1040 = vld [vmem:[#allocation12 + $0x2b0] sm:$0xff]
    %v1041 = vld [vmem:[#allocation12 + $0x2b8] sm:$0xff]
    %v1042 = vld [vmem:[#allocation12 + $0x2c0] sm:$0xff]
    %v1043 = vld [vmem:[#allocation12 + $0x2c8] sm:$0xff]
    %v1044 = vld [vmem:[#allocation12 + $0x2d0] sm:$0xff]
    %v1045 = vld [vmem:[#allocation12 + $0x2d8] sm:$0xff]
    %v1046 = vld [vmem:[#allocation12 + $0x2e0] sm:$0xff]
    %v1047 = vld [vmem:[#allocation12 + $0x2e8] sm:$0xff]
    %v1048 = vld [vmem:[#allocation12 + $0x2f0] sm:$0xff]
    %v1049 = vld [vmem:[#allocation12 + $0x2f8] sm:$0xff]
    %v1050 = vld [vmem:[#allocation12 + $0x300] sm:$0xff]
    %v1051 = vld [vmem:[#allocation12 + $0x308] sm:$0xff]
    %v1052 = vld [vmem:[#allocation12 + $0x310] sm:$0xff]
    %v1053 = vld [vmem:[#allocation12 + $0x318] sm:$0xff]
    %v1054 = vld [vmem:[#allocation12 + $0x320] sm:$0xff]
    %v1055 = vld [vmem:[#allocation12 + $0x328] sm:$0xff]
    %v1056 = vld [vmem:[#allocation12 + $0x330] sm:$0xff]
    %v1057 = vld [vmem:[#allocation12 + $0x338] sm:$0xff]
    %v1058 = vld [vmem:[#allocation12 + $0x340] sm:$0xff]
    %v1059 = vld [vmem:[#allocation12 + $0x348] sm:$0xff]
    %v1060 = vld [vmem:[#allocation12 + $0x350] sm:$0xff]
    %v1061 = vld [vmem:[#allocation12 + $0x358] sm:$0xff]
    %v1062 = vld [vmem:[#allocation12 + $0x360] sm:$0xff]
    %v1063 = vld [vmem:[#allocation12 + $0x368] sm:$0xff]
    %v1064 = vld [vmem:[#allocation12 + $0x370] sm:$0xff]
    %v1065 = vld [vmem:[#allocation12 + $0x378] sm:$0xff]
    %v1066 = vld [vmem:[#allocation12 + $0x380] sm:$0xff]
    %v1067 = vld [vmem:[#allocation12 + $0x388] sm:$0xff]
    %v1068 = vld [vmem:[#allocation12 + $0x390] sm:$0xff]
    %v1069 = vld [vmem:[#allocation12 + $0x398] sm:$0xff]
    %v1070 = vld [vmem:[#allocation12 + $0x3a0] sm:$0xff]
    %v1071 = vld [vmem:[#allocation12 + $0x3a8] sm:$0xff]
    %v1072 = vld [vmem:[#allocation12 + $0x3b0] sm:$0xff]
    %v1073 = vld [vmem:[#allocation12 + $0x3b8] sm:$0xff]
    %v1074 = vld [vmem:[#allocation12 + $0x3c0] sm:$0xff]
    %v1075 = vld [vmem:[#allocation12 + $0x3c8] sm:$0xff]
    %v1076 = vld [vmem:[#allocation12 + $0x3d0] sm:$0xff]
    %v1077 = vld [vmem:[#allocation12 + $0x3d8] sm:$0xff]
    %v1078 = vld [vmem:[#allocation12 + $0x3e0] sm:$0xff]
    %v1079 = vld [vmem:[#allocation12 + $0x3e8] sm:$0xff]
    %v1080 = vld [vmem:[#allocation12 + $0x3f0] sm:$0xff]
    %v1081 = vld [vmem:[#allocation12 + $0x3f8] sm:$0xff]
    %v1082 = vld [vmem:[#allocation12 + $0x400] sm:$0xff]
    %v1083 = vld [vmem:[#allocation12 + $0x408] sm:$0xff]
    %v1084 = vld [vmem:[#allocation12 + $0x410] sm:$0xff]
    %v1085 = vld [vmem:[#allocation12 + $0x418] sm:$0xff]
    %v1086 = vld [vmem:[#allocation12 + $0x420] sm:$0xff]
    %v1087 = vld [vmem:[#allocation12 + $0x428] sm:$0xff]
    %v1088 = vld [vmem:[#allocation12 + $0x430] sm:$0xff]
    %v1089 = vld [vmem:[#allocation12 + $0x438] sm:$0xff]
    %v1090 = vld [vmem:[#allocation12 + $0x440] sm:$0xff]
    %v1091 = vld [vmem:[#allocation12 + $0x448] sm:$0xff]
    %v1092 = vld [vmem:[#allocation12 + $0x450] sm:$0xff]
    %v1093 = vld [vmem:[#allocation12 + $0x458] sm:$0xff]
    %v1094 = vld [vmem:[#allocation12 + $0x460] sm:$0xff]
    %v1095 = vld [vmem:[#allocation12 + $0x468] sm:$0xff]
    %v1096 = vld [vmem:[#allocation12 + $0x470] sm:$0xff]
    %v1097 = vld [vmem:[#allocation12 + $0x478] sm:$0xff]
    %v1098 = vld [vmem:[#allocation12 + $0x480] sm:$0xff]
    %v1099 = vld [vmem:[#allocation12 + $0x488] sm:$0xff]
    %v1100 = vld [vmem:[#allocation12 + $0x490] sm:$0xff]
    %v1101 = vld [vmem:[#allocation12 + $0x498] sm:$0xff]
    %v1102 = vld [vmem:[#allocation12 + $0x4a0] sm:$0xff]
    %v1103 = vld [vmem:[#allocation12 + $0x4a8] sm:$0xff]
    %v1104 = vld [vmem:[#allocation12 + $0x4b0] sm:$0xff]
    %v1105 = vld [vmem:[#allocation12 + $0x4b8] sm:$0xff]
    %v1106 = vld [vmem:[#allocation12 + $0x4c0] sm:$0xff]
    %v1107 = vld [vmem:[#allocation12 + $0x4c8] sm:$0xff]
    %v1108 = vld [vmem:[#allocation12 + $0x4d0] sm:$0xff]
    %v1109 = vld [vmem:[#allocation12 + $0x4d8] sm:$0xff]
    %v1110 = vld [vmem:[#allocation12 + $0x4e0] sm:$0xff]
    %v1111 = vld [vmem:[#allocation12 + $0x4e8] sm:$0xff]
    %v1112 = vld [vmem:[#allocation12 + $0x4f0] sm:$0xff]
    %v1113 = vld [vmem:[#allocation12 + $0x4f8] sm:$0xff]
    %v1114 = vld [vmem:[#allocation12 + $0x500] sm:$0xff]
    %v1115 = vld [vmem:[#allocation12 + $0x508] sm:$0xff]
    %v1116 = vld [vmem:[#allocation12 + $0x510] sm:$0xff]
    %v1117 = vld [vmem:[#allocation12 + $0x518] sm:$0xff]
    %v1118 = vld [vmem:[#allocation12 + $0x520] sm:$0xff]
    %v1119 = vld [vmem:[#allocation12 + $0x528] sm:$0xff]
    %v1120 = vld [vmem:[#allocation12 + $0x530] sm:$0xff]
    %v1121 = vld [vmem:[#allocation12 + $0x538] sm:$0xff]
    %v1122 = vld [vmem:[#allocation12 + $0x540] sm:$0xff]
    %v1123 = vld [vmem:[#allocation12 + $0x548] sm:$0xff]
    %v1124 = vld [vmem:[#allocation12 + $0x550] sm:$0xff]
    %v1125 = vld [vmem:[#allocation12 + $0x558] sm:$0xff]
    %v1126 = vld [vmem:[#allocation12 + $0x560] sm:$0xff]
    %v1127 = vld [vmem:[#allocation12 + $0x568] sm:$0xff]
    %v1128 = vld [vmem:[#allocation12 + $0x570] sm:$0xff]
    %v1129 = vld [vmem:[#allocation12 + $0x578] sm:$0xff]
    %v1130 = vld [vmem:[#allocation12 + $0x580] sm:$0xff]
    %v1131 = vld [vmem:[#allocation12 + $0x588] sm:$0xff]
    %v1132 = vld [vmem:[#allocation12 + $0x590] sm:$0xff]
    %v1133 = vld [vmem:[#allocation12 + $0x598] sm:$0xff]
    %v1134 = vld [vmem:[#allocation12 + $0x5a0] sm:$0xff]
    %v1135 = vld [vmem:[#allocation12 + $0x5a8] sm:$0xff]
    %v1136 = vld [vmem:[#allocation12 + $0x5b0] sm:$0xff]
    %v1137 = vld [vmem:[#allocation12 + $0x5b8] sm:$0xff]
    %v1138 = vld [vmem:[#allocation12 + $0x5c0] sm:$0xff]
    %v1139 = vld [vmem:[#allocation12 + $0x5c8] sm:$0xff]
    %v1140 = vld [vmem:[#allocation12 + $0x5d0] sm:$0xff]
    %v1141 = vld [vmem:[#allocation12 + $0x5d8] sm:$0xff]
    %v1142 = vld [vmem:[#allocation12 + $0x5e0] sm:$0xff]
    %v1143 = vld [vmem:[#allocation12 + $0x5e8] sm:$0xff]
    %v1144 = vld [vmem:[#allocation12 + $0x5f0] sm:$0xff]
    %v1145 = vld [vmem:[#allocation12 + $0x5f8] sm:$0xff]
    %v1146 = vld [vmem:[#allocation12 + $0x600] sm:$0xff]
    %v1147 = vld [vmem:[#allocation12 + $0x608] sm:$0xff]
    %v1148 = vld [vmem:[#allocation12 + $0x610] sm:$0xff]
    %v1149 = vld [vmem:[#allocation12 + $0x618] sm:$0xff]
    %v1150 = vld [vmem:[#allocation12 + $0x620] sm:$0xff]
    %v1151 = vld [vmem:[#allocation12 + $0x628] sm:$0xff]
    %v1152 = vld [vmem:[#allocation12 + $0x630] sm:$0xff]
    %v1153 = vld [vmem:[#allocation12 + $0x638] sm:$0xff]
    %v1154 = vld [vmem:[#allocation12 + $0x640] sm:$0xff]
    %v1155 = vld [vmem:[#allocation12 + $0x648] sm:$0xff]
    %v1156 = vld [vmem:[#allocation12 + $0x650] sm:$0xff]
    %v1157 = vld [vmem:[#allocation12 + $0x658] sm:$0xff]
    %v1158 = vld [vmem:[#allocation12 + $0x660] sm:$0xff]
    %v1159 = vld [vmem:[#allocation12 + $0x668] sm:$0xff]
    %v1160 = vld [vmem:[#allocation12 + $0x670] sm:$0xff]
    %v1161 = vld [vmem:[#allocation12 + $0x678] sm:$0xff]
    %v1162 = vld [vmem:[#allocation12 + $0x680] sm:$0xff]
    %v1163 = vld [vmem:[#allocation12 + $0x688] sm:$0xff]
    %v1164 = vld [vmem:[#allocation12 + $0x690] sm:$0xff]
    %v1165 = vld [vmem:[#allocation12 + $0x698] sm:$0xff]
    %v1166 = vld [vmem:[#allocation12 + $0x6a0] sm:$0xff]
    %v1167 = vld [vmem:[#allocation12 + $0x6a8] sm:$0xff]
    %v1168 = vld [vmem:[#allocation12 + $0x6b0] sm:$0xff]
    %v1169 = vld [vmem:[#allocation12 + $0x6b8] sm:$0xff]
    %v1170 = vld [vmem:[#allocation12 + $0x6c0] sm:$0xff]
    %v1171 = vld [vmem:[#allocation12 + $0x6c8] sm:$0xff]
    %v1172 = vld [vmem:[#allocation12 + $0x6d0] sm:$0xff]
    %v1173 = vld [vmem:[#allocation12 + $0x6d8] sm:$0xff]
    %v1174 = vld [vmem:[#allocation12 + $0x6e0] sm:$0xff]
    %v1175 = vld [vmem:[#allocation12 + $0x6e8] sm:$0xff]
    %v1176 = vld [vmem:[#allocation12 + $0x6f0] sm:$0xff]
    %v1177 = vld [vmem:[#allocation12 + $0x6f8] sm:$0xff]
    %v1178 = vld [vmem:[#allocation12 + $0x700] sm:$0xff]
    %v1179 = vld [vmem:[#allocation12 + $0x708] sm:$0xff]
    %v1180 = vld [vmem:[#allocation12 + $0x710] sm:$0xff]
    %v1181 = vld [vmem:[#allocation12 + $0x718] sm:$0xff]
    %v1182 = vld [vmem:[#allocation12 + $0x720] sm:$0xff]
    %v1183 = vld [vmem:[#allocation12 + $0x728] sm:$0xff]
    %v1184 = vld [vmem:[#allocation12 + $0x730] sm:$0xff]
    %v1185 = vld [vmem:[#allocation12 + $0x738] sm:$0xff]
    %v1186 = vld [vmem:[#allocation12 + $0x740] sm:$0xff]
    %v1187 = vld [vmem:[#allocation12 + $0x748] sm:$0xff]
    %v1188 = vld [vmem:[#allocation12 + $0x750] sm:$0xff]
    %v1189 = vld [vmem:[#allocation12 + $0x758] sm:$0xff]
    %v1190 = vld [vmem:[#allocation12 + $0x760] sm:$0xff]
    %v1191 = vld [vmem:[#allocation12 + $0x768] sm:$0xff]
    %v1192 = vld [vmem:[#allocation12 + $0x770] sm:$0xff]
    %v1193 = vld [vmem:[#allocation12 + $0x778] sm:$0xff]
    %v1194 = vld [vmem:[#allocation12 + $0x780] sm:$0xff]
    %v1195 = vld [vmem:[#allocation12 + $0x788] sm:$0xff]
    %v1196 = vld [vmem:[#allocation12 + $0x790] sm:$0xff]
    %v1197 = vld [vmem:[#allocation12 + $0x798] sm:$0xff]
    %v1198 = vld [vmem:[#allocation12 + $0x7a0] sm:$0xff]
    %v1199 = vld [vmem:[#allocation12 + $0x7a8] sm:$0xff]
    %v1200 = vld [vmem:[#allocation12 + $0x7b0] sm:$0xff]
    %v1201 = vld [vmem:[#allocation12 + $0x7b8] sm:$0xff]
    %v1202 = vld [vmem:[#allocation12 + $0x7c0] sm:$0xff]
    %v1203 = vld [vmem:[#allocation12 + $0x7c8] sm:$0xff]
    %v1204 = vld [vmem:[#allocation12 + $0x7d0] sm:$0xff]
    %v1205 = vld [vmem:[#allocation12 + $0x7d8] sm:$0xff]
    %v1206 = vld [vmem:[#allocation12 + $0x7e0] sm:$0xff]
    %v1207 = vld [vmem:[#allocation12 + $0x7e8] sm:$0xff]
    %v1208 = vld [vmem:[#allocation12 + $0x7f0] sm:$0xff]
    %v1209 = vld [vmem:[#allocation12 + $0x7f8] sm:$0xff]
    %v1210 = vld [vmem:[#allocation12 + $0x800] sm:$0xff]
    %v1211 = vld [vmem:[#allocation12 + $0x808] sm:$0xff]
    %v1212 = vld [vmem:[#allocation12 + $0x810] sm:$0xff]
    %v1213 = vld [vmem:[#allocation12 + $0x818] sm:$0xff]
    %v1214 = vld [vmem:[#allocation12 + $0x820] sm:$0xff]
    %v1215 = vld [vmem:[#allocation12 + $0x828] sm:$0xff]
    %v1216 = vld [vmem:[#allocation12 + $0x830] sm:$0xff]
    %v1217 = vld [vmem:[#allocation12 + $0x838] sm:$0xff]
    %v1218 = vld [vmem:[#allocation12 + $0x840] sm:$0xff]
    %v1219 = vld [vmem:[#allocation12 + $0x848] sm:$0xff]
    %v1220 = vld [vmem:[#allocation12 + $0x850] sm:$0xff]
    %v1221 = vld [vmem:[#allocation12 + $0x858] sm:$0xff]
    %v1222 = vld [vmem:[#allocation12 + $0x860] sm:$0xff]
    %v1223 = vld [vmem:[#allocation12 + $0x868] sm:$0xff]
    %v1224 = vld [vmem:[#allocation12 + $0x870] sm:$0xff]
    %v1225 = vld [vmem:[#allocation12 + $0x878] sm:$0xff]
    %v1226 = vld [vmem:[#allocation12 + $0x880] sm:$0xff]
    %v1227 = vld [vmem:[#allocation12 + $0x888] sm:$0xff]
    %v1228 = vld [vmem:[#allocation12 + $0x890] sm:$0xff]
    %v1229 = vld [vmem:[#allocation12 + $0x898] sm:$0xff]
    %v1230 = vld [vmem:[#allocation12 + $0x8a0] sm:$0xff]
    %v1231 = vld [vmem:[#allocation12 + $0x8a8] sm:$0xff]
    %v1232 = vld [vmem:[#allocation12 + $0x8b0] sm:$0xff]
    %v1233 = vld [vmem:[#allocation12 + $0x8b8] sm:$0xff]
    %v1234 = vld [vmem:[#allocation12 + $0x8c0] sm:$0xff]
    %v1235 = vld [vmem:[#allocation12 + $0x8c8] sm:$0xff]
    %v1236 = vld [vmem:[#allocation12 + $0x8d0] sm:$0xff]
    %v1237 = vld [vmem:[#allocation12 + $0x8d8] sm:$0xff]
    %v1238 = vld [vmem:[#allocation12 + $0x8e0] sm:$0xff]
    %v1239 = vld [vmem:[#allocation12 + $0x8e8] sm:$0xff]
    %v1240 = vld [vmem:[#allocation12 + $0x8f0] sm:$0xff]
    %v1241 = vld [vmem:[#allocation12 + $0x8f8] sm:$0xff]
    %v1242 = vld [vmem:[#allocation12 + $0x900] sm:$0xff]
    %v1243 = vld [vmem:[#allocation12 + $0x908] sm:$0xff]
    %v1244 = vld [vmem:[#allocation12 + $0x910] sm:$0xff]
    %v1245 = vld [vmem:[#allocation12 + $0x918] sm:$0xff]
    %v1246 = vld [vmem:[#allocation12 + $0x920] sm:$0xff]
    %v1247 = vld [vmem:[#allocation12 + $0x928] sm:$0xff]
    %v1248 = vld [vmem:[#allocation12 + $0x930] sm:$0xff]
    %v1249 = vld [vmem:[#allocation12 + $0x938] sm:$0xff]
    %v1250 = vld [vmem:[#allocation12 + $0x940] sm:$0xff]
    %v1251 = vld [vmem:[#allocation12 + $0x948] sm:$0xff]
    %v1252 = vld [vmem:[#allocation12 + $0x950] sm:$0xff]
    %v1253 = vld [vmem:[#allocation12 + $0x958] sm:$0xff]
    %v1254 = vld [vmem:[#allocation12 + $0x960] sm:$0xff]
    %v1255 = vld [vmem:[#allocation12 + $0x968] sm:$0xff]
    %v1256 = vld [vmem:[#allocation12 + $0x970] sm:$0xff]
    %v1257 = vld [vmem:[#allocation12 + $0x978] sm:$0xff]
    %v1258 = vld [vmem:[#allocation12 + $0x980] sm:$0xff]
    %v1259 = vld [vmem:[#allocation12 + $0x988] sm:$0xff]
    %v1260 = vld [vmem:[#allocation12 + $0x990] sm:$0xff]
    %v1261 = vld [vmem:[#allocation12 + $0x998] sm:$0xff]
    %v1262 = vld [vmem:[#allocation12 + $0x9a0] sm:$0xff]
    %v1263 = vld [vmem:[#allocation12 + $0x9a8] sm:$0xff]
    %v1264 = vld [vmem:[#allocation12 + $0x9b0] sm:$0xff]
    %v1265 = vld [vmem:[#allocation12 + $0x9b8] sm:$0xff]
    %v1266 = vld [vmem:[#allocation12 + $0x9c0] sm:$0xff]
    %v1267 = vld [vmem:[#allocation12 + $0x9c8] sm:$0xff]
    %v1268 = vld [vmem:[#allocation12 + $0x9d0] sm:$0xff]
    %v1269 = vld [vmem:[#allocation12 + $0x9d8] sm:$0xff]
    %v1270 = vld [vmem:[#allocation12 + $0x9e0] sm:$0xff]
    %v1271 = vld [vmem:[#allocation12 + $0x9e8] sm:$0xff]
    %v1272 = vld [vmem:[#allocation12 + $0x9f0] sm:$0xff]
    %v1273 = vld [vmem:[#allocation12 + $0x9f8] sm:$0xff]
    %v1274 = vld [vmem:[#allocation12 + $0xa00] sm:$0xff]
    %v1275 = vld [vmem:[#allocation12 + $0xa08] sm:$0xff]
    %v1276 = vld [vmem:[#allocation12 + $0xa10] sm:$0xff]
    %v1277 = vld [vmem:[#allocation12 + $0xa18] sm:$0xff]
    %v1278 = vld [vmem:[#allocation12 + $0xa20] sm:$0xff]
    %v1279 = vld [vmem:[#allocation12 + $0xa28] sm:$0xff]
    %v1280 = vld [vmem:[#allocation12 + $0xa30] sm:$0xff]
    %v1281 = vld [vmem:[#allocation12 + $0xa38] sm:$0xff]
    %v1282 = vld [vmem:[#allocation12 + $0xa40] sm:$0xff]
    %v1283 = vld [vmem:[#allocation12 + $0xa48] sm:$0xff]
    %v1284 = vld [vmem:[#allocation12 + $0xa50] sm:$0xff]
    %v1285 = vld [vmem:[#allocation12 + $0xa58] sm:$0xff]
    %v1286 = vld [vmem:[#allocation12 + $0xa60] sm:$0xff]
    %v1287 = vld [vmem:[#allocation12 + $0xa68] sm:$0xff]
    %v1288 = vld [vmem:[#allocation12 + $0xa70] sm:$0xff]
    %v1289 = vld [vmem:[#allocation12 + $0xa78] sm:$0xff]
    %v1290 = vld [vmem:[#allocation12 + $0xa80] sm:$0xff]
    %v1291 = vld [vmem:[#allocation12 + $0xa88] sm:$0xff]
    %v1292 = vld [vmem:[#allocation12 + $0xa90] sm:$0xff]
    %v1293 = vld [vmem:[#allocation12 + $0xa98] sm:$0xff]
    %v1294 = vld [vmem:[#allocation12 + $0xaa0] sm:$0xff]
    %v1295 = vld [vmem:[#allocation12 + $0xaa8] sm:$0xff]
    %v1296 = vld [vmem:[#allocation12 + $0xab0] sm:$0xff]
    %v1297 = vld [vmem:[#allocation12 + $0xab8] sm:$0xff]
    %v1298 = vld [vmem:[#allocation12 + $0xac0] sm:$0xff]
    %v1299 = vld [vmem:[#allocation12 + $0xac8] sm:$0xff]
    %v1300 = vld [vmem:[#allocation12 + $0xad0] sm:$0xff]
    %v1301 = vld [vmem:[#allocation12 + $0xad8] sm:$0xff]
    %v1302 = vld [vmem:[#allocation12 + $0xae0] sm:$0xff]
    %v1303 = vld [vmem:[#allocation12 + $0xae8] sm:$0xff]
    %v1304 = vld [vmem:[#allocation12 + $0xaf0] sm:$0xff]
    %v1305 = vld [vmem:[#allocation12 + $0xaf8] sm:$0xff]
    %v1306 = vld [vmem:[#allocation12 + $0xb00] sm:$0xff]
    %v1307 = vld [vmem:[#allocation12 + $0xb08] sm:$0xff]
    %v1308 = vld [vmem:[#allocation12 + $0xb10] sm:$0xff]
    %v1309 = vld [vmem:[#allocation12 + $0xb18] sm:$0xff]
    %v1310 = vld [vmem:[#allocation12 + $0xb20] sm:$0xff]
    %v1311 = vld [vmem:[#allocation12 + $0xb28] sm:$0xff]
    %v1312 = vld [vmem:[#allocation12 + $0xb30] sm:$0xff]
    %v1313 = vld [vmem:[#allocation12 + $0xb38] sm:$0xff]
    %v1314 = vld [vmem:[#allocation12 + $0xb40] sm:$0xff]
    %v1315 = vld [vmem:[#allocation12 + $0xb48] sm:$0xff]
    %v1316 = vld [vmem:[#allocation12 + $0xb50] sm:$0xff]
    %v1317 = vld [vmem:[#allocation12 + $0xb58] sm:$0xff]
    %v1318 = vld [vmem:[#allocation12 + $0xb60] sm:$0xff]
    %v1319 = vld [vmem:[#allocation12 + $0xb68] sm:$0xff]
    %v1320 = vld [vmem:[#allocation12 + $0xb70] sm:$0xff]
    %v1321 = vld [vmem:[#allocation12 + $0xb78] sm:$0xff]
    %v1322 = vld [vmem:[#allocation12 + $0xb80] sm:$0xff]
    %v1323 = vld [vmem:[#allocation12 + $0xb88] sm:$0xff]
    %v1324 = vld [vmem:[#allocation12 + $0xb90] sm:$0xff]
    %v1325 = vld [vmem:[#allocation12 + $0xb98] sm:$0xff]
    %v1326 = vld [vmem:[#allocation12 + $0xba0] sm:$0xff]
    %v1327 = vld [vmem:[#allocation12 + $0xba8] sm:$0xff]
    %v1328 = vld [vmem:[#allocation12 + $0xbb0] sm:$0xff]
    %v1329 = vld [vmem:[#allocation12 + $0xbb8] sm:$0xff]
    %v1330 = vld [vmem:[#allocation12 + $0xbc0] sm:$0xff]
    %v1331 = vld [vmem:[#allocation12 + $0xbc8] sm:$0xff]
    %v1332 = vld [vmem:[#allocation12 + $0xbd0] sm:$0xff]
    %v1333 = vld [vmem:[#allocation12 + $0xbd8] sm:$0xff]
    %v1334 = vld [vmem:[#allocation12 + $0xbe0] sm:$0xff]
    %v1335 = vld [vmem:[#allocation12 + $0xbe8] sm:$0xff]
    %v1336 = vld [vmem:[#allocation12 + $0xbf0] sm:$0xff]
    %v1337 = vld [vmem:[#allocation12 + $0xbf8] sm:$0xff]
    %v1338 = vld [vmem:[#allocation12 + $0xc00] sm:$0xff]
    %v1339 = vld [vmem:[#allocation12 + $0xc08] sm:$0xff]
    %v1340 = vld [vmem:[#allocation12 + $0xc10] sm:$0xff]
    %v1341 = vld [vmem:[#allocation12 + $0xc18] sm:$0xff]
    %v1342 = vld [vmem:[#allocation12 + $0xc20] sm:$0xff]
    %v1343 = vld [vmem:[#allocation12 + $0xc28] sm:$0xff]
    %v1344 = vld [vmem:[#allocation12 + $0xc30] sm:$0xff]
    %v1345 = vld [vmem:[#allocation12 + $0xc38] sm:$0xff]
    %v1346 = vld [vmem:[#allocation12 + $0xc40] sm:$0xff]
    %v1347 = vld [vmem:[#allocation12 + $0xc48] sm:$0xff]
    %v1348 = vld [vmem:[#allocation12 + $0xc50] sm:$0xff]
    %v1349 = vld [vmem:[#allocation12 + $0xc58] sm:$0xff]
    %v1350 = vld [vmem:[#allocation12 + $0xc60] sm:$0xff]
    %v1351 = vld [vmem:[#allocation12 + $0xc68] sm:$0xff]
    %v1352 = vld [vmem:[#allocation12 + $0xc70] sm:$0xff]
    %v1353 = vld [vmem:[#allocation12 + $0xc78] sm:$0xff]
    %v1354 = vld [vmem:[#allocation12 + $0xc80] sm:$0xff]
    %v1355 = vld [vmem:[#allocation12 + $0xc88] sm:$0xff]
    %v1356 = vld [vmem:[#allocation12 + $0xc90] sm:$0xff]
    %v1357 = vld [vmem:[#allocation12 + $0xc98] sm:$0xff]
    %v1358 = vld [vmem:[#allocation12 + $0xca0] sm:$0xff]
    %v1359 = vld [vmem:[#allocation12 + $0xca8] sm:$0xff]
    %v1360 = vld [vmem:[#allocation12 + $0xcb0] sm:$0xff]
    %v1361 = vld [vmem:[#allocation12 + $0xcb8] sm:$0xff]
    %v1362 = vld [vmem:[#allocation12 + $0xcc0] sm:$0xff]
    %v1363 = vld [vmem:[#allocation12 + $0xcc8] sm:$0xff]
    %v1364 = vld [vmem:[#allocation12 + $0xcd0] sm:$0xff]
    %v1365 = vld [vmem:[#allocation12 + $0xcd8] sm:$0xff]
    %v1366 = vld [vmem:[#allocation12 + $0xce0] sm:$0xff]
    %v1367 = vld [vmem:[#allocation12 + $0xce8] sm:$0xff]
    %v1368 = vld [vmem:[#allocation12 + $0xcf0] sm:$0xff]
    %v1369 = vld [vmem:[#allocation12 + $0xcf8] sm:$0xff]
    %v1370 = vld [vmem:[#allocation12 + $0xd00] sm:$0xff]
    %v1371 = vld [vmem:[#allocation12 + $0xd08] sm:$0xff]
    %v1372 = vld [vmem:[#allocation12 + $0xd10] sm:$0xff]
    %v1373 = vld [vmem:[#allocation12 + $0xd18] sm:$0xff]
    %v1374 = vld [vmem:[#allocation12 + $0xd20] sm:$0xff]
    %v1375 = vld [vmem:[#allocation12 + $0xd28] sm:$0xff]
    %v1376 = vld [vmem:[#allocation12 + $0xd30] sm:$0xff]
    %v1377 = vld [vmem:[#allocation12 + $0xd38] sm:$0xff]
    %v1378 = vld [vmem:[#allocation12 + $0xd40] sm:$0xff]
    %v1379 = vld [vmem:[#allocation12 + $0xd48] sm:$0xff]
    %v1380 = vld [vmem:[#allocation12 + $0xd50] sm:$0xff]
    %v1381 = vld [vmem:[#allocation12 + $0xd58] sm:$0xff]
    %v1382 = vld [vmem:[#allocation12 + $0xd60] sm:$0xff]
    %v1383 = vld [vmem:[#allocation12 + $0xd68] sm:$0xff]
    %v1384 = vld [vmem:[#allocation12 + $0xd70] sm:$0xff]
    %v1385 = vld [vmem:[#allocation12 + $0xd78] sm:$0xff]
    %v1386 = vld [vmem:[#allocation12 + $0xd80] sm:$0xff]
    %v1387 = vld [vmem:[#allocation12 + $0xd88] sm:$0xff]
    %v1388 = vld [vmem:[#allocation12 + $0xd90] sm:$0xff]
    %v1389 = vld [vmem:[#allocation12 + $0xd98] sm:$0xff]
    %v1390 = vld [vmem:[#allocation12 + $0xda0] sm:$0xff]
    %v1391 = vld [vmem:[#allocation12 + $0xda8] sm:$0xff]
    %v1392 = vld [vmem:[#allocation12 + $0xdb0] sm:$0xff]
    %v1393 = vld [vmem:[#allocation12 + $0xdb8] sm:$0xff]
    %v1394 = vld [vmem:[#allocation12 + $0xdc0] sm:$0xff]
    %v1395 = vld [vmem:[#allocation12 + $0xdc8] sm:$0xff]
    %v1396 = vld [vmem:[#allocation12 + $0xdd0] sm:$0xff]
    %v1397 = vld [vmem:[#allocation12 + $0xdd8] sm:$0xff]
    %v1398 = vld [vmem:[#allocation12 + $0xde0] sm:$0xff]
    %v1399 = vld [vmem:[#allocation12 + $0xde8] sm:$0xff]
    %v1400 = vld [vmem:[#allocation12 + $0xdf0] sm:$0xff]
    %v1401 = vld [vmem:[#allocation12 + $0xdf8] sm:$0xff]
    %v1402 = vld [vmem:[#allocation12 + $0xe00] sm:$0xff]
    %v1403 = vld [vmem:[#allocation12 + $0xe08] sm:$0xff]
    %v1404 = vld [vmem:[#allocation12 + $0xe10] sm:$0xff]
    %v1405 = vld [vmem:[#allocation12 + $0xe18] sm:$0xff]
    %v1406 = vld [vmem:[#allocation12 + $0xe20] sm:$0xff]
    %v1407 = vld [vmem:[#allocation12 + $0xe28] sm:$0xff]
    %v1408 = vld [vmem:[#allocation12 + $0xe30] sm:$0xff]
    %v1409 = vld [vmem:[#allocation12 + $0xe38] sm:$0xff]
    %v1410 = vld [vmem:[#allocation12 + $0xe40] sm:$0xff]
    %v1411 = vld [vmem:[#allocation12 + $0xe48] sm:$0xff]
    %v1412 = vld [vmem:[#allocation12 + $0xe50] sm:$0xff]
    %v1413 = vld [vmem:[#allocation12 + $0xe58] sm:$0xff]
    %v1414 = vld [vmem:[#allocation12 + $0xe60] sm:$0xff]
    %v1415 = vld [vmem:[#allocation12 + $0xe68] sm:$0xff]
    %v1416 = vld [vmem:[#allocation12 + $0xe70] sm:$0xff]
    %v1417 = vld [vmem:[#allocation12 + $0xe78] sm:$0xff]
    %v1418 = vld [vmem:[#allocation12 + $0xe80] sm:$0xff]
    %v1419 = vld [vmem:[#allocation12 + $0xe88] sm:$0xff]
    %v1420 = vld [vmem:[#allocation12 + $0xe90] sm:$0xff]
    %v1421 = vld [vmem:[#allocation12 + $0xe98] sm:$0xff]
    %v1422 = vld [vmem:[#allocation12 + $0xea0] sm:$0xff]
    %v1423 = vld [vmem:[#allocation12 + $0xea8] sm:$0xff]
    %v1424 = vld [vmem:[#allocation12 + $0xeb0] sm:$0xff]
    %v1425 = vld [vmem:[#allocation12 + $0xeb8] sm:$0xff]
    %v1426 = vld [vmem:[#allocation12 + $0xec0] sm:$0xff]
    %v1427 = vld [vmem:[#allocation12 + $0xec8] sm:$0xff]
    %v1428 = vld [vmem:[#allocation12 + $0xed0] sm:$0xff]
    %v1429 = vld [vmem:[#allocation12 + $0xed8] sm:$0xff]
    %v1430 = vld [vmem:[#allocation12 + $0xee0] sm:$0xff]
    %v1431 = vld [vmem:[#allocation12 + $0xee8] sm:$0xff]
    %v1432 = vld [vmem:[#allocation12 + $0xef0] sm:$0xff]
    %v1433 = vld [vmem:[#allocation12 + $0xef8] sm:$0xff]
    %v1434 = vld [vmem:[#allocation12 + $0xf00] sm:$0xff]
    %v1435 = vld [vmem:[#allocation12 + $0xf08] sm:$0xff]
    %v1436 = vld [vmem:[#allocation12 + $0xf10] sm:$0xff]
    %v1437 = vld [vmem:[#allocation12 + $0xf18] sm:$0xff]
    %v1438 = vld [vmem:[#allocation12 + $0xf20] sm:$0xff]
    %v1439 = vld [vmem:[#allocation12 + $0xf28] sm:$0xff]
    %v1440 = vld [vmem:[#allocation12 + $0xf30] sm:$0xff]
    %v1441 = vld [vmem:[#allocation12 + $0xf38] sm:$0xff]
    %v1442 = vld [vmem:[#allocation12 + $0xf40] sm:$0xff]
    %v1443 = vld [vmem:[#allocation12 + $0xf48] sm:$0xff]
    %v1444 = vld [vmem:[#allocation12 + $0xf50] sm:$0xff]
    %v1445 = vld [vmem:[#allocation12 + $0xf58] sm:$0xff]
    %v1446 = vld [vmem:[#allocation12 + $0xf60] sm:$0xff]
    %v1447 = vld [vmem:[#allocation12 + $0xf68] sm:$0xff]
    %v1448 = vld [vmem:[#allocation12 + $0xf70] sm:$0xff]
    %v1449 = vld [vmem:[#allocation12 + $0xf78] sm:$0xff]
    %v1450 = vld [vmem:[#allocation12 + $0xf80] sm:$0xff]
    %v1451 = vld [vmem:[#allocation12 + $0xf88] sm:$0xff]
    %v1452 = vld [vmem:[#allocation12 + $0xf90] sm:$0xff]
    %v1453 = vld [vmem:[#allocation12 + $0xf98] sm:$0xff]
    %v1454 = vld [vmem:[#allocation12 + $0xfa0] sm:$0xff]
    %v1455 = vld [vmem:[#allocation12 + $0xfa8] sm:$0xff]
    %v1456 = vld [vmem:[#allocation12 + $0xfb0] sm:$0xff]
    %v1457 = vld [vmem:[#allocation12 + $0xfb8] sm:$0xff]
    %v1458 = vld [vmem:[#allocation12 + $0xfc0] sm:$0xff]
    %v1459 = vld [vmem:[#allocation12 + $0xfc8] sm:$0xff]
    %v1460 = vld [vmem:[#allocation12 + $0xfd0] sm:$0xff]
    %v1461 = vld [vmem:[#allocation12 + $0xfd8] sm:$0xff]
    %v1462 = vld [vmem:[#allocation12 + $0xfe0] sm:$0xff]
    %v1463 = vld [vmem:[#allocation12 + $0xfe8] sm:$0xff]
    %v1464 = vld [vmem:[#allocation12 + $0xff0] sm:$0xff]
    %v1465 = vld [vmem:[#allocation12 + $0xff8] sm:$0xff]
    %v1466 = vld [vmem:[#allocation13] sm:$0xff]
    %v1467 = vld [vmem:[#allocation13 + $0x8] sm:$0xff]
    %v1468 = vld [vmem:[#allocation15] sm:$0xff]
    %v1469 = vld [vmem:[#allocation15 + $0x8] sm:$0xff]
    %v1470 = vld [vmem:[#allocation15 + $0x10] sm:$0xff]
    %v1471 = vld [vmem:[#allocation15 + $0x18] sm:$0xff]
    %v1472 = vld [vmem:[#allocation15 + $0x20] sm:$0xff]
    %v1473 = vld [vmem:[#allocation15 + $0x28] sm:$0xff]
    %v1474 = vld [vmem:[#allocation15 + $0x30] sm:$0xff]
    %v1475 = vld [vmem:[#allocation15 + $0x38] sm:$0xff]
    %v1476 = vld [vmem:[#allocation15 + $0x40] sm:$0xff]
    %v1477 = vld [vmem:[#allocation15 + $0x48] sm:$0xff]
    %v1478 = vld [vmem:[#allocation15 + $0x50] sm:$0xff]
    %v1479 = vld [vmem:[#allocation15 + $0x58] sm:$0xff]
    %v1480 = vld [vmem:[#allocation15 + $0x60] sm:$0xff]
    %v1481 = vld [vmem:[#allocation15 + $0x68] sm:$0xff]
    %v1482 = vld [vmem:[#allocation15 + $0x70] sm:$0xff]
    %v1483 = vld [vmem:[#allocation15 + $0x78] sm:$0xff]
    %v1484 = vld [vmem:[#allocation15 + $0x80] sm:$0xff]
    %v1485 = vld [vmem:[#allocation15 + $0x88] sm:$0xff]
    %v1486 = vld [vmem:[#allocation15 + $0x90] sm:$0xff]
    %v1487 = vld [vmem:[#allocation15 + $0x98] sm:$0xff]
    %v1488 = vld [vmem:[#allocation15 + $0xa0] sm:$0xff]
    %v1489 = vld [vmem:[#allocation15 + $0xa8] sm:$0xff]
    %v1490 = vld [vmem:[#allocation15 + $0xb0] sm:$0xff]
    %v1491 = vld [vmem:[#allocation15 + $0xb8] sm:$0xff]
    %v1492 = vld [vmem:[#allocation15 + $0xc0] sm:$0xff]
    %v1493 = vld [vmem:[#allocation15 + $0xc8] sm:$0xff]
    %v1494 = vld [vmem:[#allocation15 + $0xd0] sm:$0xff]
    %v1495 = vld [vmem:[#allocation15 + $0xd8] sm:$0xff]
    %v1496 = vld [vmem:[#allocation15 + $0xe0] sm:$0xff]
    %v1497 = vld [vmem:[#allocation15 + $0xe8] sm:$0xff]
    %v1498 = vld [vmem:[#allocation15 + $0xf0] sm:$0xff]
    %v1499 = vld [vmem:[#allocation15 + $0xf8] sm:$0xff]
    %v1500 = vld [vmem:[#allocation15 + $0x100] sm:$0xff]
    %v1501 = vld [vmem:[#allocation15 + $0x108] sm:$0xff]
    %v1502 = vld [vmem:[#allocation15 + $0x110] sm:$0xff]
    %v1503 = vld [vmem:[#allocation15 + $0x118] sm:$0xff]
    %v1504 = vld [vmem:[#allocation15 + $0x120] sm:$0xff]
    %v1505 = vld [vmem:[#allocation15 + $0x128] sm:$0xff]
    %v1506 = vld [vmem:[#allocation15 + $0x130] sm:$0xff]
    %v1507 = vld [vmem:[#allocation15 + $0x138] sm:$0xff]
    %v1508 = vld [vmem:[#allocation15 + $0x140] sm:$0xff]
    %v1509 = vld [vmem:[#allocation15 + $0x148] sm:$0xff]
    %v1510 = vld [vmem:[#allocation15 + $0x150] sm:$0xff]
    %v1511 = vld [vmem:[#allocation15 + $0x158] sm:$0xff]
    %v1512 = vld [vmem:[#allocation15 + $0x160] sm:$0xff]
    %v1513 = vld [vmem:[#allocation15 + $0x168] sm:$0xff]
    %v1514 = vld [vmem:[#allocation15 + $0x170] sm:$0xff]
    %v1515 = vld [vmem:[#allocation15 + $0x178] sm:$0xff]
    %v1516 = vld [vmem:[#allocation15 + $0x180] sm:$0xff]
    %v1517 = vld [vmem:[#allocation15 + $0x188] sm:$0xff]
    %v1518 = vld [vmem:[#allocation15 + $0x190] sm:$0xff]
    %v1519 = vld [vmem:[#allocation15 + $0x198] sm:$0xff]
    %v1520 = vld [vmem:[#allocation15 + $0x1a0] sm:$0xff]
    %v1521 = vld [vmem:[#allocation15 + $0x1a8] sm:$0xff]
    %v1522 = vld [vmem:[#allocation15 + $0x1b0] sm:$0xff]
    %v1523 = vld [vmem:[#allocation15 + $0x1b8] sm:$0xff]
    %v1524 = vld [vmem:[#allocation15 + $0x1c0] sm:$0xff]
    %v1525 = vld [vmem:[#allocation15 + $0x1c8] sm:$0xff]
    %v1526 = vld [vmem:[#allocation15 + $0x1d0] sm:$0xff]
    %v1527 = vld [vmem:[#allocation15 + $0x1d8] sm:$0xff]
    %v1528 = vld [vmem:[#allocation15 + $0x1e0] sm:$0xff]
    %v1529 = vld [vmem:[#allocation15 + $0x1e8] sm:$0xff]
    %v1530 = vld [vmem:[#allocation15 + $0x1f0] sm:$0xff]
    %v1531 = vld [vmem:[#allocation15 + $0x1f8] sm:$0xff]
    %v1532 = vld [vmem:[#allocation15 + $0x200] sm:$0xff]
    %v1533 = vld [vmem:[#allocation15 + $0x208] sm:$0xff]
    %v1534 = vld [vmem:[#allocation15 + $0x210] sm:$0xff]
    %v1535 = vld [vmem:[#allocation15 + $0x218] sm:$0xff]
    %v1536 = vld [vmem:[#allocation15 + $0x220] sm:$0xff]
    %v1537 = vld [vmem:[#allocation15 + $0x228] sm:$0xff]
    %v1538 = vld [vmem:[#allocation15 + $0x230] sm:$0xff]
    %v1539 = vld [vmem:[#allocation15 + $0x238] sm:$0xff]
    %v1540 = vld [vmem:[#allocation15 + $0x240] sm:$0xff]
    %v1541 = vld [vmem:[#allocation15 + $0x248] sm:$0xff]
    %v1542 = vld [vmem:[#allocation15 + $0x250] sm:$0xff]
    %v1543 = vld [vmem:[#allocation15 + $0x258] sm:$0xff]
    %v1544 = vld [vmem:[#allocation15 + $0x260] sm:$0xff]
    %v1545 = vld [vmem:[#allocation15 + $0x268] sm:$0xff]
    %v1546 = vld [vmem:[#allocation15 + $0x270] sm:$0xff]
    %v1547 = vld [vmem:[#allocation15 + $0x278] sm:$0xff]
    %v1548 = vld [vmem:[#allocation15 + $0x280] sm:$0xff]
    %v1549 = vld [vmem:[#allocation15 + $0x288] sm:$0xff]
    %v1550 = vld [vmem:[#allocation15 + $0x290] sm:$0xff]
    %v1551 = vld [vmem:[#allocation15 + $0x298] sm:$0xff]
    %v1552 = vld [vmem:[#allocation15 + $0x2a0] sm:$0xff]
    %v1553 = vld [vmem:[#allocation15 + $0x2a8] sm:$0xff]
    %v1554 = vld [vmem:[#allocation15 + $0x2b0] sm:$0xff]
    %v1555 = vld [vmem:[#allocation15 + $0x2b8] sm:$0xff]
    %v1556 = vld [vmem:[#allocation15 + $0x2c0] sm:$0xff]
    %v1557 = vld [vmem:[#allocation15 + $0x2c8] sm:$0xff]
    %v1558 = vld [vmem:[#allocation15 + $0x2d0] sm:$0xff]
    %v1559 = vld [vmem:[#allocation15 + $0x2d8] sm:$0xff]
    %v1560 = vld [vmem:[#allocation15 + $0x2e0] sm:$0xff]
    %v1561 = vld [vmem:[#allocation15 + $0x2e8] sm:$0xff]
    %v1562 = vld [vmem:[#allocation15 + $0x2f0] sm:$0xff]
    %v1563 = vld [vmem:[#allocation15 + $0x2f8] sm:$0xff]
    %v1564 = vld [vmem:[#allocation15 + $0x300] sm:$0xff]
    %v1565 = vld [vmem:[#allocation15 + $0x308] sm:$0xff]
    %v1566 = vld [vmem:[#allocation15 + $0x310] sm:$0xff]
    %v1567 = vld [vmem:[#allocation15 + $0x318] sm:$0xff]
    %v1568 = vld [vmem:[#allocation15 + $0x320] sm:$0xff]
    %v1569 = vld [vmem:[#allocation15 + $0x328] sm:$0xff]
    %v1570 = vld [vmem:[#allocation15 + $0x330] sm:$0xff]
    %v1571 = vld [vmem:[#allocation15 + $0x338] sm:$0xff]
    %v1572 = vld [vmem:[#allocation15 + $0x340] sm:$0xff]
    %v1573 = vld [vmem:[#allocation15 + $0x348] sm:$0xff]
    %v1574 = vld [vmem:[#allocation15 + $0x350] sm:$0xff]
    %v1575 = vld [vmem:[#allocation15 + $0x358] sm:$0xff]
    %v1576 = vld [vmem:[#allocation15 + $0x360] sm:$0xff]
    %v1577 = vld [vmem:[#allocation15 + $0x368] sm:$0xff]
    %v1578 = vld [vmem:[#allocation15 + $0x370] sm:$0xff]
    %v1579 = vld [vmem:[#allocation15 + $0x378] sm:$0xff]
    %v1580 = vld [vmem:[#allocation15 + $0x380] sm:$0xff]
    %v1581 = vld [vmem:[#allocation15 + $0x388] sm:$0xff]
    %v1582 = vld [vmem:[#allocation15 + $0x390] sm:$0xff]
    %v1583 = vld [vmem:[#allocation15 + $0x398] sm:$0xff]
    %v1584 = vld [vmem:[#allocation15 + $0x3a0] sm:$0xff]
    %v1585 = vld [vmem:[#allocation15 + $0x3a8] sm:$0xff]
    %v1586 = vld [vmem:[#allocation15 + $0x3b0] sm:$0xff]
    %v1587 = vld [vmem:[#allocation15 + $0x3b8] sm:$0xff]
    %v1588 = vld [vmem:[#allocation15 + $0x3c0] sm:$0xff]
    %v1589 = vld [vmem:[#allocation15 + $0x3c8] sm:$0xff]
    %v1590 = vld [vmem:[#allocation15 + $0x3d0] sm:$0xff]
    %v1591 = vld [vmem:[#allocation15 + $0x3d8] sm:$0xff]
    %v1592 = vld [vmem:[#allocation15 + $0x3e0] sm:$0xff]
    %v1593 = vld [vmem:[#allocation15 + $0x3e8] sm:$0xff]
    %v1594 = vld [vmem:[#allocation15 + $0x3f0] sm:$0xff]
    %v1595 = vld [vmem:[#allocation15 + $0x3f8] sm:$0xff]
    %v1596 = vld [vmem:[#allocation15 + $0x400] sm:$0xff]
    %v1597 = vld [vmem:[#allocation15 + $0x408] sm:$0xff]
    %v1598 = vld [vmem:[#allocation15 + $0x410] sm:$0xff]
    %v1599 = vld [vmem:[#allocation15 + $0x418] sm:$0xff]
    %v1600 = vld [vmem:[#allocation15 + $0x420] sm:$0xff]
    %v1601 = vld [vmem:[#allocation15 + $0x428] sm:$0xff]
    %v1602 = vld [vmem:[#allocation15 + $0x430] sm:$0xff]
    %v1603 = vld [vmem:[#allocation15 + $0x438] sm:$0xff]
    %v1604 = vld [vmem:[#allocation15 + $0x440] sm:$0xff]
    %v1605 = vld [vmem:[#allocation15 + $0x448] sm:$0xff]
    %v1606 = vld [vmem:[#allocation15 + $0x450] sm:$0xff]
    %v1607 = vld [vmem:[#allocation15 + $0x458] sm:$0xff]
    %v1608 = vld [vmem:[#allocation15 + $0x460] sm:$0xff]
    %v1609 = vld [vmem:[#allocation15 + $0x468] sm:$0xff]
    %v1610 = vld [vmem:[#allocation15 + $0x470] sm:$0xff]
    %v1611 = vld [vmem:[#allocation15 + $0x478] sm:$0xff]
    %v1612 = vld [vmem:[#allocation15 + $0x480] sm:$0xff]
    %v1613 = vld [vmem:[#allocation15 + $0x488] sm:$0xff]
    %v1614 = vld [vmem:[#allocation15 + $0x490] sm:$0xff]
    %v1615 = vld [vmem:[#allocation15 + $0x498] sm:$0xff]
    %v1616 = vld [vmem:[#allocation15 + $0x4a0] sm:$0xff]
    %v1617 = vld [vmem:[#allocation15 + $0x4a8] sm:$0xff]
    %v1618 = vld [vmem:[#allocation15 + $0x4b0] sm:$0xff]
    %v1619 = vld [vmem:[#allocation15 + $0x4b8] sm:$0xff]
    %v1620 = vld [vmem:[#allocation15 + $0x4c0] sm:$0xff]
    %v1621 = vld [vmem:[#allocation15 + $0x4c8] sm:$0xff]
    %v1622 = vld [vmem:[#allocation15 + $0x4d0] sm:$0xff]
    %v1623 = vld [vmem:[#allocation15 + $0x4d8] sm:$0xff]
    %v1624 = vld [vmem:[#allocation15 + $0x4e0] sm:$0xff]
    %v1625 = vld [vmem:[#allocation15 + $0x4e8] sm:$0xff]
    %v1626 = vld [vmem:[#allocation15 + $0x4f0] sm:$0xff]
    %v1627 = vld [vmem:[#allocation15 + $0x4f8] sm:$0xff]
    %v1628 = vld [vmem:[#allocation15 + $0x500] sm:$0xff]
    %v1629 = vld [vmem:[#allocation15 + $0x508] sm:$0xff]
    %v1630 = vld [vmem:[#allocation15 + $0x510] sm:$0xff]
    %v1631 = vld [vmem:[#allocation15 + $0x518] sm:$0xff]
    %v1632 = vld [vmem:[#allocation15 + $0x520] sm:$0xff]
    %v1633 = vld [vmem:[#allocation15 + $0x528] sm:$0xff]
    %v1634 = vld [vmem:[#allocation15 + $0x530] sm:$0xff]
    %v1635 = vld [vmem:[#allocation15 + $0x538] sm:$0xff]
    %v1636 = vld [vmem:[#allocation15 + $0x540] sm:$0xff]
    %v1637 = vld [vmem:[#allocation15 + $0x548] sm:$0xff]
    %v1638 = vld [vmem:[#allocation15 + $0x550] sm:$0xff]
    %v1639 = vld [vmem:[#allocation15 + $0x558] sm:$0xff]
    %v1640 = vld [vmem:[#allocation15 + $0x560] sm:$0xff]
    %v1641 = vld [vmem:[#allocation15 + $0x568] sm:$0xff]
    %v1642 = vld [vmem:[#allocation15 + $0x570] sm:$0xff]
    %v1643 = vld [vmem:[#allocation15 + $0x578] sm:$0xff]
    %v1644 = vld [vmem:[#allocation15 + $0x580] sm:$0xff]
    %v1645 = vld [vmem:[#allocation15 + $0x588] sm:$0xff]
    %v1646 = vld [vmem:[#allocation15 + $0x590] sm:$0xff]
    %v1647 = vld [vmem:[#allocation15 + $0x598] sm:$0xff]
    %v1648 = vld [vmem:[#allocation15 + $0x5a0] sm:$0xff]
    %v1649 = vld [vmem:[#allocation15 + $0x5a8] sm:$0xff]
    %v1650 = vld [vmem:[#allocation15 + $0x5b0] sm:$0xff]
    %v1651 = vld [vmem:[#allocation15 + $0x5b8] sm:$0xff]
    %v1652 = vld [vmem:[#allocation15 + $0x5c0] sm:$0xff]
    %v1653 = vld [vmem:[#allocation15 + $0x5c8] sm:$0xff]
    %v1654 = vld [vmem:[#allocation15 + $0x5d0] sm:$0xff]
    %v1655 = vld [vmem:[#allocation15 + $0x5d8] sm:$0xff]
    %v1656 = vld [vmem:[#allocation15 + $0x5e0] sm:$0xff]
    %v1657 = vld [vmem:[#allocation15 + $0x5e8] sm:$0xff]
    %v1658 = vld [vmem:[#allocation15 + $0x5f0] sm:$0xff]
    %v1659 = vld [vmem:[#allocation15 + $0x5f8] sm:$0xff]
    %v1660 = vld [vmem:[#allocation15 + $0x600] sm:$0xff]
    %v1661 = vld [vmem:[#allocation15 + $0x608] sm:$0xff]
    %v1662 = vld [vmem:[#allocation15 + $0x610] sm:$0xff]
    %v1663 = vld [vmem:[#allocation15 + $0x618] sm:$0xff]
    %v1664 = vld [vmem:[#allocation15 + $0x620] sm:$0xff]
    %v1665 = vld [vmem:[#allocation15 + $0x628] sm:$0xff]
    %v1666 = vld [vmem:[#allocation15 + $0x630] sm:$0xff]
    %v1667 = vld [vmem:[#allocation15 + $0x638] sm:$0xff]
    %v1668 = vld [vmem:[#allocation15 + $0x640] sm:$0xff]
    %v1669 = vld [vmem:[#allocation15 + $0x648] sm:$0xff]
    %v1670 = vld [vmem:[#allocation15 + $0x650] sm:$0xff]
    %v1671 = vld [vmem:[#allocation15 + $0x658] sm:$0xff]
    %v1672 = vld [vmem:[#allocation15 + $0x660] sm:$0xff]
    %v1673 = vld [vmem:[#allocation15 + $0x668] sm:$0xff]
    %v1674 = vld [vmem:[#allocation15 + $0x670] sm:$0xff]
    %v1675 = vld [vmem:[#allocation15 + $0x678] sm:$0xff]
    %v1676 = vld [vmem:[#allocation15 + $0x680] sm:$0xff]
    %v1677 = vld [vmem:[#allocation15 + $0x688] sm:$0xff]
    %v1678 = vld [vmem:[#allocation15 + $0x690] sm:$0xff]
    %v1679 = vld [vmem:[#allocation15 + $0x698] sm:$0xff]
    %v1680 = vld [vmem:[#allocation15 + $0x6a0] sm:$0xff]
    %v1681 = vld [vmem:[#allocation15 + $0x6a8] sm:$0xff]
    %v1682 = vld [vmem:[#allocation15 + $0x6b0] sm:$0xff]
    %v1683 = vld [vmem:[#allocation15 + $0x6b8] sm:$0xff]
    %v1684 = vld [vmem:[#allocation15 + $0x6c0] sm:$0xff]
    %v1685 = vld [vmem:[#allocation15 + $0x6c8] sm:$0xff]
    %v1686 = vld [vmem:[#allocation15 + $0x6d0] sm:$0xff]
    %v1687 = vld [vmem:[#allocation15 + $0x6d8] sm:$0xff]
    %v1688 = vld [vmem:[#allocation15 + $0x6e0] sm:$0xff]
    %v1689 = vld [vmem:[#allocation15 + $0x6e8] sm:$0xff]
    %v1690 = vld [vmem:[#allocation15 + $0x6f0] sm:$0xff]
    %v1691 = vld [vmem:[#allocation15 + $0x6f8] sm:$0xff]
    %v1692 = vld [vmem:[#allocation15 + $0x700] sm:$0xff]
    %v1693 = vld [vmem:[#allocation15 + $0x708] sm:$0xff]
    %v1694 = vld [vmem:[#allocation15 + $0x710] sm:$0xff]
    %v1695 = vld [vmem:[#allocation15 + $0x718] sm:$0xff]
    %v1696 = vld [vmem:[#allocation15 + $0x720] sm:$0xff]
    %v1697 = vld [vmem:[#allocation15 + $0x728] sm:$0xff]
    %v1698 = vld [vmem:[#allocation15 + $0x730] sm:$0xff]
    %v1699 = vld [vmem:[#allocation15 + $0x738] sm:$0xff]
    %v1700 = vld [vmem:[#allocation15 + $0x740] sm:$0xff]
    %v1701 = vld [vmem:[#allocation15 + $0x748] sm:$0xff]
    %v1702 = vld [vmem:[#allocation15 + $0x750] sm:$0xff]
    %v1703 = vld [vmem:[#allocation15 + $0x758] sm:$0xff]
    %v1704 = vld [vmem:[#allocation15 + $0x760] sm:$0xff]
    %v1705 = vld [vmem:[#allocation15 + $0x768] sm:$0xff]
    %v1706 = vld [vmem:[#allocation15 + $0x770] sm:$0xff]
    %v1707 = vld [vmem:[#allocation15 + $0x778] sm:$0xff]
    %v1708 = vld [vmem:[#allocation15 + $0x780] sm:$0xff]
    %v1709 = vld [vmem:[#allocation15 + $0x788] sm:$0xff]
    %v1710 = vld [vmem:[#allocation15 + $0x790] sm:$0xff]
    %v1711 = vld [vmem:[#allocation15 + $0x798] sm:$0xff]
    %v1712 = vld [vmem:[#allocation15 + $0x7a0] sm:$0xff]
    %v1713 = vld [vmem:[#allocation15 + $0x7a8] sm:$0xff]
    %v1714 = vld [vmem:[#allocation15 + $0x7b0] sm:$0xff]
    %v1715 = vld [vmem:[#allocation15 + $0x7b8] sm:$0xff]
    %v1716 = vld [vmem:[#allocation15 + $0x7c0] sm:$0xff]
    %v1717 = vld [vmem:[#allocation15 + $0x7c8] sm:$0xff]
    %v1718 = vld [vmem:[#allocation15 + $0x7d0] sm:$0xff]
    %v1719 = vld [vmem:[#allocation15 + $0x7d8] sm:$0xff]
    %v1720 = vld [vmem:[#allocation15 + $0x7e0] sm:$0xff]
    %v1721 = vld [vmem:[#allocation15 + $0x7e8] sm:$0xff]
    %v1722 = vld [vmem:[#allocation15 + $0x7f0] sm:$0xff]
    %v1723 = vld [vmem:[#allocation15 + $0x7f8] sm:$0xff]
    %v1724 = vld [vmem:[#allocation16] sm:$0x3]
    %v1725 = vld [vmem:[#allocation18] sm:$0x3]
    %v1726 = vsel %vm289, %v950, 0.0
    %v1727 = vsel %vm289, %v951, 0.0
    %v1728 = vadd.f32 %v1726, %v1727
    %1729 = vadd.xlane.f32.xlu0 %v1728
    %v1730 = vpop.xlane.xlu0 %1729
    %v1731 = vmul.f32 %v1730, %v301
    %v1732 = vsub.f32 %v950, %v1731
    %v1733 = vsub.f32 %v951, %v1731
    %v1734 = vmul.f32 %v1732, %v1732
    %v1735 = vmul.f32 %v1733, %v1733
    %v1736 = vsel %vm289, %v1734, 0.0
    %v1737 = vsel %vm289, %v1735, 0.0
    %v1738 = vadd.f32 %v1736, %v1737
    %1739 = vadd.xlane.f32.xlu0 %v1738
    %v1740 = vpop.xlane.xlu0 %1739
    %v1741 = vmul.f32 %v1740, %v301
    %v1742 = vadd.f32 %v1741, 1e-05
    %v1743 = vrsqrt.pop %v1742
    %v1744 = vmul.f32 %v1743, %v1742
    %v1745 = vmul.f32 %v1744, %v1743
    %v1746 = vmul.f32 0.5, %v1745
    %v1747 = vsub.f32 1.5, %v1746
    %v1748 = vmul.f32 %v1743, %v1747
    %vm1749 = vweird.f32 %v1742
    %vm1750 = vweird.f32 %v1743
    %vm1751 = vmor %vm1749, %vm1750
    %v1752 = vsel %vm1751, %v1743, %v1748
    %v1753 = vmul.f32 %v1732, %v1752
    %v1754 = vmul.f32 %v1733, %v1752
    %v1756 = vperm.slane %v952, 0
    %v1757 = vperm.slane %v952, 1
    %v1760 = vmul.f32 %v1753, %v1756
    %v1761 = vmul.f32 %v1754, %v1757
    %v1763 = vperm.slane %v953, 0
    %v1764 = vperm.slane %v953, 1
    %v1767 = vadd.f32 %v1760, %v1763
    %v1768 = vadd.f32 %v1761, %v1764
    %v1771 = vperm.slane %v1466, 0
    %v1772 = vperm.slane %v1466, 1
    %v1773 = vperm.slane %v1466, 2
    %v1774 = vperm.slane %v1466, 3
    %v1775 = vperm.slane %v1466, 4
    %v1776 = vperm.slane %v1466, 5
    %v1777 = vperm.slane %v1466, 6
    %v1778 = vperm.slane %v1466, 7
    %v1779 = vperm.slane %v1467, 0
    %v1780 = vperm.slane %v1467, 1
    %v1781 = vperm.slane %v1467, 2
    %v1782 = vperm.slane %v1467, 3
    %v1783 = vperm.slane %v1467, 4
    %v1784 = vperm.slane %v1467, 5
    %v1785 = vperm.slane %v1467, 6
    %v1786 = vperm.slane %v1467, 7
    %1803 = vmatpush.msra.mxu0 %v1194
    %1804 = vmatpush.msra.mxu0 %v1178
    %1805 = vmatpush.msra.mxu0 %v1162
    %1806 = vmatpush.msra.mxu0 %v1146
    %1807 = vmatpush.msra.mxu0 %v1130
    %1808 = vmatpush.msra.mxu0 %v1114
    %1809 = vmatpush.msra.mxu0 %v1098
    %1810 = vmatpush.msra.mxu0 %v1082
    %1811 = vmatpush.msra.mxu0 %v1066
    %1812 = vmatpush.msra.mxu0 %v1050
    %1813 = vmatpush.msra.mxu0 %v1034
    %1814 = vmatpush.msra.mxu0 %v1018
    %1815 = vmatpush.msra.mxu0 %v1002
    %1816 = vmatpush.msra.mxu0 %v986
    %1817 = vmatpush.msra.mxu0 %v970
    %1818 = vmatpush.msra.mxu0 %v954
    %1819 = vmatmul.f32.gmra.mxu0 %v1767
    %v1820 = vpop.f32.mrf.mxu0
    %v1821 = vadd.f32 %v1771, %v1820
    %1822 = vdwg.mxu0
    %1823 = vmatpush.msra.mxu0 %v1450
    %1824 = vmatpush.msra.mxu0 %v1434
    %1825 = vmatpush.msra.mxu0 %v1418
    %1826 = vmatpush.msra.mxu0 %v1402
    %1827 = vmatpush.msra.mxu0 %v1386
    %1828 = vmatpush.msra.mxu0 %v1370
    %1829 = vmatpush.msra.mxu0 %v1354
    %1830 = vmatpush.msra.mxu0 %v1338
    %1831 = vmatpush.msra.mxu0 %v1322
    %1832 = vmatpush.msra.mxu0 %v1306
    %1833 = vmatpush.msra.mxu0 %v1290
    %1834 = vmatpush.msra.mxu0 %v1274
    %1835 = vmatpush.msra.mxu0 %v1258
    %1836 = vmatpush.msra.mxu0 %v1242
    %1837 = vmatpush.msra.mxu0 %v1226
    %1838 = vmatpush.msra.mxu0 %v1210
    %1839 = vmatmul.f32.gmra.mxu0 %v1768
    %v1840 = vpop.f32.mrf.mxu0
    %v1841 = vadd.f32 %v1821, %v1840
    %1842 = vdwg.mxu0
    %1843 = vmatpush.msra.mxu0 %v1195
    %1844 = vmatpush.msra.mxu0 %v1179
    %1845 = vmatpush.msra.mxu0 %v1163
    %1846 = vmatpush.msra.mxu0 %v1147
    %1847 = vmatpush.msra.mxu0 %v1131
    %1848 = vmatpush.msra.mxu0 %v1115
    %1849 = vmatpush.msra.mxu0 %v1099
    %1850 = vmatpush.msra.mxu0 %v1083
    %1851 = vmatpush.msra.mxu0 %v1067
    %1852 = vmatpush.msra.mxu0 %v1051
    %1853 = vmatpush.msra.mxu0 %v1035
    %1854 = vmatpush.msra.mxu0 %v1019
    %1855 = vmatpush.msra.mxu0 %v1003
    %1856 = vmatpush.msra.mxu0 %v987
    %1857 = vmatpush.msra.mxu0 %v971
    %1858 = vmatpush.msra.mxu0 %v955
    %1859 = vmatmul.f32.gmra.mxu0 %v1767
    %v1860 = vpop.f32.mrf.mxu0
    %v1861 = vadd.f32 %v1772, %v1860
    %1862 = vdwg.mxu0
    %1863 = vmatpush.msra.mxu0 %v1451
    %1864 = vmatpush.msra.mxu0 %v1435
    %1865 = vmatpush.msra.mxu0 %v1419
    %1866 = vmatpush.msra.mxu0 %v1403
    %1867 = vmatpush.msra.mxu0 %v1387
    %1868 = vmatpush.msra.mxu0 %v1371
    %1869 = vmatpush.msra.mxu0 %v1355
    %1870 = vmatpush.msra.mxu0 %v1339
    %1871 = vmatpush.msra.mxu0 %v1323
    %1872 = vmatpush.msra.mxu0 %v1307
    %1873 = vmatpush.msra.mxu0 %v1291
    %1874 = vmatpush.msra.mxu0 %v1275
    %1875 = vmatpush.msra.mxu0 %v1259
    %1876 = vmatpush.msra.mxu0 %v1243
    %1877 = vmatpush.msra.mxu0 %v1227
    %1878 = vmatpush.msra.mxu0 %v1211
    %1879 = vmatmul.f32.gmra.mxu0 %v1768
    %v1880 = vpop.f32.mrf.mxu0
    %v1881 = vadd.f32 %v1861, %v1880
    %1882 = vdwg.mxu0
    %1883 = vmatpush.msra.mxu0 %v1196
    %1884 = vmatpush.msra.mxu0 %v1180
    %1885 = vmatpush.msra.mxu0 %v1164
    %1886 = vmatpush.msra.mxu0 %v1148
    %1887 = vmatpush.msra.mxu0 %v1132
    %1888 = vmatpush.msra.mxu0 %v1116
    %1889 = vmatpush.msra.mxu0 %v1100
    %1890 = vmatpush.msra.mxu0 %v1084
    %1891 = vmatpush.msra.mxu0 %v1068
    %1892 = vmatpush.msra.mxu0 %v1052
    %1893 = vmatpush.msra.mxu0 %v1036
    %1894 = vmatpush.msra.mxu0 %v1020
    %1895 = vmatpush.msra.mxu0 %v1004
    %1896 = vmatpush.msra.mxu0 %v988
    %1897 = vmatpush.msra.mxu0 %v972
    %1898 = vmatpush.msra.mxu0 %v956
    %1899 = vmatmul.f32.gmra.mxu0 %v1767
    %v1900 = vpop.f32.mrf.mxu0
    %v1901 = vadd.f32 %v1773, %v1900
    %1902 = vdwg.mxu0
    %1903 = vmatpush.msra.mxu0 %v1452
    %1904 = vmatpush.msra.mxu0 %v1436
    %1905 = vmatpush.msra.mxu0 %v1420
    %1906 = vmatpush.msra.mxu0 %v1404
    %1907 = vmatpush.msra.mxu0 %v1388
    %1908 = vmatpush.msra.mxu0 %v1372
    %1909 = vmatpush.msra.mxu0 %v1356
    %1910 = vmatpush.msra.mxu0 %v1340
    %1911 = vmatpush.msra.mxu0 %v1324
    %1912 = vmatpush.msra.mxu0 %v1308
    %1913 = vmatpush.msra.mxu0 %v1292
    %1914 = vmatpush.msra.mxu0 %v1276
    %1915 = vmatpush.msra.mxu0 %v1260
    %1916 = vmatpush.msra.mxu0 %v1244
    %1917 = vmatpush.msra.mxu0 %v1228
    %1918 = vmatpush.msra.mxu0 %v1212
    %1919 = vmatmul.f32.gmra.mxu0 %v1768
    %v1920 = vpop.f32.mrf.mxu0
    %v1921 = vadd.f32 %v1901, %v1920
    %1922 = vdwg.mxu0
    %1923 = vmatpush.msra.mxu0 %v1197
    %1924 = vmatpush.msra.mxu0 %v1181
    %1925 = vmatpush.msra.mxu0 %v1165
    %1926 = vmatpush.msra.mxu0 %v1149
    %1927 = vmatpush.msra.mxu0 %v1133
    %1928 = vmatpush.msra.mxu0 %v1117
    %1929 = vmatpush.msra.mxu0 %v1101
    %1930 = vmatpush.msra.mxu0 %v1085
    %1931 = vmatpush.msra.mxu0 %v1069
    %1932 = vmatpush.msra.mxu0 %v1053
    %1933 = vmatpush.msra.mxu0 %v1037
    %1934 = vmatpush.msra.mxu0 %v1021
    %1935 = vmatpush.msra.mxu0 %v1005
    %1936 = vmatpush.msra.mxu0 %v989
    %1937 = vmatpush.msra.mxu0 %v973
    %1938 = vmatpush.msra.mxu0 %v957
    %1939 = vmatmul.f32.gmra.mxu0 %v1767
    %v1940 = vpop.f32.mrf.mxu0
    %v1941 = vadd.f32 %v1774, %v1940
    %1942 = vdwg.mxu0
    %1943 = vmatpush.msra.mxu0 %v1453
    %1944 = vmatpush.msra.mxu0 %v1437
    %1945 = vmatpush.msra.mxu0 %v1421
    %1946 = vmatpush.msra.mxu0 %v1405
    %1947 = vmatpush.msra.mxu0 %v1389
    %1948 = vmatpush.msra.mxu0 %v1373
    %1949 = vmatpush.msra.mxu0 %v1357
    %1950 = vmatpush.msra.mxu0 %v1341
    %1951 = vmatpush.msra.mxu0 %v1325
    %1952 = vmatpush.msra.mxu0 %v1309
    %1953 = vmatpush.msra.mxu0 %v1293
    %1954 = vmatpush.msra.mxu0 %v1277
    %1955 = vmatpush.msra.mxu0 %v1261
    %1956 = vmatpush.msra.mxu0 %v1245
    %1957 = vmatpush.msra.mxu0 %v1229
    %1958 = vmatpush.msra.mxu0 %v1213
    %1959 = vmatmul.f32.gmra.mxu0 %v1768
    %v1960 = vpop.f32.mrf.mxu0
    %v1961 = vadd.f32 %v1941, %v1960
    %1962 = vdwg.mxu0
    %1963 = vmatpush.msra.mxu0 %v1198
    %1964 = vmatpush.msra.mxu0 %v1182
    %1965 = vmatpush.msra.mxu0 %v1166
    %1966 = vmatpush.msra.mxu0 %v1150
    %1967 = vmatpush.msra.mxu0 %v1134
    %1968 = vmatpush.msra.mxu0 %v1118
    %1969 = vmatpush.msra.mxu0 %v1102
    %1970 = vmatpush.msra.mxu0 %v1086
    %1971 = vmatpush.msra.mxu0 %v1070
    %1972 = vmatpush.msra.mxu0 %v1054
    %1973 = vmatpush.msra.mxu0 %v1038
    %1974 = vmatpush.msra.mxu0 %v1022
    %1975 = vmatpush.msra.mxu0 %v1006
    %1976 = vmatpush.msra.mxu0 %v990
    %1977 = vmatpush.msra.mxu0 %v974
    %1978 = vmatpush.msra.mxu0 %v958
    %1979 = vmatmul.f32.gmra.mxu0 %v1767
    %v1980 = vpop.f32.mrf.mxu0
    %v1981 = vadd.f32 %v1775, %v1980
    %1982 = vdwg.mxu0
    %1983 = vmatpush.msra.mxu0 %v1454
    %1984 = vmatpush.msra.mxu0 %v1438
    %1985 = vmatpush.msra.mxu0 %v1422
    %1986 = vmatpush.msra.mxu0 %v1406
    %1987 = vmatpush.msra.mxu0 %v1390
    %1988 = vmatpush.msra.mxu0 %v1374
    %1989 = vmatpush.msra.mxu0 %v1358
    %1990 = vmatpush.msra.mxu0 %v1342
    %1991 = vmatpush.msra.mxu0 %v1326
    %1992 = vmatpush.msra.mxu0 %v1310
    %1993 = vmatpush.msra.mxu0 %v1294
    %1994 = vmatpush.msra.mxu0 %v1278
    %1995 = vmatpush.msra.mxu0 %v1262
    %1996 = vmatpush.msra.mxu0 %v1246
    %1997 = vmatpush.msra.mxu0 %v1230
    %1998 = vmatpush.msra.mxu0 %v1214
    %1999 = vmatmul.f32.gmra.mxu0 %v1768
    %v2000 = vpop.f32.mrf.mxu0
    %v2001 = vadd.f32 %v1981, %v2000
    %2002 = vdwg.mxu0
    %2003 = vmatpush.msra.mxu0 %v1199
    %2004 = vmatpush.msra.mxu0 %v1183
    %2005 = vmatpush.msra.mxu0 %v1167
    %2006 = vmatpush.msra.mxu0 %v1151
    %2007 = vmatpush.msra.mxu0 %v1135
    %2008 = vmatpush.msra.mxu0 %v1119
    %2009 = vmatpush.msra.mxu0 %v1103
    %2010 = vmatpush.msra.mxu0 %v1087
    %2011 = vmatpush.msra.mxu0 %v1071
    %2012 = vmatpush.msra.mxu0 %v1055
    %2013 = vmatpush.msra.mxu0 %v1039
    %2014 = vmatpush.msra.mxu0 %v1023
    %2015 = vmatpush.msra.mxu0 %v1007
    %2016 = vmatpush.msra.mxu0 %v991
    %2017 = vmatpush.msra.mxu0 %v975
    %2018 = vmatpush.msra.mxu0 %v959
    %2019 = vmatmul.f32.gmra.mxu0 %v1767
    %v2020 = vpop.f32.mrf.mxu0
    %v2021 = vadd.f32 %v1776, %v2020
    %2022 = vdwg.mxu0
    %2023 = vmatpush.msra.mxu0 %v1455
    %2024 = vmatpush.msra.mxu0 %v1439
    %2025 = vmatpush.msra.mxu0 %v1423
    %2026 = vmatpush.msra.mxu0 %v1407
    %2027 = vmatpush.msra.mxu0 %v1391
    %2028 = vmatpush.msra.mxu0 %v1375
    %2029 = vmatpush.msra.mxu0 %v1359
    %2030 = vmatpush.msra.mxu0 %v1343
    %2031 = vmatpush.msra.mxu0 %v1327
    %2032 = vmatpush.msra.mxu0 %v1311
    %2033 = vmatpush.msra.mxu0 %v1295
    %2034 = vmatpush.msra.mxu0 %v1279
    %2035 = vmatpush.msra.mxu0 %v1263
    %2036 = vmatpush.msra.mxu0 %v1247
    %2037 = vmatpush.msra.mxu0 %v1231
    %2038 = vmatpush.msra.mxu0 %v1215
    %2039 = vmatmul.f32.gmra.mxu0 %v1768
    %v2040 = vpop.f32.mrf.mxu0
    %v2041 = vadd.f32 %v2021, %v2040
    %2042 = vdwg.mxu0
    %2043 = vmatpush.msra.mxu0 %v1200
    %2044 = vmatpush.msra.mxu0 %v1184
    %2045 = vmatpush.msra.mxu0 %v1168
    %2046 = vmatpush.msra.mxu0 %v1152
    %2047 = vmatpush.msra.mxu0 %v1136
    %2048 = vmatpush.msra.mxu0 %v1120
    %2049 = vmatpush.msra.mxu0 %v1104
    %2050 = vmatpush.msra.mxu0 %v1088
    %2051 = vmatpush.msra.mxu0 %v1072
    %2052 = vmatpush.msra.mxu0 %v1056
    %2053 = vmatpush.msra.mxu0 %v1040
    %2054 = vmatpush.msra.mxu0 %v1024
    %2055 = vmatpush.msra.mxu0 %v1008
    %2056 = vmatpush.msra.mxu0 %v992
    %2057 = vmatpush.msra.mxu0 %v976
    %2058 = vmatpush.msra.mxu0 %v960
    %2059 = vmatmul.f32.gmra.mxu0 %v1767
    %v2060 = vpop.f32.mrf.mxu0
    %v2061 = vadd.f32 %v1777, %v2060
    %2062 = vdwg.mxu0
    %2063 = vmatpush.msra.mxu0 %v1456
    %2064 = vmatpush.msra.mxu0 %v1440
    %2065 = vmatpush.msra.mxu0 %v1424
    %2066 = vmatpush.msra.mxu0 %v1408
    %2067 = vmatpush.msra.mxu0 %v1392
    %2068 = vmatpush.msra.mxu0 %v1376
    %2069 = vmatpush.msra.mxu0 %v1360
    %2070 = vmatpush.msra.mxu0 %v1344
    %2071 = vmatpush.msra.mxu0 %v1328
    %2072 = vmatpush.msra.mxu0 %v1312
    %2073 = vmatpush.msra.mxu0 %v1296
    %2074 = vmatpush.msra.mxu0 %v1280
    %2075 = vmatpush.msra.mxu0 %v1264
    %2076 = vmatpush.msra.mxu0 %v1248
    %2077 = vmatpush.msra.mxu0 %v1232
    %2078 = vmatpush.msra.mxu0 %v1216
    %2079 = vmatmul.f32.gmra.mxu0 %v1768
    %v2080 = vpop.f32.mrf.mxu0
    %v2081 = vadd.f32 %v2061, %v2080
    %2082 = vdwg.mxu0
    %2083 = vmatpush.msra.mxu0 %v1201
    %2084 = vmatpush.msra.mxu0 %v1185
    %2085 = vmatpush.msra.mxu0 %v1169
    %2086 = vmatpush.msra.mxu0 %v1153
    %2087 = vmatpush.msra.mxu0 %v1137
    %2088 = vmatpush.msra.mxu0 %v1121
    %2089 = vmatpush.msra.mxu0 %v1105
    %2090 = vmatpush.msra.mxu0 %v1089
    %2091 = vmatpush.msra.mxu0 %v1073
    %2092 = vmatpush.msra.mxu0 %v1057
    %2093 = vmatpush.msra.mxu0 %v1041
    %2094 = vmatpush.msra.mxu0 %v1025
    %2095 = vmatpush.msra.mxu0 %v1009
    %2096 = vmatpush.msra.mxu0 %v993
    %2097 = vmatpush.msra.mxu0 %v977
    %2098 = vmatpush.msra.mxu0 %v961
    %2099 = vmatmul.f32.gmra.mxu0 %v1767
    %v2100 = vpop.f32.mrf.mxu0
    %v2101 = vadd.f32 %v1778, %v2100
    %2102 = vdwg.mxu0
    %2103 = vmatpush.msra.mxu0 %v1457
    %2104 = vmatpush.msra.mxu0 %v1441
    %2105 = vmatpush.msra.mxu0 %v1425
    %2106 = vmatpush.msra.mxu0 %v1409
    %2107 = vmatpush.msra.mxu0 %v1393
    %2108 = vmatpush.msra.mxu0 %v1377
    %2109 = vmatpush.msra.mxu0 %v1361
    %2110 = vmatpush.msra.mxu0 %v1345
    %2111 = vmatpush.msra.mxu0 %v1329
    %2112 = vmatpush.msra.mxu0 %v1313
    %2113 = vmatpush.msra.mxu0 %v1297
    %2114 = vmatpush.msra.mxu0 %v1281
    %2115 = vmatpush.msra.mxu0 %v1265
    %2116 = vmatpush.msra.mxu0 %v1249
    %2117 = vmatpush.msra.mxu0 %v1233
    %2118 = vmatpush.msra.mxu0 %v1217
    %2119 = vmatmul.f32.gmra.mxu0 %v1768
    %v2120 = vpop.f32.mrf.mxu0
    %v2121 = vadd.f32 %v2101, %v2120
    %2122 = vdwg.mxu0
    %2123 = vmatpush.msra.mxu0 %v1202
    %2124 = vmatpush.msra.mxu0 %v1186
    %2125 = vmatpush.msra.mxu0 %v1170
    %2126 = vmatpush.msra.mxu0 %v1154
    %2127 = vmatpush.msra.mxu0 %v1138
    %2128 = vmatpush.msra.mxu0 %v1122
    %2129 = vmatpush.msra.mxu0 %v1106
    %2130 = vmatpush.msra.mxu0 %v1090
    %2131 = vmatpush.msra.mxu0 %v1074
    %2132 = vmatpush.msra.mxu0 %v1058
    %2133 = vmatpush.msra.mxu0 %v1042
    %2134 = vmatpush.msra.mxu0 %v1026
    %2135 = vmatpush.msra.mxu0 %v1010
    %2136 = vmatpush.msra.mxu0 %v994
    %2137 = vmatpush.msra.mxu0 %v978
    %2138 = vmatpush.msra.mxu0 %v962
    %2139 = vmatmul.f32.gmra.mxu0 %v1767
    %v2140 = vpop.f32.mrf.mxu0
    %v2141 = vadd.f32 %v1779, %v2140
    %2142 = vdwg.mxu0
    %2143 = vmatpush.msra.mxu0 %v1458
    %2144 = vmatpush.msra.mxu0 %v1442
    %2145 = vmatpush.msra.mxu0 %v1426
    %2146 = vmatpush.msra.mxu0 %v1410
    %2147 = vmatpush.msra.mxu0 %v1394
    %2148 = vmatpush.msra.mxu0 %v1378
    %2149 = vmatpush.msra.mxu0 %v1362
    %2150 = vmatpush.msra.mxu0 %v1346
    %2151 = vmatpush.msra.mxu0 %v1330
    %2152 = vmatpush.msra.mxu0 %v1314
    %2153 = vmatpush.msra.mxu0 %v1298
    %2154 = vmatpush.msra.mxu0 %v1282
    %2155 = vmatpush.msra.mxu0 %v1266
    %2156 = vmatpush.msra.mxu0 %v1250
    %2157 = vmatpush.msra.mxu0 %v1234
    %2158 = vmatpush.msra.mxu0 %v1218
    %2159 = vmatmul.f32.gmra.mxu0 %v1768
    %v2160 = vpop.f32.mrf.mxu0
    %v2161 = vadd.f32 %v2141, %v2160
    %2162 = vdwg.mxu0
    %2163 = vmatpush.msra.mxu0 %v1203
    %2164 = vmatpush.msra.mxu0 %v1187
    %2165 = vmatpush.msra.mxu0 %v1171
    %2166 = vmatpush.msra.mxu0 %v1155
    %2167 = vmatpush.msra.mxu0 %v1139
    %2168 = vmatpush.msra.mxu0 %v1123
    %2169 = vmatpush.msra.mxu0 %v1107
    %2170 = vmatpush.msra.mxu0 %v1091
    %2171 = vmatpush.msra.mxu0 %v1075
    %2172 = vmatpush.msra.mxu0 %v1059
    %2173 = vmatpush.msra.mxu0 %v1043
    %2174 = vmatpush.msra.mxu0 %v1027
    %2175 = vmatpush.msra.mxu0 %v1011
    %2176 = vmatpush.msra.mxu0 %v995
    %2177 = vmatpush.msra.mxu0 %v979
    %2178 = vmatpush.msra.mxu0 %v963
    %2179 = vmatmul.f32.gmra.mxu0 %v1767
    %v2180 = vpop.f32.mrf.mxu0
    %v2181 = vadd.f32 %v1780, %v2180
    %2182 = vdwg.mxu0
    %2183 = vmatpush.msra.mxu0 %v1459
    %2184 = vmatpush.msra.mxu0 %v1443
    %2185 = vmatpush.msra.mxu0 %v1427
    %2186 = vmatpush.msra.mxu0 %v1411
    %2187 = vmatpush.msra.mxu0 %v1395
    %2188 = vmatpush.msra.mxu0 %v1379
    %2189 = vmatpush.msra.mxu0 %v1363
    %2190 = vmatpush.msra.mxu0 %v1347
    %2191 = vmatpush.msra.mxu0 %v1331
    %2192 = vmatpush.msra.mxu0 %v1315
    %2193 = vmatpush.msra.mxu0 %v1299
    %2194 = vmatpush.msra.mxu0 %v1283
    %2195 = vmatpush.msra.mxu0 %v1267
    %2196 = vmatpush.msra.mxu0 %v1251
    %2197 = vmatpush.msra.mxu0 %v1235
    %2198 = vmatpush.msra.mxu0 %v1219
    %2199 = vmatmul.f32.gmra.mxu0 %v1768
    %v2200 = vpop.f32.mrf.mxu0
    %v2201 = vadd.f32 %v2181, %v2200
    %2202 = vdwg.mxu0
    %2203 = vmatpush.msra.mxu0 %v1204
    %2204 = vmatpush.msra.mxu0 %v1188
    %2205 = vmatpush.msra.mxu0 %v1172
    %2206 = vmatpush.msra.mxu0 %v1156
    %2207 = vmatpush.msra.mxu0 %v1140
    %2208 = vmatpush.msra.mxu0 %v1124
    %2209 = vmatpush.msra.mxu0 %v1108
    %2210 = vmatpush.msra.mxu0 %v1092
    %2211 = vmatpush.msra.mxu0 %v1076
    %2212 = vmatpush.msra.mxu0 %v1060
    %2213 = vmatpush.msra.mxu0 %v1044
    %2214 = vmatpush.msra.mxu0 %v1028
    %2215 = vmatpush.msra.mxu0 %v1012
    %2216 = vmatpush.msra.mxu0 %v996
    %2217 = vmatpush.msra.mxu0 %v980
    %2218 = vmatpush.msra.mxu0 %v964
    %2219 = vmatmul.f32.gmra.mxu0 %v1767
    %v2220 = vpop.f32.mrf.mxu0
    %v2221 = vadd.f32 %v1781, %v2220
    %2222 = vdwg.mxu0
    %2223 = vmatpush.msra.mxu0 %v1460
    %2224 = vmatpush.msra.mxu0 %v1444
    %2225 = vmatpush.msra.mxu0 %v1428
    %2226 = vmatpush.msra.mxu0 %v1412
    %2227 = vmatpush.msra.mxu0 %v1396
    %2228 = vmatpush.msra.mxu0 %v1380
    %2229 = vmatpush.msra.mxu0 %v1364
    %2230 = vmatpush.msra.mxu0 %v1348
    %2231 = vmatpush.msra.mxu0 %v1332
    %2232 = vmatpush.msra.mxu0 %v1316
    %2233 = vmatpush.msra.mxu0 %v1300
    %2234 = vmatpush.msra.mxu0 %v1284
    %2235 = vmatpush.msra.mxu0 %v1268
    %2236 = vmatpush.msra.mxu0 %v1252
    %2237 = vmatpush.msra.mxu0 %v1236
    %2238 = vmatpush.msra.mxu0 %v1220
    %2239 = vmatmul.f32.gmra.mxu0 %v1768
    %v2240 = vpop.f32.mrf.mxu0
    %v2241 = vadd.f32 %v2221, %v2240
    %2242 = vdwg.mxu0
    %2243 = vmatpush.msra.mxu0 %v1205
    %2244 = vmatpush.msra.mxu0 %v1189
    %2245 = vmatpush.msra.mxu0 %v1173
    %2246 = vmatpush.msra.mxu0 %v1157
    %2247 = vmatpush.msra.mxu0 %v1141
    %2248 = vmatpush.msra.mxu0 %v1125
    %2249 = vmatpush.msra.mxu0 %v1109
    %2250 = vmatpush.msra.mxu0 %v1093
    %2251 = vmatpush.msra.mxu0 %v1077
    %2252 = vmatpush.msra.mxu0 %v1061
    %2253 = vmatpush.msra.mxu0 %v1045
    %2254 = vmatpush.msra.mxu0 %v1029
    %2255 = vmatpush.msra.mxu0 %v1013
    %2256 = vmatpush.msra.mxu0 %v997
    %2257 = vmatpush.msra.mxu0 %v981
    %2258 = vmatpush.msra.mxu0 %v965
    %2259 = vmatmul.f32.gmra.mxu0 %v1767
    %v2260 = vpop.f32.mrf.mxu0
    %v2261 = vadd.f32 %v1782, %v2260
    %2262 = vdwg.mxu0
    %2263 = vmatpush.msra.mxu0 %v1461
    %2264 = vmatpush.msra.mxu0 %v1445
    %2265 = vmatpush.msra.mxu0 %v1429
    %2266 = vmatpush.msra.mxu0 %v1413
    %2267 = vmatpush.msra.mxu0 %v1397
    %2268 = vmatpush.msra.mxu0 %v1381
    %2269 = vmatpush.msra.mxu0 %v1365
    %2270 = vmatpush.msra.mxu0 %v1349
    %2271 = vmatpush.msra.mxu0 %v1333
    %2272 = vmatpush.msra.mxu0 %v1317
    %2273 = vmatpush.msra.mxu0 %v1301
    %2274 = vmatpush.msra.mxu0 %v1285
    %2275 = vmatpush.msra.mxu0 %v1269
    %2276 = vmatpush.msra.mxu0 %v1253
    %2277 = vmatpush.msra.mxu0 %v1237
    %2278 = vmatpush.msra.mxu0 %v1221
    %2279 = vmatmul.f32.gmra.mxu0 %v1768
    %v2280 = vpop.f32.mrf.mxu0
    %v2281 = vadd.f32 %v2261, %v2280
    %2282 = vdwg.mxu0
    %2283 = vmatpush.msra.mxu0 %v1206
    %2284 = vmatpush.msra.mxu0 %v1190
    %2285 = vmatpush.msra.mxu0 %v1174
    %2286 = vmatpush.msra.mxu0 %v1158
    %2287 = vmatpush.msra.mxu0 %v1142
    %2288 = vmatpush.msra.mxu0 %v1126
    %2289 = vmatpush.msra.mxu0 %v1110
    %2290 = vmatpush.msra.mxu0 %v1094
    %2291 = vmatpush.msra.mxu0 %v1078
    %2292 = vmatpush.msra.mxu0 %v1062
    %2293 = vmatpush.msra.mxu0 %v1046
    %2294 = vmatpush.msra.mxu0 %v1030
    %2295 = vmatpush.msra.mxu0 %v1014
    %2296 = vmatpush.msra.mxu0 %v998
    %2297 = vmatpush.msra.mxu0 %v982
    %2298 = vmatpush.msra.mxu0 %v966
    %2299 = vmatmul.f32.gmra.mxu0 %v1767
    %v2300 = vpop.f32.mrf.mxu0
    %v2301 = vadd.f32 %v1783, %v2300
    %2302 = vdwg.mxu0
    %2303 = vmatpush.msra.mxu0 %v1462
    %2304 = vmatpush.msra.mxu0 %v1446
    %2305 = vmatpush.msra.mxu0 %v1430
    %2306 = vmatpush.msra.mxu0 %v1414
    %2307 = vmatpush.msra.mxu0 %v1398
    %2308 = vmatpush.msra.mxu0 %v1382
    %2309 = vmatpush.msra.mxu0 %v1366
    %2310 = vmatpush.msra.mxu0 %v1350
    %2311 = vmatpush.msra.mxu0 %v1334
    %2312 = vmatpush.msra.mxu0 %v1318
    %2313 = vmatpush.msra.mxu0 %v1302
    %2314 = vmatpush.msra.mxu0 %v1286
    %2315 = vmatpush.msra.mxu0 %v1270
    %2316 = vmatpush.msra.mxu0 %v1254
    %2317 = vmatpush.msra.mxu0 %v1238
    %2318 = vmatpush.msra.mxu0 %v1222
    %2319 = vmatmul.f32.gmra.mxu0 %v1768
    %v2320 = vpop.f32.mrf.mxu0
    %v2321 = vadd.f32 %v2301, %v2320
    %2322 = vdwg.mxu0
    %2323 = vmatpush.msra.mxu0 %v1207
    %2324 = vmatpush.msra.mxu0 %v1191
    %2325 = vmatpush.msra.mxu0 %v1175
    %2326 = vmatpush.msra.mxu0 %v1159
    %2327 = vmatpush.msra.mxu0 %v1143
    %2328 = vmatpush.msra.mxu0 %v1127
    %2329 = vmatpush.msra.mxu0 %v1111
    %2330 = vmatpush.msra.mxu0 %v1095
    %2331 = vmatpush.msra.mxu0 %v1079
    %2332 = vmatpush.msra.mxu0 %v1063
    %2333 = vmatpush.msra.mxu0 %v1047
    %2334 = vmatpush.msra.mxu0 %v1031
    %2335 = vmatpush.msra.mxu0 %v1015
    %2336 = vmatpush.msra.mxu0 %v999
    %2337 = vmatpush.msra.mxu0 %v983
    %2338 = vmatpush.msra.mxu0 %v967
    %2339 = vmatmul.f32.gmra.mxu0 %v1767
    %v2340 = vpop.f32.mrf.mxu0
    %v2341 = vadd.f32 %v1784, %v2340
    %2342 = vdwg.mxu0
    %2343 = vmatpush.msra.mxu0 %v1463
    %2344 = vmatpush.msra.mxu0 %v1447
    %2345 = vmatpush.msra.mxu0 %v1431
    %2346 = vmatpush.msra.mxu0 %v1415
    %2347 = vmatpush.msra.mxu0 %v1399
    %2348 = vmatpush.msra.mxu0 %v1383
    %2349 = vmatpush.msra.mxu0 %v1367
    %2350 = vmatpush.msra.mxu0 %v1351
    %2351 = vmatpush.msra.mxu0 %v1335
    %2352 = vmatpush.msra.mxu0 %v1319
    %2353 = vmatpush.msra.mxu0 %v1303
    %2354 = vmatpush.msra.mxu0 %v1287
    %2355 = vmatpush.msra.mxu0 %v1271
    %2356 = vmatpush.msra.mxu0 %v1255
    %2357 = vmatpush.msra.mxu0 %v1239
    %2358 = vmatpush.msra.mxu0 %v1223
    %2359 = vmatmul.f32.gmra.mxu0 %v1768
    %v2360 = vpop.f32.mrf.mxu0
    %v2361 = vadd.f32 %v2341, %v2360
    %2362 = vdwg.mxu0
    %2363 = vmatpush.msra.mxu0 %v1208
    %2364 = vmatpush.msra.mxu0 %v1192
    %2365 = vmatpush.msra.mxu0 %v1176
    %2366 = vmatpush.msra.mxu0 %v1160
    %2367 = vmatpush.msra.mxu0 %v1144
    %2368 = vmatpush.msra.mxu0 %v1128
    %2369 = vmatpush.msra.mxu0 %v1112
    %2370 = vmatpush.msra.mxu0 %v1096
    %2371 = vmatpush.msra.mxu0 %v1080
    %2372 = vmatpush.msra.mxu0 %v1064
    %2373 = vmatpush.msra.mxu0 %v1048
    %2374 = vmatpush.msra.mxu0 %v1032
    %2375 = vmatpush.msra.mxu0 %v1016
    %2376 = vmatpush.msra.mxu0 %v1000
    %2377 = vmatpush.msra.mxu0 %v984
    %2378 = vmatpush.msra.mxu0 %v968
    %2379 = vmatmul.f32.gmra.mxu0 %v1767
    %v2380 = vpop.f32.mrf.mxu0
    %v2381 = vadd.f32 %v1785, %v2380
    %2382 = vdwg.mxu0
    %2383 = vmatpush.msra.mxu0 %v1464
    %2384 = vmatpush.msra.mxu0 %v1448
    %2385 = vmatpush.msra.mxu0 %v1432
    %2386 = vmatpush.msra.mxu0 %v1416
    %2387 = vmatpush.msra.mxu0 %v1400
    %2388 = vmatpush.msra.mxu0 %v1384
    %2389 = vmatpush.msra.mxu0 %v1368
    %2390 = vmatpush.msra.mxu0 %v1352
    %2391 = vmatpush.msra.mxu0 %v1336
    %2392 = vmatpush.msra.mxu0 %v1320
    %2393 = vmatpush.msra.mxu0 %v1304
    %2394 = vmatpush.msra.mxu0 %v1288
    %2395 = vmatpush.msra.mxu0 %v1272
    %2396 = vmatpush.msra.mxu0 %v1256
    %2397 = vmatpush.msra.mxu0 %v1240
    %2398 = vmatpush.msra.mxu0 %v1224
    %2399 = vmatmul.f32.gmra.mxu0 %v1768
    %v2400 = vpop.f32.mrf.mxu0
    %v2401 = vadd.f32 %v2381, %v2400
    %2402 = vdwg.mxu0
    %2403 = vmatpush.msra.mxu0 %v1209
    %2404 = vmatpush.msra.mxu0 %v1193
    %2405 = vmatpush.msra.mxu0 %v1177
    %2406 = vmatpush.msra.mxu0 %v1161
    %2407 = vmatpush.msra.mxu0 %v1145
    %2408 = vmatpush.msra.mxu0 %v1129
    %2409 = vmatpush.msra.mxu0 %v1113
    %2410 = vmatpush.msra.mxu0 %v1097
    %2411 = vmatpush.msra.mxu0 %v1081
    %2412 = vmatpush.msra.mxu0 %v1065
    %2413 = vmatpush.msra.mxu0 %v1049
    %2414 = vmatpush.msra.mxu0 %v1033
    %2415 = vmatpush.msra.mxu0 %v1017
    %2416 = vmatpush.msra.mxu0 %v1001
    %2417 = vmatpush.msra.mxu0 %v985
    %2418 = vmatpush.msra.mxu0 %v969
    %2419 = vmatmul.f32.gmra.mxu0 %v1767
    %v2420 = vpop.f32.mrf.mxu0
    %v2421 = vadd.f32 %v1786, %v2420
    %2422 = vdwg.mxu0
    %2423 = vmatpush.msra.mxu0 %v1465
    %2424 = vmatpush.msra.mxu0 %v1449
    %2425 = vmatpush.msra.mxu0 %v1433
    %2426 = vmatpush.msra.mxu0 %v1417
    %2427 = vmatpush.msra.mxu0 %v1401
    %2428 = vmatpush.msra.mxu0 %v1385
    %2429 = vmatpush.msra.mxu0 %v1369
    %2430 = vmatpush.msra.mxu0 %v1353
    %2431 = vmatpush.msra.mxu0 %v1337
    %2432 = vmatpush.msra.mxu0 %v1321
    %2433 = vmatpush.msra.mxu0 %v1305
    %2434 = vmatpush.msra.mxu0 %v1289
    %2435 = vmatpush.msra.mxu0 %v1273
    %2436 = vmatpush.msra.mxu0 %v1257
    %2437 = vmatpush.msra.mxu0 %v1241
    %2438 = vmatpush.msra.mxu0 %v1225
    %2439 = vmatmul.f32.gmra.mxu0 %v1768
    %v2440 = vpop.f32.mrf.mxu0
    %v2441 = vadd.f32 %v2421, %v2440
    %2442 = vdwg.mxu0
    %v2443 = vmul.f32 %v2161, 0.5
    %v2444 = vmul.f32 %v2201, 0.5
    %v2445 = vmul.f32 %v2241, 0.5
    %v2446 = vmul.f32 %v2281, 0.5
    %v2447 = vmul.f32 %v2321, 0.5
    %v2448 = vmul.f32 %v2361, 0.5
    %v2449 = vmul.f32 %v2401, 0.5
    %v2450 = vmul.f32 %v2441, 0.5
    %v2451 = vmul.f32 %v2161, 0.70710677
    %v2452 = vmul.f32 %v2201, 0.70710677
    %v2453 = vmul.f32 %v2241, 0.70710677
    %v2454 = vmul.f32 %v2281, 0.70710677
    %v2455 = vmul.f32 %v2321, 0.70710677
    %v2456 = vmul.f32 %v2361, 0.70710677
    %v2457 = vmul.f32 %v2401, 0.70710677
    %v2458 = vmul.f32 %v2441, 0.70710677
    %vm2459 = vcmp.ge.f32.partialorder %v2451, 0.0
    %vm2460 = vcmp.ge.f32.partialorder %v2452, 0.0
    %vm2461 = vcmp.ge.f32.partialorder %v2453, 0.0
    %vm2462 = vcmp.ge.f32.partialorder %v2454, 0.0
    %vm2463 = vcmp.ge.f32.partialorder %v2455, 0.0
    %vm2464 = vcmp.ge.f32.partialorder %v2456, 0.0
    %vm2465 = vcmp.ge.f32.partialorder %v2457, 0.0
    %vm2466 = vcmp.ge.f32.partialorder %v2458, 0.0
    %v2467 = vsel %vm2459, 1.0, -1.0
    %v2468 = vsel %vm2460, 1.0, -1.0
    %v2469 = vsel %vm2461, 1.0, -1.0
    %v2470 = vsel %vm2462, 1.0, -1.0
    %v2471 = vsel %vm2463, 1.0, -1.0
    %v2472 = vsel %vm2464, 1.0, -1.0
    %v2473 = vsel %vm2465, 1.0, -1.0
    %v2474 = vsel %vm2466, 1.0, -1.0
    %v2475 = vand.u32 2147483647, %v2451
    %v2476 = vand.u32 2147483647, %v2452
    %v2477 = vand.u32 2147483647, %v2453
    %v2478 = vand.u32 2147483647, %v2454
    %v2479 = vand.u32 2147483647, %v2455
    %v2480 = vand.u32 2147483647, %v2456
    %v2481 = vand.u32 2147483647, %v2457
    %v2482 = vand.u32 2147483647, %v2458
    %v2483 = vmul.f32 %v2475, 0.3275911
    %v2484 = vmul.f32 %v2476, 0.3275911
    %v2485 = vmul.f32 %v2477, 0.3275911
    %v2486 = vmul.f32 %v2478, 0.3275911
    %v2487 = vmul.f32 %v2479, 0.3275911
    %v2488 = vmul.f32 %v2480, 0.3275911
    %v2489 = vmul.f32 %v2481, 0.3275911
    %v2490 = vmul.f32 %v2482, 0.3275911
    %v2491 = vadd.f32 %v2483, 1.0
    %v2492 = vadd.f32 %v2484, 1.0
    %v2493 = vadd.f32 %v2485, 1.0
    %v2494 = vadd.f32 %v2486, 1.0
    %v2495 = vadd.f32 %v2487, 1.0
    %v2496 = vadd.f32 %v2488, 1.0
    %v2497 = vadd.f32 %v2489, 1.0
    %v2498 = vadd.f32 %v2490, 1.0
    %v2499 = vrcp.pop %v2491
    %v2500 = vmul.f32 %v2491, %v2499
    %v2501 = vsub.f32 1.0, %v2500
    %v2502 = vmul.f32 %v2499, %v2501
    %v2503 = vadd.f32 %v2499, %v2502
    %vm2504 = vweird.f32 %v2491
    %vm2505 = vweird.f32 %v2499
    %vm2506 = vmor %vm2504, %vm2505
    %v2507 = vsel %vm2506, %v2499, %v2503
    %v2508 = vand.u32 2147483647, %v2491
    %vm2509 = vcmp.eq.f32.partialorder %v2508, 8.507059e+37
    %v2510 = vand.u32 %v2491, 2147483648
    %v2511 = vor.u32 1.1754944e-38, %v2510
    %v2512 = vsel %vm2509, %v2511, %v2507
    %v2513 = vmul.f32 1.0, %v2512
    %v2514 = vrcp.pop %v2492
    %v2515 = vmul.f32 %v2492, %v2514
    %v2516 = vsub.f32 1.0, %v2515
    %v2517 = vmul.f32 %v2514, %v2516
    %v2518 = vadd.f32 %v2514, %v2517
    %vm2519 = vweird.f32 %v2492
    %vm2520 = vweird.f32 %v2514
    %vm2521 = vmor %vm2519, %vm2520
    %v2522 = vsel %vm2521, %v2514, %v2518
    %v2523 = vand.u32 2147483647, %v2492
    %vm2524 = vcmp.eq.f32.partialorder %v2523, 8.507059e+37
    %v2525 = vand.u32 %v2492, 2147483648
    %v2526 = vor.u32 1.1754944e-38, %v2525
    %v2527 = vsel %vm2524, %v2526, %v2522
    %v2528 = vmul.f32 1.0, %v2527
    %v2529 = vrcp.pop %v2493
    %v2530 = vmul.f32 %v2493, %v2529
    %v2531 = vsub.f32 1.0, %v2530
    %v2532 = vmul.f32 %v2529, %v2531
    %v2533 = vadd.f32 %v2529, %v2532
    %vm2534 = vweird.f32 %v2493
    %vm2535 = vweird.f32 %v2529
    %vm2536 = vmor %vm2534, %vm2535
    %v2537 = vsel %vm2536, %v2529, %v2533
    %v2538 = vand.u32 2147483647, %v2493
    %vm2539 = vcmp.eq.f32.partialorder %v2538, 8.507059e+37
    %v2540 = vand.u32 %v2493, 2147483648
    %v2541 = vor.u32 1.1754944e-38, %v2540
    %v2542 = vsel %vm2539, %v2541, %v2537
    %v2543 = vmul.f32 1.0, %v2542
    %v2544 = vrcp.pop %v2494
    %v2545 = vmul.f32 %v2494, %v2544
    %v2546 = vsub.f32 1.0, %v2545
    %v2547 = vmul.f32 %v2544, %v2546
    %v2548 = vadd.f32 %v2544, %v2547
    %vm2549 = vweird.f32 %v2494
    %vm2550 = vweird.f32 %v2544
    %vm2551 = vmor %vm2549, %vm2550
    %v2552 = vsel %vm2551, %v2544, %v2548
    %v2553 = vand.u32 2147483647, %v2494
    %vm2554 = vcmp.eq.f32.partialorder %v2553, 8.507059e+37
    %v2555 = vand.u32 %v2494, 2147483648
    %v2556 = vor.u32 1.1754944e-38, %v2555
    %v2557 = vsel %vm2554, %v2556, %v2552
    %v2558 = vmul.f32 1.0, %v2557
    %v2559 = vrcp.pop %v2495
    %v2560 = vmul.f32 %v2495, %v2559
    %v2561 = vsub.f32 1.0, %v2560
    %v2562 = vmul.f32 %v2559, %v2561
    %v2563 = vadd.f32 %v2559, %v2562
    %vm2564 = vweird.f32 %v2495
    %vm2565 = vweird.f32 %v2559
    %vm2566 = vmor %vm2564, %vm2565
    %v2567 = vsel %vm2566, %v2559, %v2563
    %v2568 = vand.u32 2147483647, %v2495
    %vm2569 = vcmp.eq.f32.partialorder %v2568, 8.507059e+37
    %v2570 = vand.u32 %v2495, 2147483648
    %v2571 = vor.u32 1.1754944e-38, %v2570
    %v2572 = vsel %vm2569, %v2571, %v2567
    %v2573 = vmul.f32 1.0, %v2572
    %v2574 = vrcp.pop %v2496
    %v2575 = vmul.f32 %v2496, %v2574
    %v2576 = vsub.f32 1.0, %v2575
    %v2577 = vmul.f32 %v2574, %v2576
    %v2578 = vadd.f32 %v2574, %v2577
    %vm2579 = vweird.f32 %v2496
    %vm2580 = vweird.f32 %v2574
    %vm2581 = vmor %vm2579, %vm2580
    %v2582 = vsel %vm2581, %v2574, %v2578
    %v2583 = vand.u32 2147483647, %v2496
    %vm2584 = vcmp.eq.f32.partialorder %v2583, 8.507059e+37
    %v2585 = vand.u32 %v2496, 2147483648
    %v2586 = vor.u32 1.1754944e-38, %v2585
    %v2587 = vsel %vm2584, %v2586, %v2582
    %v2588 = vmul.f32 1.0, %v2587
    %v2589 = vrcp.pop %v2497
    %v2590 = vmul.f32 %v2497, %v2589
    %v2591 = vsub.f32 1.0, %v2590
    %v2592 = vmul.f32 %v2589, %v2591
    %v2593 = vadd.f32 %v2589, %v2592
    %vm2594 = vweird.f32 %v2497
    %vm2595 = vweird.f32 %v2589
    %vm2596 = vmor %vm2594, %vm2595
    %v2597 = vsel %vm2596, %v2589, %v2593
    %v2598 = vand.u32 2147483647, %v2497
    %vm2599 = vcmp.eq.f32.partialorder %v2598, 8.507059e+37
    %v2600 = vand.u32 %v2497, 2147483648
    %v2601 = vor.u32 1.1754944e-38, %v2600
    %v2602 = vsel %vm2599, %v2601, %v2597
    %v2603 = vmul.f32 1.0, %v2602
    %v2604 = vrcp.pop %v2498
    %v2605 = vmul.f32 %v2498, %v2604
    %v2606 = vsub.f32 1.0, %v2605
    %v2607 = vmul.f32 %v2604, %v2606
    %v2608 = vadd.f32 %v2604, %v2607
    %vm2609 = vweird.f32 %v2498
    %vm2610 = vweird.f32 %v2604
    %vm2611 = vmor %vm2609, %vm2610
    %v2612 = vsel %vm2611, %v2604, %v2608
    %v2613 = vand.u32 2147483647, %v2498
    %vm2614 = vcmp.eq.f32.partialorder %v2613, 8.507059e+37
    %v2615 = vand.u32 %v2498, 2147483648
    %v2616 = vor.u32 1.1754944e-38, %v2615
    %v2617 = vsel %vm2614, %v2616, %v2612
    %v2618 = vmul.f32 1.0, %v2617
    %v2619 = vmul.f32 %v2513, 1.0614054
    %v2620 = vmul.f32 %v2528, 1.0614054
    %v2621 = vmul.f32 %v2543, 1.0614054
    %v2622 = vmul.f32 %v2558, 1.0614054
    %v2623 = vmul.f32 %v2573, 1.0614054
    %v2624 = vmul.f32 %v2588, 1.0614054
    %v2625 = vmul.f32 %v2603, 1.0614054
    %v2626 = vmul.f32 %v2618, 1.0614054
    %v2627 = vadd.f32 %v2619, -1.4531521
    %v2628 = vadd.f32 %v2620, -1.4531521
    %v2629 = vadd.f32 %v2621, -1.4531521
    %v2630 = vadd.f32 %v2622, -1.4531521
    %v2631 = vadd.f32 %v2623, -1.4531521
    %v2632 = vadd.f32 %v2624, -1.4531521
    %v2633 = vadd.f32 %v2625, -1.4531521
    %v2634 = vadd.f32 %v2626, -1.4531521
    %v2635 = vmul.f32 %v2627, %v2513
    %v2636 = vmul.f32 %v2628, %v2528
    %v2637 = vmul.f32 %v2629, %v2543
    %v2638 = vmul.f32 %v2630, %v2558
    %v2639 = vmul.f32 %v2631, %v2573
    %v2640 = vmul.f32 %v2632, %v2588
    %v2641 = vmul.f32 %v2633, %v2603
    %v2642 = vmul.f32 %v2634, %v2618
    %v2643 = vadd.f32 %v2635, 1.4214138
    %v2644 = vadd.f32 %v2636, 1.4214138
    %v2645 = vadd.f32 %v2637, 1.4214138
    %v2646 = vadd.f32 %v2638, 1.4214138
    %v2647 = vadd.f32 %v2639, 1.4214138
    %v2648 = vadd.f32 %v2640, 1.4214138
    %v2649 = vadd.f32 %v2641, 1.4214138
    %v2650 = vadd.f32 %v2642, 1.4214138
    %v2651 = vmul.f32 %v2643, %v2513
    %v2652 = vmul.f32 %v2644, %v2528
    %v2653 = vmul.f32 %v2645, %v2543
    %v2654 = vmul.f32 %v2646, %v2558
    %v2655 = vmul.f32 %v2647, %v2573
    %v2656 = vmul.f32 %v2648, %v2588
    %v2657 = vmul.f32 %v2649, %v2603
    %v2658 = vmul.f32 %v2650, %v2618
    %v2659 = vadd.f32 %v2651, -0.28449672
    %v2660 = vadd.f32 %v2652, -0.28449672
    %v2661 = vadd.f32 %v2653, -0.28449672
    %v2662 = vadd.f32 %v2654, -0.28449672
    %v2663 = vadd.f32 %v2655, -0.28449672
    %v2664 = vadd.f32 %v2656, -0.28449672
    %v2665 = vadd.f32 %v2657, -0.28449672
    %v2666 = vadd.f32 %v2658, -0.28449672
    %v2667 = vmul.f32 %v2659, %v2513
    %v2668 = vmul.f32 %v2660, %v2528
    %v2669 = vmul.f32 %v2661, %v2543
    %v2670 = vmul.f32 %v2662, %v2558
    %v2671 = vmul.f32 %v2663, %v2573
    %v2672 = vmul.f32 %v2664, %v2588
    %v2673 = vmul.f32 %v2665, %v2603
    %v2674 = vmul.f32 %v2666, %v2618
    %v2675 = vadd.f32 %v2667, 0.2548296
    %v2676 = vadd.f32 %v2668, 0.2548296
    %v2677 = vadd.f32 %v2669, 0.2548296
    %v2678 = vadd.f32 %v2670, 0.2548296
    %v2679 = vadd.f32 %v2671, 0.2548296
    %v2680 = vadd.f32 %v2672, 0.2548296
    %v2681 = vadd.f32 %v2673, 0.2548296
    %v2682 = vadd.f32 %v2674, 0.2548296
    %v2683 = vmul.f32 %v2675, %v2513
    %v2684 = vmul.f32 %v2676, %v2528
    %v2685 = vmul.f32 %v2677, %v2543
    %v2686 = vmul.f32 %v2678, %v2558
    %v2687 = vmul.f32 %v2679, %v2573
    %v2688 = vmul.f32 %v2680, %v2588
    %v2689 = vmul.f32 %v2681, %v2603
    %v2690 = vmul.f32 %v2682, %v2618
    %v2691 = vsub.f32 0.0, %v2475
    %v2692 = vsub.f32 0.0, %v2476
    %v2693 = vsub.f32 0.0, %v2477
    %v2694 = vsub.f32 0.0, %v2478
    %v2695 = vsub.f32 0.0, %v2479
    %v2696 = vsub.f32 0.0, %v2480
    %v2697 = vsub.f32 0.0, %v2481
    %v2698 = vsub.f32 0.0, %v2482
    %v2699 = vmul.f32 %v2691, %v2475
    %v2700 = vmul.f32 %v2692, %v2476
    %v2701 = vmul.f32 %v2693, %v2477
    %v2702 = vmul.f32 %v2694, %v2478
    %v2703 = vmul.f32 %v2695, %v2479
    %v2704 = vmul.f32 %v2696, %v2480
    %v2705 = vmul.f32 %v2697, %v2481
    %v2706 = vmul.f32 %v2698, %v2482
    %v2707 = vmul.f32 %v2699, 1.442695
    %v2708 = vpow.pop %v2707
    %v2709 = vmul.f32 %v2700, 1.442695
    %v2710 = vpow.pop %v2709
    %v2711 = vmul.f32 %v2701, 1.442695
    %v2712 = vpow.pop %v2711
    %v2713 = vmul.f32 %v2702, 1.442695
    %v2714 = vpow.pop %v2713
    %v2715 = vmul.f32 %v2703, 1.442695
    %v2716 = vpow.pop %v2715
    %v2717 = vmul.f32 %v2704, 1.442695
    %v2718 = vpow.pop %v2717
    %v2719 = vmul.f32 %v2705, 1.442695
    %v2720 = vpow.pop %v2719
    %v2721 = vmul.f32 %v2706, 1.442695
    %v2722 = vpow.pop %v2721
    %v2723 = vmul.f32 %v2683, %v2708
    %v2724 = vmul.f32 %v2684, %v2710
    %v2725 = vmul.f32 %v2685, %v2712
    %v2726 = vmul.f32 %v2686, %v2714
    %v2727 = vmul.f32 %v2687, %v2716
    %v2728 = vmul.f32 %v2688, %v2718
    %v2729 = vmul.f32 %v2689, %v2720
    %v2730 = vmul.f32 %v2690, %v2722
    %v2731 = vsub.f32 1.0, %v2723
    %v2732 = vsub.f32 1.0, %v2724
    %v2733 = vsub.f32 1.0, %v2725
    %v2734 = vsub.f32 1.0, %v2726
    %v2735 = vsub.f32 1.0, %v2727
    %v2736 = vsub.f32 1.0, %v2728
    %v2737 = vsub.f32 1.0, %v2729
    %v2738 = vsub.f32 1.0, %v2730
    %v2739 = vmul.f32 %v2467, %v2731
    %v2740 = vmul.f32 %v2468, %v2732
    %v2741 = vmul.f32 %v2469, %v2733
    %v2742 = vmul.f32 %v2470, %v2734
    %v2743 = vmul.f32 %v2471, %v2735
    %v2744 = vmul.f32 %v2472, %v2736
    %v2745 = vmul.f32 %v2473, %v2737
    %v2746 = vmul.f32 %v2474, %v2738
    %v2747 = vadd.f32 %v2739, 1.0
    %v2748 = vadd.f32 %v2740, 1.0
    %v2749 = vadd.f32 %v2741, 1.0
    %v2750 = vadd.f32 %v2742, 1.0
    %v2751 = vadd.f32 %v2743, 1.0
    %v2752 = vadd.f32 %v2744, 1.0
    %v2753 = vadd.f32 %v2745, 1.0
    %v2754 = vadd.f32 %v2746, 1.0
    %v2755 = vmul.f32 %v2443, %v2747
    %v2756 = vmul.f32 %v2444, %v2748
    %v2757 = vmul.f32 %v2445, %v2749
    %v2758 = vmul.f32 %v2446, %v2750
    %v2759 = vmul.f32 %v2447, %v2751
    %v2760 = vmul.f32 %v2448, %v2752
    %v2761 = vmul.f32 %v2449, %v2753
    %v2762 = vmul.f32 %v2450, %v2754
    %v2763 = vmul.f32 %v1841, %v2755
    %v2764 = vmul.f32 %v1881, %v2756
    %v2765 = vmul.f32 %v1921, %v2757
    %v2766 = vmul.f32 %v1961, %v2758
    %v2767 = vmul.f32 %v2001, %v2759
    %v2768 = vmul.f32 %v2041, %v2760
    %v2769 = vmul.f32 %v2081, %v2761
    %v2770 = vmul.f32 %v2121, %v2762
    %v2772 = vperm.slane %v1724, 0
    %v2773 = vperm.slane %v1724, 1
    %2776 = vmatpush.msra.mxu0 %v1498
    %2777 = vmatpush.msra.mxu0 %v1496
    %2778 = vmatpush.msra.mxu0 %v1494
    %2779 = vmatpush.msra.mxu0 %v1492
    %2780 = vmatpush.msra.mxu0 %v1490
    %2781 = vmatpush.msra.mxu0 %v1488
    %2782 = vmatpush.msra.mxu0 %v1486
    %2783 = vmatpush.msra.mxu0 %v1484
    %2784 = vmatpush.msra.mxu0 %v1482
    %2785 = vmatpush.msra.mxu0 %v1480
    %2786 = vmatpush.msra.mxu0 %v1478
    %2787 = vmatpush.msra.mxu0 %v1476
    %2788 = vmatpush.msra.mxu0 %v1474
    %2789 = vmatpush.msra.mxu0 %v1472
    %2790 = vmatpush.msra.mxu0 %v1470
    %2791 = vmatpush.msra.mxu0 %v1468
    %2792 = vmatmul.f32.gmra.mxu0 %v2763
    %v2793 = vpop.f32.mrf.mxu0
    %v2794 = vadd.f32 %v2772, %v2793
    %2795 = vdwg.mxu0
    %2796 = vmatpush.msra.mxu0 %v1530
    %2797 = vmatpush.msra.mxu0 %v1528
    %2798 = vmatpush.msra.mxu0 %v1526
    %2799 = vmatpush.msra.mxu0 %v1524
    %2800 = vmatpush.msra.mxu0 %v1522
    %2801 = vmatpush.msra.mxu0 %v1520
    %2802 = vmatpush.msra.mxu0 %v1518
    %2803 = vmatpush.msra.mxu0 %v1516
    %2804 = vmatpush.msra.mxu0 %v1514
    %2805 = vmatpush.msra.mxu0 %v1512
    %2806 = vmatpush.msra.mxu0 %v1510
    %2807 = vmatpush.msra.mxu0 %v1508
    %2808 = vmatpush.msra.mxu0 %v1506
    %2809 = vmatpush.msra.mxu0 %v1504
    %2810 = vmatpush.msra.mxu0 %v1502
    %2811 = vmatpush.msra.mxu0 %v1500
    %2812 = vmatmul.f32.gmra.mxu0 %v2764
    %v2813 = vpop.f32.mrf.mxu0
    %v2814 = vadd.f32 %v2794, %v2813
    %2815 = vdwg.mxu0
    %2816 = vmatpush.msra.mxu0 %v1562
    %2817 = vmatpush.msra.mxu0 %v1560
    %2818 = vmatpush.msra.mxu0 %v1558
    %2819 = vmatpush.msra.mxu0 %v1556
    %2820 = vmatpush.msra.mxu0 %v1554
    %2821 = vmatpush.msra.mxu0 %v1552
    %2822 = vmatpush.msra.mxu0 %v1550
    %2823 = vmatpush.msra.mxu0 %v1548
    %2824 = vmatpush.msra.mxu0 %v1546
    %2825 = vmatpush.msra.mxu0 %v1544
    %2826 = vmatpush.msra.mxu0 %v1542
    %2827 = vmatpush.msra.mxu0 %v1540
    %2828 = vmatpush.msra.mxu0 %v1538
    %2829 = vmatpush.msra.mxu0 %v1536
    %2830 = vmatpush.msra.mxu0 %v1534
    %2831 = vmatpush.msra.mxu0 %v1532
    %2832 = vmatmul.f32.gmra.mxu0 %v2765
    %v2833 = vpop.f32.mrf.mxu0
    %v2834 = vadd.f32 %v2814, %v2833
    %2835 = vdwg.mxu0
    %2836 = vmatpush.msra.mxu0 %v1594
    %2837 = vmatpush.msra.mxu0 %v1592
    %2838 = vmatpush.msra.mxu0 %v1590
    %2839 = vmatpush.msra.mxu0 %v1588
    %2840 = vmatpush.msra.mxu0 %v1586
    %2841 = vmatpush.msra.mxu0 %v1584
    %2842 = vmatpush.msra.mxu0 %v1582
    %2843 = vmatpush.msra.mxu0 %v1580
    %2844 = vmatpush.msra.mxu0 %v1578
    %2845 = vmatpush.msra.mxu0 %v1576
    %2846 = vmatpush.msra.mxu0 %v1574
    %2847 = vmatpush.msra.mxu0 %v1572
    %2848 = vmatpush.msra.mxu0 %v1570
    %2849 = vmatpush.msra.mxu0 %v1568
    %2850 = vmatpush.msra.mxu0 %v1566
    %2851 = vmatpush.msra.mxu0 %v1564
    %2852 = vmatmul.f32.gmra.mxu0 %v2766
    %v2853 = vpop.f32.mrf.mxu0
    %v2854 = vadd.f32 %v2834, %v2853
    %2855 = vdwg.mxu0
    %2856 = vmatpush.msra.mxu0 %v1626
    %2857 = vmatpush.msra.mxu0 %v1624
    %2858 = vmatpush.msra.mxu0 %v1622
    %2859 = vmatpush.msra.mxu0 %v1620
    %2860 = vmatpush.msra.mxu0 %v1618
    %2861 = vmatpush.msra.mxu0 %v1616
    %2862 = vmatpush.msra.mxu0 %v1614
    %2863 = vmatpush.msra.mxu0 %v1612
    %2864 = vmatpush.msra.mxu0 %v1610
    %2865 = vmatpush.msra.mxu0 %v1608
    %2866 = vmatpush.msra.mxu0 %v1606
    %2867 = vmatpush.msra.mxu0 %v1604
    %2868 = vmatpush.msra.mxu0 %v1602
    %2869 = vmatpush.msra.mxu0 %v1600
    %2870 = vmatpush.msra.mxu0 %v1598
    %2871 = vmatpush.msra.mxu0 %v1596
    %2872 = vmatmul.f32.gmra.mxu0 %v2767
    %v2873 = vpop.f32.mrf.mxu0
    %v2874 = vadd.f32 %v2854, %v2873
    %2875 = vdwg.mxu0
    %2876 = vmatpush.msra.mxu0 %v1658
    %2877 = vmatpush.msra.mxu0 %v1656
    %2878 = vmatpush.msra.mxu0 %v1654
    %2879 = vmatpush.msra.mxu0 %v1652
    %2880 = vmatpush.msra.mxu0 %v1650
    %2881 = vmatpush.msra.mxu0 %v1648
    %2882 = vmatpush.msra.mxu0 %v1646
    %2883 = vmatpush.msra.mxu0 %v1644
    %2884 = vmatpush.msra.mxu0 %v1642
    %2885 = vmatpush.msra.mxu0 %v1640
    %2886 = vmatpush.msra.mxu0 %v1638
    %2887 = vmatpush.msra.mxu0 %v1636
    %2888 = vmatpush.msra.mxu0 %v1634
    %2889 = vmatpush.msra.mxu0 %v1632
    %2890 = vmatpush.msra.mxu0 %v1630
    %2891 = vmatpush.msra.mxu0 %v1628
    %2892 = vmatmul.f32.gmra.mxu0 %v2768
    %v2893 = vpop.f32.mrf.mxu0
    %v2894 = vadd.f32 %v2874, %v2893
    %2895 = vdwg.mxu0
    %2896 = vmatpush.msra.mxu0 %v1690
    %2897 = vmatpush.msra.mxu0 %v1688
    %2898 = vmatpush.msra.mxu0 %v1686
    %2899 = vmatpush.msra.mxu0 %v1684
    %2900 = vmatpush.msra.mxu0 %v1682
    %2901 = vmatpush.msra.mxu0 %v1680
    %2902 = vmatpush.msra.mxu0 %v1678
    %2903 = vmatpush.msra.mxu0 %v1676
    %2904 = vmatpush.msra.mxu0 %v1674
    %2905 = vmatpush.msra.mxu0 %v1672
    %2906 = vmatpush.msra.mxu0 %v1670
    %2907 = vmatpush.msra.mxu0 %v1668
    %2908 = vmatpush.msra.mxu0 %v1666
    %2909 = vmatpush.msra.mxu0 %v1664
    %2910 = vmatpush.msra.mxu0 %v1662
    %2911 = vmatpush.msra.mxu0 %v1660
    %2912 = vmatmul.f32.gmra.mxu0 %v2769
    %v2913 = vpop.f32.mrf.mxu0
    %v2914 = vadd.f32 %v2894, %v2913
    %2915 = vdwg.mxu0
    %2916 = vmatpush.msra.mxu0 %v1722
    %2917 = vmatpush.msra.mxu0 %v1720
    %2918 = vmatpush.msra.mxu0 %v1718
    %2919 = vmatpush.msra.mxu0 %v1716
    %2920 = vmatpush.msra.mxu0 %v1714
    %2921 = vmatpush.msra.mxu0 %v1712
    %2922 = vmatpush.msra.mxu0 %v1710
    %2923 = vmatpush.msra.mxu0 %v1708
    %2924 = vmatpush.msra.mxu0 %v1706
    %2925 = vmatpush.msra.mxu0 %v1704
    %2926 = vmatpush.msra.mxu0 %v1702
    %2927 = vmatpush.msra.mxu0 %v1700
    %2928 = vmatpush.msra.mxu0 %v1698
    %2929 = vmatpush.msra.mxu0 %v1696
    %2930 = vmatpush.msra.mxu0 %v1694
    %2931 = vmatpush.msra.mxu0 %v1692
    %2932 = vmatmul.f32.gmra.mxu0 %v2770
    %v2933 = vpop.f32.mrf.mxu0
    %v2934 = vadd.f32 %v2914, %v2933
    %2935 = vdwg.mxu0
    %2936 = vmatpush.msra.mxu0 %v1499
    %2937 = vmatpush.msra.mxu0 %v1497
    %2938 = vmatpush.msra.mxu0 %v1495
    %2939 = vmatpush.msra.mxu0 %v1493
    %2940 = vmatpush.msra.mxu0 %v1491
    %2941 = vmatpush.msra.mxu0 %v1489
    %2942 = vmatpush.msra.mxu0 %v1487
    %2943 = vmatpush.msra.mxu0 %v1485
    %2944 = vmatpush.msra.mxu0 %v1483
    %2945 = vmatpush.msra.mxu0 %v1481
    %2946 = vmatpush.msra.mxu0 %v1479
    %2947 = vmatpush.msra.mxu0 %v1477
    %2948 = vmatpush.msra.mxu0 %v1475
    %2949 = vmatpush.msra.mxu0 %v1473
    %2950 = vmatpush.msra.mxu0 %v1471
    %2951 = vmatpush.msra.mxu0 %v1469
    %2952 = vmatmul.f32.gmra.mxu0 %v2763
    %v2953 = vpop.f32.mrf.mxu0
    %v2954 = vadd.f32 %v2773, %v2953
    %2955 = vdwg.mxu0
    %2956 = vmatpush.msra.mxu0 %v1531
    %2957 = vmatpush.msra.mxu0 %v1529
    %2958 = vmatpush.msra.mxu0 %v1527
    %2959 = vmatpush.msra.mxu0 %v1525
    %2960 = vmatpush.msra.mxu0 %v1523
    %2961 = vmatpush.msra.mxu0 %v1521
    %2962 = vmatpush.msra.mxu0 %v1519
    %2963 = vmatpush.msra.mxu0 %v1517
    %2964 = vmatpush.msra.mxu0 %v1515
    %2965 = vmatpush.msra.mxu0 %v1513
    %2966 = vmatpush.msra.mxu0 %v1511
    %2967 = vmatpush.msra.mxu0 %v1509
    %2968 = vmatpush.msra.mxu0 %v1507
    %2969 = vmatpush.msra.mxu0 %v1505
    %2970 = vmatpush.msra.mxu0 %v1503
    %2971 = vmatpush.msra.mxu0 %v1501
    %2972 = vmatmul.f32.gmra.mxu0 %v2764
    %v2973 = vpop.f32.mrf.mxu0
    %v2974 = vadd.f32 %v2954, %v2973
    %2975 = vdwg.mxu0
    %2976 = vmatpush.msra.mxu0 %v1563
    %2977 = vmatpush.msra.mxu0 %v1561
    %2978 = vmatpush.msra.mxu0 %v1559
    %2979 = vmatpush.msra.mxu0 %v1557
    %2980 = vmatpush.msra.mxu0 %v1555
    %2981 = vmatpush.msra.mxu0 %v1553
    %2982 = vmatpush.msra.mxu0 %v1551
    %2983 = vmatpush.msra.mxu0 %v1549
    %2984 = vmatpush.msra.mxu0 %v1547
    %2985 = vmatpush.msra.mxu0 %v1545
    %2986 = vmatpush.msra.mxu0 %v1543
    %2987 = vmatpush.msra.mxu0 %v1541
    %2988 = vmatpush.msra.mxu0 %v1539
    %2989 = vmatpush.msra.mxu0 %v1537
    %2990 = vmatpush.msra.mxu0 %v1535
    %2991 = vmatpush.msra.mxu0 %v1533
    %2992 = vmatmul.f32.gmra.mxu0 %v2765
    %v2993 = vpop.f32.mrf.mxu0
    %v2994 = vadd.f32 %v2974, %v2993
    %2995 = vdwg.mxu0
    %2996 = vmatpush.msra.mxu0 %v1595
    %2997 = vmatpush.msra.mxu0 %v1593
    %2998 = vmatpush.msra.mxu0 %v1591
    %2999 = vmatpush.msra.mxu0 %v1589
    %3000 = vmatpush.msra.mxu0 %v1587
    %3001 = vmatpush.msra.mxu0 %v1585
    %3002 = vmatpush.msra.mxu0 %v1583
    %3003 = vmatpush.msra.mxu0 %v1581
    %3004 = vmatpush.msra.mxu0 %v1579
    %3005 = vmatpush.msra.mxu0 %v1577
    %3006 = vmatpush.msra.mxu0 %v1575
    %3007 = vmatpush.msra.mxu0 %v1573
    %3008 = vmatpush.msra.mxu0 %v1571
    %3009 = vmatpush.msra.mxu0 %v1569
    %3010 = vmatpush.msra.mxu0 %v1567
    %3011 = vmatpush.msra.mxu0 %v1565
    %3012 = vmatmul.f32.gmra.mxu0 %v2766
    %v3013 = vpop.f32.mrf.mxu0
    %v3014 = vadd.f32 %v2994, %v3013
    %3015 = vdwg.mxu0
    %3016 = vmatpush.msra.mxu0 %v1627
    %3017 = vmatpush.msra.mxu0 %v1625
    %3018 = vmatpush.msra.mxu0 %v1623
    %3019 = vmatpush.msra.mxu0 %v1621
    %3020 = vmatpush.msra.mxu0 %v1619
    %3021 = vmatpush.msra.mxu0 %v1617
    %3022 = vmatpush.msra.mxu0 %v1615
    %3023 = vmatpush.msra.mxu0 %v1613
    %3024 = vmatpush.msra.mxu0 %v1611
    %3025 = vmatpush.msra.mxu0 %v1609
    %3026 = vmatpush.msra.mxu0 %v1607
    %3027 = vmatpush.msra.mxu0 %v1605
    %3028 = vmatpush.msra.mxu0 %v1603
    %3029 = vmatpush.msra.mxu0 %v1601
    %3030 = vmatpush.msra.mxu0 %v1599
    %3031 = vmatpush.msra.mxu0 %v1597
    %3032 = vmatmul.f32.gmra.mxu0 %v2767
    %v3033 = vpop.f32.mrf.mxu0
    %v3034 = vadd.f32 %v3014, %v3033
    %3035 = vdwg.mxu0
    %3036 = vmatpush.msra.mxu0 %v1659
    %3037 = vmatpush.msra.mxu0 %v1657
    %3038 = vmatpush.msra.mxu0 %v1655
    %3039 = vmatpush.msra.mxu0 %v1653
    %3040 = vmatpush.msra.mxu0 %v1651
    %3041 = vmatpush.msra.mxu0 %v1649
    %3042 = vmatpush.msra.mxu0 %v1647
    %3043 = vmatpush.msra.mxu0 %v1645
    %3044 = vmatpush.msra.mxu0 %v1643
    %3045 = vmatpush.msra.mxu0 %v1641
    %3046 = vmatpush.msra.mxu0 %v1639
    %3047 = vmatpush.msra.mxu0 %v1637
    %3048 = vmatpush.msra.mxu0 %v1635
    %3049 = vmatpush.msra.mxu0 %v1633
    %3050 = vmatpush.msra.mxu0 %v1631
    %3051 = vmatpush.msra.mxu0 %v1629
    %3052 = vmatmul.f32.gmra.mxu0 %v2768
    %v3053 = vpop.f32.mrf.mxu0
    %v3054 = vadd.f32 %v3034, %v3053
    %3055 = vdwg.mxu0
    %3056 = vmatpush.msra.mxu0 %v1691
    %3057 = vmatpush.msra.mxu0 %v1689
    %3058 = vmatpush.msra.mxu0 %v1687
    %3059 = vmatpush.msra.mxu0 %v1685
    %3060 = vmatpush.msra.mxu0 %v1683
    %3061 = vmatpush.msra.mxu0 %v1681
    %3062 = vmatpush.msra.mxu0 %v1679
    %3063 = vmatpush.msra.mxu0 %v1677
    %3064 = vmatpush.msra.mxu0 %v1675
    %3065 = vmatpush.msra.mxu0 %v1673
    %3066 = vmatpush.msra.mxu0 %v1671
    %3067 = vmatpush.msra.mxu0 %v1669
    %3068 = vmatpush.msra.mxu0 %v1667
    %3069 = vmatpush.msra.mxu0 %v1665
    %3070 = vmatpush.msra.mxu0 %v1663
    %3071 = vmatpush.msra.mxu0 %v1661
    %3072 = vmatmul.f32.gmra.mxu0 %v2769
    %v3073 = vpop.f32.mrf.mxu0
    %v3074 = vadd.f32 %v3054, %v3073
    %3075 = vdwg.mxu0
    %3076 = vmatpush.msra.mxu0 %v1723
    %3077 = vmatpush.msra.mxu0 %v1721
    %3078 = vmatpush.msra.mxu0 %v1719
    %3079 = vmatpush.msra.mxu0 %v1717
    %3080 = vmatpush.msra.mxu0 %v1715
    %3081 = vmatpush.msra.mxu0 %v1713
    %3082 = vmatpush.msra.mxu0 %v1711
    %3083 = vmatpush.msra.mxu0 %v1709
    %3084 = vmatpush.msra.mxu0 %v1707
    %3085 = vmatpush.msra.mxu0 %v1705
    %3086 = vmatpush.msra.mxu0 %v1703
    %3087 = vmatpush.msra.mxu0 %v1701
    %3088 = vmatpush.msra.mxu0 %v1699
    %3089 = vmatpush.msra.mxu0 %v1697
    %3090 = vmatpush.msra.mxu0 %v1695
    %3091 = vmatpush.msra.mxu0 %v1693
    %3092 = vmatmul.f32.gmra.mxu0 %v2770
    %v3093 = vpop.f32.mrf.mxu0
    %v3094 = vadd.f32 %v3074, %v3093
    %3095 = vdwg.mxu0
    %v3097 = vperm.slane %v1725, 0
    %v3098 = vperm.slane %v1725, 1
    %v3101 = vmul.f32 %v2934, %v3097
    %v3102 = vmul.f32 %v3094, %v3098
    %v3103 = vadd.f32 %v3101, %v1767
    %v3104 = vadd.f32 %v3102, %v1768
    %v3107 = vrot.slane %v3104, 6
    %v3108 = vsel %vm289, %v3103, %v3107
    %3110 = vst [vmem:[%s13] sm:$0xf] %v3108
    // Predicated region
    $region98: #{pruned_saint_forward.3} parent=1 // pred_check
      _
    $region99: #{pruned_saint_forward.3} parent=1 // pred_check_branch
      %3112 = sbr.rel (0) target = $region101
    $region100: #{pruned_saint_forward.3} parent=1 // pred_region
      _
    $region101: #{pruned_saint_forward.3} parent=1 // pred_fallthru
      _
    // Predicated region
    $region102: #{pruned_saint_forward.3} parent=1 // pred_check
      _
    $region103: #{pruned_saint_forward.3} parent=1 // pred_check_branch
      %3114 = sbr.rel (0) target = $region105
    $region104: #{pruned_saint_forward.3} parent=1 // pred_region
      _
    $region105: #{pruned_saint_forward.3} parent=1 // pred_fallthru
      _
    %3115 = vsyncpa [#allocation3], 1
    %3116 = vsyncpa [#allocation5], 1
    %3117 = vsyncpa [#allocation8], 1
    %3118 = vsyncpa [#allocation11], 1
    %3119 = vsyncpa [#allocation14], 1
    %3120 = vsyncpa [#allocation17], 1

</llo_original>
